<compile_context>
chip_gen: v7x
topology: tpu7x:2x2x1
jax: 0.10.0
libtpu: 0.0.40
codegen_flags: <defaults>
</compile_context>

<pallas_src>
import math
import functools

import jax
import jax.numpy as jnp
from jax import lax
from jax.experimental import pallas as pl
from jax.experimental.pallas import tpu as pltpu


# ----------------------------------------------------------------------------
# Fused kernel: full RK4 time integration of
#   dx/dt = x * (g(x) - sum(x * g(x), -1)),   g(x) = gate * fcc2(fcc1(x))
# (gate already folded into the second layer's weights/bias host-side).
# ----------------------------------------------------------------------------
def _cnode_fused_kernel(dt_ref, x0_ref, w1t_ref, b1_ref, w2t_ref, b2_ref,
                        y_ref, x_scr, *, substeps):
    ti = pl.program_id(1)                 # time-interval axis (sequential)

    # New batch tile starts its trajectory: load x0 into the carried state.
    @pl.when(ti == 0)
    def _init():
        x_scr[...] = x0_ref[...]

    # Hoist weight / bias loads + broadcasts out of the unrolled substep loop.
    w1t = w1t_ref[...]
    w2t = w2t_ref[...]
    b1 = jnp.broadcast_to(b1_ref[...], x_scr.shape)
    b2 = jnp.broadcast_to(b2_ref[...], x_scr.shape)

    h = dt_ref[ti] / substeps             # scalar read from SMEM

    def f(x):
        fx = jnp.dot(x, w1t, preferred_element_type=jnp.float32) + b1
        fx = jnp.dot(fx, w2t, preferred_element_type=jnp.float32) + b2
        xT_fx = jnp.sum(x * fx, axis=-1, keepdims=True)
        return x * (fx - xT_fx)           # gate already folded into w2t / b2

    def substep(_, x):
        k1 = f(x)
        k2 = f(x + (0.5 * h) * k1)
        k3 = f(x + (0.5 * h) * k2)
        k4 = f(x + h * k3)
        return x + (h / 6.0) * (k1 + 2.0 * (k2 + k3) + k4)

    x_new = lax.fori_loop(0, substeps, substep, x_scr[...], unroll=True)
    x_scr[...] = x_new                    # carry to next interval
    y_ref[0] = x_new                      # end-of-interval state for this tile


# ----------------------------------------------------------------------------
# Host wrapper: padding, gate folding, one pallas_call, unpad.
# ----------------------------------------------------------------------------
def _round_up(x, m):
    return (x + m - 1) // m * m


def cnode_constructed_fitness_forward(t, x0, params, substeps=4):
    """Returns y of shape [len(t), B, N] with y[0] == x0 (odeint convention)."""
    w1t, b1, w2t, b2, gate = params
    B, N = x0.shape
    T = int(t.shape[0])
    if T < 2:
        return x0[None]

    NPAD = max(128, _round_up(N, 128))          # lane-dense last dim
    BPAD = _round_up(B, 8)                      # sublane-aligned batch
    BM = math.gcd(BPAD, 128)                    # batch tile (multiple of 8)
    n_btiles = BPAD // BM

    gate = jnp.asarray(gate, jnp.float32).reshape(())
    w2t_g = (jnp.asarray(w2t, jnp.float32) * gate)      # fold gate into layer 2
    b2_g = (jnp.asarray(b2, jnp.float32) * gate)

    x0_p = jnp.zeros((BPAD, NPAD), jnp.float32).at[:B, :N].set(x0)
    w1t_p = jnp.zeros((NPAD, NPAD), jnp.float32).at[:N, :N].set(w1t)
    w2t_p = jnp.zeros((NPAD, NPAD), jnp.float32).at[:N, :N].set(w2t_g)
    b1_p = jnp.zeros((1, NPAD), jnp.float32).at[:, :N].set(b1)
    b2_p = jnp.zeros((1, NPAD), jnp.float32).at[:, :N].set(b2_g)

    dt = (t[1:] - t[:-1]).astype(jnp.float32)   # (T-1,) -> SMEM

    kernel = functools.partial(_cnode_fused_kernel, substeps=substeps)

    n_feval = n_btiles * (T - 1) * substeps * 4
    flops = n_feval * (2 * 2 * BM * NPAD * NPAD + 6 * BM * NPAD)
    bytes_accessed = 4 * (2 * NPAD * NPAD + 2 * NPAD
                          + BPAD * NPAD + (T - 1) * BPAD * NPAD)

    ys = pl.pallas_call(
        kernel,
        out_shape=jax.ShapeDtypeStruct((T - 1, BPAD, NPAD), jnp.float32),
        grid=(n_btiles, T - 1),
        in_specs=[
            pl.BlockSpec(memory_space=pltpu.MemorySpace.SMEM),          # dt
            pl.BlockSpec((BM, NPAD), lambda b, ti: (b, 0)),             # x0
            pl.BlockSpec((NPAD, NPAD), lambda b, ti: (0, 0)),           # W1^T
            pl.BlockSpec((1, NPAD), lambda b, ti: (0, 0)),              # b1
            pl.BlockSpec((NPAD, NPAD), lambda b, ti: (0, 0)),           # gate*W2^T
            pl.BlockSpec((1, NPAD), lambda b, ti: (0, 0)),              # gate*b2
        ],
        out_specs=pl.BlockSpec((1, BM, NPAD), lambda b, ti: (ti, b, 0)),
        scratch_shapes=[pltpu.VMEM((BM, NPAD), jnp.float32)],           # carried x
        compiler_params=pltpu.CompilerParams(
            dimension_semantics=("parallel", "arbitrary"),
            vmem_limit_bytes=32 * 1024 * 1024,   # safe on v5e/v6e/v7x for N<=~2K f32
        ),
        cost_estimate=pl.CostEstimate(
            flops=int(flops), transcendentals=0, bytes_accessed=int(bytes_accessed)),
    )(dt, x0_p, w1t_p, b1_p, w2t_p, b2_p)

    ys = ys[:, :B, :N]
    return jnp.concatenate([x0[None].astype(ys.dtype), ys], axis=0)


# ----------------------------------------------------------------------------
# Pure-JAX reference (same fixed-step RK4) for a correctness check.
# ----------------------------------------------------------------------------
def cnode_forward_ref(t, x0, params, substeps=4):
    w1t, b1, w2t, b2, gate = params
    gate = jnp.asarray(gate, jnp.float32).reshape(())

    def f(x):
        fx = x @ w1t + b1
        fx = fx @ w2t + b2
        xT_fx = jnp.sum(x * fx, axis=-1, keepdims=True)
        return gate * (x * (fx - xT_fx))

    def interval(x, tp):
        t0, t1 = tp
        h = (t1 - t0) / substeps

        def sub(x, _):
            k1 = f(x)
            k2 = f(x + 0.5 * h * k1)
            k3 = f(x + 0.5 * h * k2)
            k4 = f(x + h * k3)
            return x + (h / 6.0) * (k1 + 2.0 * k2 + 2.0 * k3 + k4), None

        x, _ = lax.scan(sub, x, None, length=substeps)
        return x, x

    _, ys = lax.scan(interval, x0, (t[:-1], t[1:]))
    return jnp.concatenate([x0[None], ys], axis=0)


# ----------------------------------------------------------------------------
# Parameter init (deterministic, mimics nn.Linear default uniform init).
# identity_gate=True -> learnable gate initialized at 0.0 (PyTorch semantics:
# dx/dt == 0 at init); identity_gate=False -> fixed gate buffer == 1.0.
# ----------------------------------------------------------------------------
def init_params(key, N, bias=True, identity_gate=False):
    k1, k2, k3, k4 = jax.random.split(key, 4)
    bound = 1.0 / math.sqrt(N)
    w1 = jax.random.uniform(k1, (N, N), jnp.float32, -bound, bound)  # [out, in]
    w2 = jax.random.uniform(k2, (N, N), jnp.float32, -bound, bound)
    if bias:
        b1 = jax.random.uniform(k3, (1, N), jnp.float32, -bound, bound)
        b2 = jax.random.uniform(k4, (1, N), jnp.float32, -bound, bound)
    else:
        b1 = jnp.zeros((1, N), jnp.float32)
        b2 = jnp.zeros((1, N), jnp.float32)
    gate = jnp.array(0.0 if identity_gate else 1.0, dtype=jnp.float32)
    # Pre-transpose so the kernel does x @ W^T as plain x @ Wt.
    return (w1.T, b1, w2.T, b2, gate)


if __name__ == "__main__":
    key = jax.random.PRNGKey(0)
    N = 32          # feature dimension of the constructed fitness MLP
    B = 8           # batch size
    T = 5           # number of requested time points
    SUBSTEPS = 4

    kp, kx = jax.random.split(key)
    params = init_params(kp, N, bias=True, identity_gate=False)

    x0 = jax.random.uniform(kx, (B, N), jnp.float32)
    x0 = x0 / jnp.sum(x0, axis=-1, keepdims=True)        # compositional state
    t = jnp.linspace(0.0, 1.0, T).astype(jnp.float32)

    y = cnode_constructed_fitness_forward(t, x0, params, substeps=SUBSTEPS)
    y = jax.block_until_ready(y)

    y_ref = jax.block_until_ready(cnode_forward_ref(t, x0, params, substeps=SUBSTEPS))

    assert y.shape == (T, B, N), y.shape
    assert jnp.allclose(y, y_ref, atol=2e-5, rtol=2e-5), \
        float(jnp.max(jnp.abs(y - y_ref)))

    print("KERNEL_OK")
</pallas_src>

<mosaic_0001>
module attributes {stable_mosaic.version = 11 : i64} {
  func.func @_cnode_fused_kernel(%arg0: i32, %arg1: i32, %arg2: memref<4xf32, #tpu.memory_space<smem>>, %arg3: memref<8x128xf32, #tpu.memory_space<vmem>>, %arg4: memref<128x128xf32, #tpu.memory_space<vmem>>, %arg5: memref<1x128xf32, #tpu.memory_space<vmem>>, %arg6: memref<128x128xf32, #tpu.memory_space<vmem>>, %arg7: memref<1x128xf32, #tpu.memory_space<vmem>>, %arg8: memref<1x8x128xf32, #tpu.memory_space<vmem>>, %arg9: memref<8x128xf32, #tpu.memory_space<vmem>>) attributes {dimension_semantics = [#tpu.dimension_semantics<parallel>, #tpu.dimension_semantics<arbitrary>], iteration_bounds = array<i64: 1, 4>, scalar_prefetch = 0 : i64, scratch_operands = 1 : i64, tpu.core_type = #tpu.core_type<tc>, window_params = [{transform_indices = @transform_0, window_bounds = array<i64: 4>}, {transform_indices = @transform_1, window_bounds = array<i64: 8, 128>}, {pipeline_mode = #tpu.pipeline_mode<synchronous>, transform_indices = @transform_2, window_bounds = array<i64: 128, 128>}, {pipeline_mode = #tpu.pipeline_mode<synchronous>, transform_indices = @transform_3, window_bounds = array<i64: 1, 128>}, {pipeline_mode = #tpu.pipeline_mode<synchronous>, transform_indices = @transform_4, window_bounds = array<i64: 128, 128>}, {pipeline_mode = #tpu.pipeline_mode<synchronous>, transform_indices = @transform_5, window_bounds = array<i64: 1, 128>}, {transform_indices = @transform_6, window_bounds = array<i64: 1, 8, 128>}]} {
    %c0_i32 = arith.constant 0 : i32
    %0 = arith.cmpi eq, %arg1, %c0_i32 : i32
    %1 = arith.extui %0 : i1 to i32
    %c0_i32_0 = arith.constant 0 : i32
    %2 = arith.cmpi ne, %1, %c0_i32_0 : i32
    scf.if %2 {
      %c0_80 = arith.constant 0 : index
      %c0_81 = arith.constant 0 : index
      %259 = vector.load %arg3[%c0_80, %c0_81] : memref<8x128xf32, #tpu.memory_space<vmem>>, vector<8x128xf32>
      %c0_82 = arith.constant 0 : index
      %c0_83 = arith.constant 0 : index
      %260 = vector.load %arg9[%c0_82, %c0_83] : memref<8x128xf32, #tpu.memory_space<vmem>>, vector<8x128xf32>
      tpu.vector_store %arg9[%c0_82, %c0_83], %259 {strides = array<i32>} : memref<8x128xf32, #tpu.memory_space<vmem>>, vector<8x128xf32>,
    } else {
    }
    %c0 = arith.constant 0 : index
    %c0_1 = arith.constant 0 : index
    %3 = vector.load %arg4[%c0, %c0_1] : memref<128x128xf32, #tpu.memory_space<vmem>>, vector<128x128xf32>
    %c0_2 = arith.constant 0 : index
    %c0_3 = arith.constant 0 : index
    %4 = vector.load %arg6[%c0_2, %c0_3] : memref<128x128xf32, #tpu.memory_space<vmem>>, vector<128x128xf32>
    %c0_4 = arith.constant 0 : index
    %c0_5 = arith.constant 0 : index
    %5 = vector.load %arg5[%c0_4, %c0_5] : memref<1x128xf32, #tpu.memory_space<vmem>>, vector<1x128xf32>
    %6 = vector.shape_cast %5 : vector<1x128xf32> to vector<1x128xf32>
    %7 = vector.broadcast %6 : vector<1x128xf32> to vector<8x128xf32>
    %c0_6 = arith.constant 0 : index
    %c0_7 = arith.constant 0 : index
    %8 = vector.load %arg7[%c0_6, %c0_7] : memref<1x128xf32, #tpu.memory_space<vmem>>, vector<1x128xf32>
    %9 = vector.shape_cast %8 : vector<1x128xf32> to vector<1x128xf32>
    %10 = vector.broadcast %9 : vector<1x128xf32> to vector<8x128xf32>
    %11 = arith.index_cast %arg1 : i32 to index
    %12 = memref.load %arg2[%11] : memref<4xf32, #tpu.memory_space<smem>>
    %cst = arith.constant 4.000000e+00 : f32
    %13 = arith.divf %12, %cst : f32
    %c0_8 = arith.constant 0 : index
    %c0_9 = arith.constant 0 : index
    %14 = vector.load %arg9[%c0_8, %c0_9] : memref<8x128xf32, #tpu.memory_space<vmem>>, vector<8x128xf32>
    %c0_i32_10 = arith.constant 0 : i32
    %cst_11 = arith.constant dense<0.000000e+00> : vector<8x128xf32>
    %15 = tpu.matmul %14, %3, %cst_11 {dimension_numbers = #tpu.dot_dimension_numbers<[1], [0], [0], [1], [0, 0, 1, 1], [], []>} : vector<8x128xf32>, vector<128x128xf32>, vector<8x128xf32> -> vector<8x128xf32>
    %16 = arith.addf %15, %7 : vector<8x128xf32>
    %cst_12 = arith.constant dense<0.000000e+00> : vector<8x128xf32>
    %17 = tpu.matmul %16, %4, %cst_12 {dimension_numbers = #tpu.dot_dimension_numbers<[1], [0], [0], [1], [0, 0, 1, 1], [], []>} : vector<8x128xf32>, vector<128x128xf32>, vector<8x128xf32> -> vector<8x128xf32>
    %18 = arith.addf %17, %10 : vector<8x128xf32>
    %19 = arith.mulf %14, %18 : vector<8x128xf32>
    %cst_13 = arith.constant dense<0.000000e+00> : vector<8xf32>
    %20 = vector.multi_reduction <add>, %19, %cst_13 [1] : vector<8x128xf32> to vector<8xf32>
    %21 = vector.shape_cast %20 : vector<8xf32> to vector<8x1xf32>
    %22 = vector.broadcast %21 : vector<8x1xf32> to vector<8x128xf32>
    %23 = arith.subf %18, %22 : vector<8x128xf32>
    %24 = arith.mulf %14, %23 : vector<8x128xf32>
    %cst_14 = arith.constant 5.000000e-01 : f32
    %25 = arith.mulf %cst_14, %13 : f32
    %26 = vector.broadcast %25 : f32 to vector<8x128xf32>
    %27 = arith.mulf %26, %24 : vector<8x128xf32>
    %28 = arith.addf %14, %27 : vector<8x128xf32>
    %cst_15 = arith.constant dense<0.000000e+00> : vector<8x128xf32>
    %29 = tpu.matmul %28, %3, %cst_15 {dimension_numbers = #tpu.dot_dimension_numbers<[1], [0], [0], [1], [0, 0, 1, 1], [], []>} : vector<8x128xf32>, vector<128x128xf32>, vector<8x128xf32> -> vector<8x128xf32>
    %30 = arith.addf %29, %7 : vector<8x128xf32>
    %cst_16 = arith.constant dense<0.000000e+00> : vector<8x128xf32>
    %31 = tpu.matmul %30, %4, %cst_16 {dimension_numbers = #tpu.dot_dimension_numbers<[1], [0], [0], [1], [0, 0, 1, 1], [], []>} : vector<8x128xf32>, vector<128x128xf32>, vector<8x128xf32> -> vector<8x128xf32>
    %32 = arith.addf %31, %10 : vector<8x128xf32>
    %33 = arith.mulf %28, %32 : vector<8x128xf32>
    %cst_17 = arith.constant dense<0.000000e+00> : vector<8xf32>
    %34 = vector.multi_reduction <add>, %33, %cst_17 [1] : vector<8x128xf32> to vector<8xf32>
    %35 = vector.shape_cast %34 : vector<8xf32> to vector<8x1xf32>
    %36 = vector.broadcast %35 : vector<8x1xf32> to vector<8x128xf32>
    %37 = arith.subf %32, %36 : vector<8x128xf32>
    %38 = arith.mulf %28, %37 : vector<8x128xf32>
    %cst_18 = arith.constant 5.000000e-01 : f32
    %39 = arith.mulf %cst_18, %13 : f32
    %40 = vector.broadcast %39 : f32 to vector<8x128xf32>
    %41 = arith.mulf %40, %38 : vector<8x128xf32>
    %42 = arith.addf %14, %41 : vector<8x128xf32>
    %cst_19 = arith.constant dense<0.000000e+00> : vector<8x128xf32>
    %43 = tpu.matmul %42, %3, %cst_19 {dimension_numbers = #tpu.dot_dimension_numbers<[1], [0], [0], [1], [0, 0, 1, 1], [], []>} : vector<8x128xf32>, vector<128x128xf32>, vector<8x128xf32> -> vector<8x128xf32>
    %44 = arith.addf %43, %7 : vector<8x128xf32>
    %cst_20 = arith.constant dense<0.000000e+00> : vector<8x128xf32>
    %45 = tpu.matmul %44, %4, %cst_20 {dimension_numbers = #tpu.dot_dimension_numbers<[1], [0], [0], [1], [0, 0, 1, 1], [], []>} : vector<8x128xf32>, vector<128x128xf32>, vector<8x128xf32> -> vector<8x128xf32>
    %46 = arith.addf %45, %10 : vector<8x128xf32>
    %47 = arith.mulf %42, %46 : vector<8x128xf32>
    %cst_21 = arith.constant dense<0.000000e+00> : vector<8xf32>
    %48 = vector.multi_reduction <add>, %47, %cst_21 [1] : vector<8x128xf32> to vector<8xf32>
    %49 = vector.shape_cast %48 : vector<8xf32> to vector<8x1xf32>
    %50 = vector.broadcast %49 : vector<8x1xf32> to vector<8x128xf32>
    %51 = arith.subf %46, %50 : vector<8x128xf32>
    %52 = arith.mulf %42, %51 : vector<8x128xf32>
    %53 = vector.broadcast %13 : f32 to vector<8x128xf32>
    %54 = arith.mulf %53, %52 : vector<8x128xf32>
    %55 = arith.addf %14, %54 : vector<8x128xf32>
    %cst_22 = arith.constant dense<0.000000e+00> : vector<8x128xf32>
    %56 = tpu.matmul %55, %3, %cst_22 {dimension_numbers = #tpu.dot_dimension_numbers<[1], [0], [0], [1], [0, 0, 1, 1], [], []>} : vector<8x128xf32>, vector<128x128xf32>, vector<8x128xf32> -> vector<8x128xf32>
    %57 = arith.addf %56, %7 : vector<8x128xf32>
    %cst_23 = arith.constant dense<0.000000e+00> : vector<8x128xf32>
    %58 = tpu.matmul %57, %4, %cst_23 {dimension_numbers = #tpu.dot_dimension_numbers<[1], [0], [0], [1], [0, 0, 1, 1], [], []>} : vector<8x128xf32>, vector<128x128xf32>, vector<8x128xf32> -> vector<8x128xf32>
    %59 = arith.addf %58, %10 : vector<8x128xf32>
    %60 = arith.mulf %55, %59 : vector<8x128xf32>
    %cst_24 = arith.constant dense<0.000000e+00> : vector<8xf32>
    %61 = vector.multi_reduction <add>, %60, %cst_24 [1] : vector<8x128xf32> to vector<8xf32>
    %62 = vector.shape_cast %61 : vector<8xf32> to vector<8x1xf32>
    %63 = vector.broadcast %62 : vector<8x1xf32> to vector<8x128xf32>
    %64 = arith.subf %59, %63 : vector<8x128xf32>
    %65 = arith.mulf %55, %64 : vector<8x128xf32>
    %cst_25 = arith.constant 6.000000e+00 : f32
    %66 = arith.divf %13, %cst_25 : f32
    %67 = arith.addf %38, %52 : vector<8x128xf32>
    %cst_26 = arith.constant 2.000000e+00 : f32
    %68 = vector.broadcast %cst_26 : f32 to vector<8x128xf32>
    %69 = arith.mulf %68, %67 : vector<8x128xf32>
    %70 = arith.addf %24, %69 : vector<8x128xf32>
    %71 = arith.addf %70, %65 : vector<8x128xf32>
    %72 = vector.broadcast %66 : f32 to vector<8x128xf32>
    %73 = arith.mulf %72, %71 : vector<8x128xf32>
    %74 = arith.addf %14, %73 : vector<8x128xf32>
    %c1_i32 = arith.constant 1 : i32
    %cst_27 = arith.constant dense<0.000000e+00> : vector<8x128xf32>
    %75 = tpu.matmul %74, %3, %cst_27 {dimension_numbers = #tpu.dot_dimension_numbers<[1], [0], [0], [1], [0, 0, 1, 1], [], []>} : vector<8x128xf32>, vector<128x128xf32>, vector<8x128xf32> -> vector<8x128xf32>
    %76 = arith.addf %75, %7 : vector<8x128xf32>
    %cst_28 = arith.constant dense<0.000000e+00> : vector<8x128xf32>
    %77 = tpu.matmul %76, %4, %cst_28 {dimension_numbers = #tpu.dot_dimension_numbers<[1], [0], [0], [1], [0, 0, 1, 1], [], []>} : vector<8x128xf32>, vector<128x128xf32>, vector<8x128xf32> -> vector<8x128xf32>
    %78 = arith.addf %77, %10 : vector<8x128xf32>
    %79 = arith.mulf %74, %78 : vector<8x128xf32>
    %cst_29 = arith.constant dense<0.000000e+00> : vector<8xf32>
    %80 = vector.multi_reduction <add>, %79, %cst_29 [1] : vector<8x128xf32> to vector<8xf32>
    %81 = vector.shape_cast %80 : vector<8xf32> to vector<8x1xf32>
    %82 = vector.broadcast %81 : vector<8x1xf32> to vector<8x128xf32>
    %83 = arith.subf %78, %82 : vector<8x128xf32>
    %84 = arith.mulf %74, %83 : vector<8x128xf32>
    %cst_30 = arith.constant 5.000000e-01 : f32
    %85 = arith.mulf %cst_30, %13 : f32
    %86 = vector.broadcast %85 : f32 to vector<8x128xf32>
    %87 = arith.mulf %86, %84 : vector<8x128xf32>
    %88 = arith.addf %74, %87 : vector<8x128xf32>
    %cst_31 = arith.constant dense<0.000000e+00> : vector<8x128xf32>
    %89 = tpu.matmul %88, %3, %cst_31 {dimension_numbers = #tpu.dot_dimension_numbers<[1], [0], [0], [1], [0, 0, 1, 1], [], []>} : vector<8x128xf32>, vector<128x128xf32>, vector<8x128xf32> -> vector<8x128xf32>
    %90 = arith.addf %89, %7 : vector<8x128xf32>
    %cst_32 = arith.constant dense<0.000000e+00> : vector<8x128xf32>
    %91 = tpu.matmul %90, %4, %cst_32 {dimension_numbers = #tpu.dot_dimension_numbers<[1], [0], [0], [1], [0, 0, 1, 1], [], []>} : vector<8x128xf32>, vector<128x128xf32>, vector<8x128xf32> -> vector<8x128xf32>
    %92 = arith.addf %91, %10 : vector<8x128xf32>
    %93 = arith.mulf %88, %92 : vector<8x128xf32>
    %cst_33 = arith.constant dense<0.000000e+00> : vector<8xf32>
    %94 = vector.multi_reduction <add>, %93, %cst_33 [1] : vector<8x128xf32> to vector<8xf32>
    %95 = vector.shape_cast %94 : vector<8xf32> to vector<8x1xf32>
    %96 = vector.broadcast %95 : vector<8x1xf32> to vector<8x128xf32>
    %97 = arith.subf %92, %96 : vector<8x128xf32>
    %98 = arith.mulf %88, %97 : vector<8x128xf32>
    %cst_34 = arith.constant 5.000000e-01 : f32
    %99 = arith.mulf %cst_34, %13 : f32
    %100 = vector.broadcast %99 : f32 to vector<8x128xf32>
    %101 = arith.mulf %100, %98 : vector<8x128xf32>
    %102 = arith.addf %74, %101 : vector<8x128xf32>
    %cst_35 = arith.constant dense<0.000000e+00> : vector<8x128xf32>
    %103 = tpu.matmul %102, %3, %cst_35 {dimension_numbers = #tpu.dot_dimension_numbers<[1], [0], [0], [1], [0, 0, 1, 1], [], []>} : vector<8x128xf32>, vector<128x128xf32>, vector<8x128xf32> -> vector<8x128xf32>
    %104 = arith.addf %103, %7 : vector<8x128xf32>
    %cst_36 = arith.constant dense<0.000000e+00> : vector<8x128xf32>
    %105 = tpu.matmul %104, %4, %cst_36 {dimension_numbers = #tpu.dot_dimension_numbers<[1], [0], [0], [1], [0, 0, 1, 1], [], []>} : vector<8x128xf32>, vector<128x128xf32>, vector<8x128xf32> -> vector<8x128xf32>
    %106 = arith.addf %105, %10 : vector<8x128xf32>
    %107 = arith.mulf %102, %106 : vector<8x128xf32>
    %cst_37 = arith.constant dense<0.000000e+00> : vector<8xf32>
    %108 = vector.multi_reduction <add>, %107, %cst_37 [1] : vector<8x128xf32> to vector<8xf32>
    %109 = vector.shape_cast %108 : vector<8xf32> to vector<8x1xf32>
    %110 = vector.broadcast %109 : vector<8x1xf32> to vector<8x128xf32>
    %111 = arith.subf %106, %110 : vector<8x128xf32>
    %112 = arith.mulf %102, %111 : vector<8x128xf32>
    %113 = vector.broadcast %13 : f32 to vector<8x128xf32>
    %114 = arith.mulf %113, %112 : vector<8x128xf32>
    %115 = arith.addf %74, %114 : vector<8x128xf32>
    %cst_38 = arith.constant dense<0.000000e+00> : vector<8x128xf32>
    %116 = tpu.matmul %115, %3, %cst_38 {dimension_numbers = #tpu.dot_dimension_numbers<[1], [0], [0], [1], [0, 0, 1, 1], [], []>} : vector<8x128xf32>, vector<128x128xf32>, vector<8x128xf32> -> vector<8x128xf32>
    %117 = arith.addf %116, %7 : vector<8x128xf32>
    %cst_39 = arith.constant dense<0.000000e+00> : vector<8x128xf32>
    %118 = tpu.matmul %117, %4, %cst_39 {dimension_numbers = #tpu.dot_dimension_numbers<[1], [0], [0], [1], [0, 0, 1, 1], [], []>} : vector<8x128xf32>, vector<128x128xf32>, vector<8x128xf32> -> vector<8x128xf32>
    %119 = arith.addf %118, %10 : vector<8x128xf32>
    %120 = arith.mulf %115, %119 : vector<8x128xf32>
    %cst_40 = arith.constant dense<0.000000e+00> : vector<8xf32>
    %121 = vector.multi_reduction <add>, %120, %cst_40 [1] : vector<8x128xf32> to vector<8xf32>
    %122 = vector.shape_cast %121 : vector<8xf32> to vector<8x1xf32>
    %123 = vector.broadcast %122 : vector<8x1xf32> to vector<8x128xf32>
    %124 = arith.subf %119, %123 : vector<8x128xf32>
    %125 = arith.mulf %115, %124 : vector<8x128xf32>
    %cst_41 = arith.constant 6.000000e+00 : f32
    %126 = arith.divf %13, %cst_41 : f32
    %127 = arith.addf %98, %112 : vector<8x128xf32>
    %cst_42 = arith.constant 2.000000e+00 : f32
    %128 = vector.broadcast %cst_42 : f32 to vector<8x128xf32>
    %129 = arith.mulf %128, %127 : vector<8x128xf32>
    %130 = arith.addf %84, %129 : vector<8x128xf32>
    %131 = arith.addf %130, %125 : vector<8x128xf32>
    %132 = vector.broadcast %126 : f32 to vector<8x128xf32>
    %133 = arith.mulf %132, %131 : vector<8x128xf32>
    %134 = arith.addf %74, %133 : vector<8x128xf32>
    %c2_i32 = arith.constant 2 : i32
    %cst_43 = arith.constant dense<0.000000e+00> : vector<8x128xf32>
    %135 = tpu.matmul %134, %3, %cst_43 {dimension_numbers = #tpu.dot_dimension_numbers<[1], [0], [0], [1], [0, 0, 1, 1], [], []>} : vector<8x128xf32>, vector<128x128xf32>, vector<8x128xf32> -> vector<8x128xf32>
    %136 = arith.addf %135, %7 : vector<8x128xf32>
    %cst_44 = arith.constant dense<0.000000e+00> : vector<8x128xf32>
    %137 = tpu.matmul %136, %4, %cst_44 {dimension_numbers = #tpu.dot_dimension_numbers<[1], [0], [0], [1], [0, 0, 1, 1], [], []>} : vector<8x128xf32>, vector<128x128xf32>, vector<8x128xf32> -> vector<8x128xf32>
    %138 = arith.addf %137, %10 : vector<8x128xf32>
    %139 = arith.mulf %134, %138 : vector<8x128xf32>
    %cst_45 = arith.constant dense<0.000000e+00> : vector<8xf32>
    %140 = vector.multi_reduction <add>, %139, %cst_45 [1] : vector<8x128xf32> to vector<8xf32>
    %141 = vector.shape_cast %140 : vector<8xf32> to vector<8x1xf32>
    %142 = vector.broadcast %141 : vector<8x1xf32> to vector<8x128xf32>
    %143 = arith.subf %138, %142 : vector<8x128xf32>
    %144 = arith.mulf %134, %143 : vector<8x128xf32>
    %cst_46 = arith.constant 5.000000e-01 : f32
    %145 = arith.mulf %cst_46, %13 : f32
    %146 = vector.broadcast %145 : f32 to vector<8x128xf32>
    %147 = arith.mulf %146, %144 : vector<8x128xf32>
    %148 = arith.addf %134, %147 : vector<8x128xf32>
    %cst_47 = arith.constant dense<0.000000e+00> : vector<8x128xf32>
    %149 = tpu.matmul %148, %3, %cst_47 {dimension_numbers = #tpu.dot_dimension_numbers<[1], [0], [0], [1], [0, 0, 1, 1], [], []>} : vector<8x128xf32>, vector<128x128xf32>, vector<8x128xf32> -> vector<8x128xf32>
    %150 = arith.addf %149, %7 : vector<8x128xf32>
    %cst_48 = arith.constant dense<0.000000e+00> : vector<8x128xf32>
    %151 = tpu.matmul %150, %4, %cst_48 {dimension_numbers = #tpu.dot_dimension_numbers<[1], [0], [0], [1], [0, 0, 1, 1], [], []>} : vector<8x128xf32>, vector<128x128xf32>, vector<8x128xf32> -> vector<8x128xf32>
    %152 = arith.addf %151, %10 : vector<8x128xf32>
    %153 = arith.mulf %148, %152 : vector<8x128xf32>
    %cst_49 = arith.constant dense<0.000000e+00> : vector<8xf32>
    %154 = vector.multi_reduction <add>, %153, %cst_49 [1] : vector<8x128xf32> to vector<8xf32>
    %155 = vector.shape_cast %154 : vector<8xf32> to vector<8x1xf32>
    %156 = vector.broadcast %155 : vector<8x1xf32> to vector<8x128xf32>
    %157 = arith.subf %152, %156 : vector<8x128xf32>
    %158 = arith.mulf %148, %157 : vector<8x128xf32>
    %cst_50 = arith.constant 5.000000e-01 : f32
    %159 = arith.mulf %cst_50, %13 : f32
    %160 = vector.broadcast %159 : f32 to vector<8x128xf32>
    %161 = arith.mulf %160, %158 : vector<8x128xf32>
    %162 = arith.addf %134, %161 : vector<8x128xf32>
    %cst_51 = arith.constant dense<0.000000e+00> : vector<8x128xf32>
    %163 = tpu.matmul %162, %3, %cst_51 {dimension_numbers = #tpu.dot_dimension_numbers<[1], [0], [0], [1], [0, 0, 1, 1], [], []>} : vector<8x128xf32>, vector<128x128xf32>, vector<8x128xf32> -> vector<8x128xf32>
    %164 = arith.addf %163, %7 : vector<8x128xf32>
    %cst_52 = arith.constant dense<0.000000e+00> : vector<8x128xf32>
    %165 = tpu.matmul %164, %4, %cst_52 {dimension_numbers = #tpu.dot_dimension_numbers<[1], [0], [0], [1], [0, 0, 1, 1], [], []>} : vector<8x128xf32>, vector<128x128xf32>, vector<8x128xf32> -> vector<8x128xf32>
    %166 = arith.addf %165, %10 : vector<8x128xf32>
    %167 = arith.mulf %162, %166 : vector<8x128xf32>
    %cst_53 = arith.constant dense<0.000000e+00> : vector<8xf32>
    %168 = vector.multi_reduction <add>, %167, %cst_53 [1] : vector<8x128xf32> to vector<8xf32>
    %169 = vector.shape_cast %168 : vector<8xf32> to vector<8x1xf32>
    %170 = vector.broadcast %169 : vector<8x1xf32> to vector<8x128xf32>
    %171 = arith.subf %166, %170 : vector<8x128xf32>
    %172 = arith.mulf %162, %171 : vector<8x128xf32>
    %173 = vector.broadcast %13 : f32 to vector<8x128xf32>
    %174 = arith.mulf %173, %172 : vector<8x128xf32>
    %175 = arith.addf %134, %174 : vector<8x128xf32>
    %cst_54 = arith.constant dense<0.000000e+00> : vector<8x128xf32>
    %176 = tpu.matmul %175, %3, %cst_54 {dimension_numbers = #tpu.dot_dimension_numbers<[1], [0], [0], [1], [0, 0, 1, 1], [], []>} : vector<8x128xf32>, vector<128x128xf32>, vector<8x128xf32> -> vector<8x128xf32>
    %177 = arith.addf %176, %7 : vector<8x128xf32>
    %cst_55 = arith.constant dense<0.000000e+00> : vector<8x128xf32>
    %178 = tpu.matmul %177, %4, %cst_55 {dimension_numbers = #tpu.dot_dimension_numbers<[1], [0], [0], [1], [0, 0, 1, 1], [], []>} : vector<8x128xf32>, vector<128x128xf32>, vector<8x128xf32> -> vector<8x128xf32>
    %179 = arith.addf %178, %10 : vector<8x128xf32>
    %180 = arith.mulf %175, %179 : vector<8x128xf32>
    %cst_56 = arith.constant dense<0.000000e+00> : vector<8xf32>
    %181 = vector.multi_reduction <add>, %180, %cst_56 [1] : vector<8x128xf32> to vector<8xf32>
    %182 = vector.shape_cast %181 : vector<8xf32> to vector<8x1xf32>
    %183 = vector.broadcast %182 : vector<8x1xf32> to vector<8x128xf32>
    %184 = arith.subf %179, %183 : vector<8x128xf32>
    %185 = arith.mulf %175, %184 : vector<8x128xf32>
    %cst_57 = arith.constant 6.000000e+00 : f32
    %186 = arith.divf %13, %cst_57 : f32
    %187 = arith.addf %158, %172 : vector<8x128xf32>
    %cst_58 = arith.constant 2.000000e+00 : f32
    %188 = vector.broadcast %cst_58 : f32 to vector<8x128xf32>
    %189 = arith.mulf %188, %187 : vector<8x128xf32>
    %190 = arith.addf %144, %189 : vector<8x128xf32>
    %191 = arith.addf %190, %185 : vector<8x128xf32>
    %192 = vector.broadcast %186 : f32 to vector<8x128xf32>
    %193 = arith.mulf %192, %191 : vector<8x128xf32>
    %194 = arith.addf %134, %193 : vector<8x128xf32>
    %c3_i32 = arith.constant 3 : i32
    %cst_59 = arith.constant dense<0.000000e+00> : vector<8x128xf32>
    %195 = tpu.matmul %194, %3, %cst_59 {dimension_numbers = #tpu.dot_dimension_numbers<[1], [0], [0], [1], [0, 0, 1, 1], [], []>} : vector<8x128xf32>, vector<128x128xf32>, vector<8x128xf32> -> vector<8x128xf32>
    %196 = arith.addf %195, %7 : vector<8x128xf32>
    %cst_60 = arith.constant dense<0.000000e+00> : vector<8x128xf32>
    %197 = tpu.matmul %196, %4, %cst_60 {dimension_numbers = #tpu.dot_dimension_numbers<[1], [0], [0], [1], [0, 0, 1, 1], [], []>} : vector<8x128xf32>, vector<128x128xf32>, vector<8x128xf32> -> vector<8x128xf32>
    %198 = arith.addf %197, %10 : vector<8x128xf32>
    %199 = arith.mulf %194, %198 : vector<8x128xf32>
    %cst_61 = arith.constant dense<0.000000e+00> : vector<8xf32>
    %200 = vector.multi_reduction <add>, %199, %cst_61 [1] : vector<8x128xf32> to vector<8xf32>
    %201 = vector.shape_cast %200 : vector<8xf32> to vector<8x1xf32>
    %202 = vector.broadcast %201 : vector<8x1xf32> to vector<8x128xf32>
    %203 = arith.subf %198, %202 : vector<8x128xf32>
    %204 = arith.mulf %194, %203 : vector<8x128xf32>
    %cst_62 = arith.constant 5.000000e-01 : f32
    %205 = arith.mulf %cst_62, %13 : f32
    %206 = vector.broadcast %205 : f32 to vector<8x128xf32>
    %207 = arith.mulf %206, %204 : vector<8x128xf32>
    %208 = arith.addf %194, %207 : vector<8x128xf32>
    %cst_63 = arith.constant dense<0.000000e+00> : vector<8x128xf32>
    %209 = tpu.matmul %208, %3, %cst_63 {dimension_numbers = #tpu.dot_dimension_numbers<[1], [0], [0], [1], [0, 0, 1, 1], [], []>} : vector<8x128xf32>, vector<128x128xf32>, vector<8x128xf32> -> vector<8x128xf32>
    %210 = arith.addf %209, %7 : vector<8x128xf32>
    %cst_64 = arith.constant dense<0.000000e+00> : vector<8x128xf32>
    %211 = tpu.matmul %210, %4, %cst_64 {dimension_numbers = #tpu.dot_dimension_numbers<[1], [0], [0], [1], [0, 0, 1, 1], [], []>} : vector<8x128xf32>, vector<128x128xf32>, vector<8x128xf32> -> vector<8x128xf32>
    %212 = arith.addf %211, %10 : vector<8x128xf32>
    %213 = arith.mulf %208, %212 : vector<8x128xf32>
    %cst_65 = arith.constant dense<0.000000e+00> : vector<8xf32>
    %214 = vector.multi_reduction <add>, %213, %cst_65 [1] : vector<8x128xf32> to vector<8xf32>
    %215 = vector.shape_cast %214 : vector<8xf32> to vector<8x1xf32>
    %216 = vector.broadcast %215 : vector<8x1xf32> to vector<8x128xf32>
    %217 = arith.subf %212, %216 : vector<8x128xf32>
    %218 = arith.mulf %208, %217 : vector<8x128xf32>
    %cst_66 = arith.constant 5.000000e-01 : f32
    %219 = arith.mulf %cst_66, %13 : f32
    %220 = vector.broadcast %219 : f32 to vector<8x128xf32>
    %221 = arith.mulf %220, %218 : vector<8x128xf32>
    %222 = arith.addf %194, %221 : vector<8x128xf32>
    %cst_67 = arith.constant dense<0.000000e+00> : vector<8x128xf32>
    %223 = tpu.matmul %222, %3, %cst_67 {dimension_numbers = #tpu.dot_dimension_numbers<[1], [0], [0], [1], [0, 0, 1, 1], [], []>} : vector<8x128xf32>, vector<128x128xf32>, vector<8x128xf32> -> vector<8x128xf32>
    %224 = arith.addf %223, %7 : vector<8x128xf32>
    %cst_68 = arith.constant dense<0.000000e+00> : vector<8x128xf32>
    %225 = tpu.matmul %224, %4, %cst_68 {dimension_numbers = #tpu.dot_dimension_numbers<[1], [0], [0], [1], [0, 0, 1, 1], [], []>} : vector<8x128xf32>, vector<128x128xf32>, vector<8x128xf32> -> vector<8x128xf32>
    %226 = arith.addf %225, %10 : vector<8x128xf32>
    %227 = arith.mulf %222, %226 : vector<8x128xf32>
    %cst_69 = arith.constant dense<0.000000e+00> : vector<8xf32>
    %228 = vector.multi_reduction <add>, %227, %cst_69 [1] : vector<8x128xf32> to vector<8xf32>
    %229 = vector.shape_cast %228 : vector<8xf32> to vector<8x1xf32>
    %230 = vector.broadcast %229 : vector<8x1xf32> to vector<8x128xf32>
    %231 = arith.subf %226, %230 : vector<8x128xf32>
    %232 = arith.mulf %222, %231 : vector<8x128xf32>
    %233 = vector.broadcast %13 : f32 to vector<8x128xf32>
    %234 = arith.mulf %233, %232 : vector<8x128xf32>
    %235 = arith.addf %194, %234 : vector<8x128xf32>
    %cst_70 = arith.constant dense<0.000000e+00> : vector<8x128xf32>
    %236 = tpu.matmul %235, %3, %cst_70 {dimension_numbers = #tpu.dot_dimension_numbers<[1], [0], [0], [1], [0, 0, 1, 1], [], []>} : vector<8x128xf32>, vector<128x128xf32>, vector<8x128xf32> -> vector<8x128xf32>
    %237 = arith.addf %236, %7 : vector<8x128xf32>
    %cst_71 = arith.constant dense<0.000000e+00> : vector<8x128xf32>
    %238 = tpu.matmul %237, %4, %cst_71 {dimension_numbers = #tpu.dot_dimension_numbers<[1], [0], [0], [1], [0, 0, 1, 1], [], []>} : vector<8x128xf32>, vector<128x128xf32>, vector<8x128xf32> -> vector<8x128xf32>
    %239 = arith.addf %238, %10 : vector<8x128xf32>
    %240 = arith.mulf %235, %239 : vector<8x128xf32>
    %cst_72 = arith.constant dense<0.000000e+00> : vector<8xf32>
    %241 = vector.multi_reduction <add>, %240, %cst_72 [1] : vector<8x128xf32> to vector<8xf32>
    %242 = vector.shape_cast %241 : vector<8xf32> to vector<8x1xf32>
    %243 = vector.broadcast %242 : vector<8x1xf32> to vector<8x128xf32>
    %244 = arith.subf %239, %243 : vector<8x128xf32>
    %245 = arith.mulf %235, %244 : vector<8x128xf32>
    %cst_73 = arith.constant 6.000000e+00 : f32
    %246 = arith.divf %13, %cst_73 : f32
    %247 = arith.addf %218, %232 : vector<8x128xf32>
    %cst_74 = arith.constant 2.000000e+00 : f32
    %248 = vector.broadcast %cst_74 : f32 to vector<8x128xf32>
    %249 = arith.mulf %248, %247 : vector<8x128xf32>
    %250 = arith.addf %204, %249 : vector<8x128xf32>
    %251 = arith.addf %250, %245 : vector<8x128xf32>
    %252 = vector.broadcast %246 : f32 to vector<8x128xf32>
    %253 = arith.mulf %252, %251 : vector<8x128xf32>
    %254 = arith.addf %194, %253 : vector<8x128xf32>
    %c0_75 = arith.constant 0 : index
    %c0_76 = arith.constant 0 : index
    %255 = vector.load %arg9[%c0_75, %c0_76] : memref<8x128xf32, #tpu.memory_space<vmem>>, vector<8x128xf32>
    tpu.vector_store %arg9[%c0_75, %c0_76], %254 {strides = array<i32>} : memref<8x128xf32, #tpu.memory_space<vmem>>, vector<8x128xf32>,
    %c0_77 = arith.constant 0 : index
    %c0_78 = arith.constant 0 : index
    %c0_79 = arith.constant 0 : index
    %256 = vector.load %arg8[%c0_77, %c0_78, %c0_79] : memref<1x8x128xf32, #tpu.memory_space<vmem>>, vector<1x8x128xf32>
    %257 = vector.shape_cast %256 : vector<1x8x128xf32> to vector<8x128xf32>
    %258 = vector.shape_cast %254 : vector<8x128xf32> to vector<1x8x128xf32>
    tpu.vector_store %arg8[%c0_77, %c0_78, %c0_79], %258 {strides = array<i32>} : memref<1x8x128xf32, #tpu.memory_space<vmem>>, vector<1x8x128xf32>,
    return
  }
  func.func @transform_0(%arg0: i32, %arg1: i32) -> i32 {
    %c0_i32 = arith.constant 0 : i32
    %c0_i32_0 = arith.constant 0 : i32
    return %c0_i32 : i32
  }
  func.func @transform_1(%arg0: i32, %arg1: i32) -> (i32, i32) {
    %c0_i32 = arith.constant 0 : i32
    %c0_i32_0 = arith.constant 0 : i32
    return %arg0, %c0_i32 : i32, i32
  }
  func.func @transform_2(%arg0: i32, %arg1: i32) -> (i32, i32) {
    %c0_i32 = arith.constant 0 : i32
    %c0_i32_0 = arith.constant 0 : i32
    %c0_i32_1 = arith.constant 0 : i32
    return %c0_i32, %c0_i32_0 : i32, i32
  }
  func.func @transform_3(%arg0: i32, %arg1: i32) -> (i32, i32) {
    %c0_i32 = arith.constant 0 : i32
    %c0_i32_0 = arith.constant 0 : i32
    %c0_i32_1 = arith.constant 0 : i32
    return %c0_i32, %c0_i32_0 : i32, i32
  }
  func.func @transform_4(%arg0: i32, %arg1: i32) -> (i32, i32) {
    %c0_i32 = arith.constant 0 : i32
    %c0_i32_0 = arith.constant 0 : i32
    %c0_i32_1 = arith.constant 0 : i32
    return %c0_i32, %c0_i32_0 : i32, i32
  }
  func.func @transform_5(%arg0: i32, %arg1: i32) -> (i32, i32) {
    %c0_i32 = arith.constant 0 : i32
    %c0_i32_0 = arith.constant 0 : i32
    %c0_i32_1 = arith.constant 0 : i32
    return %c0_i32, %c0_i32_0 : i32, i32
  }
  func.func @transform_6(%arg0: i32, %arg1: i32) -> (i32, i32, i32) {
    %c0_i32 = arith.constant 0 : i32
    %c0_i32_0 = arith.constant 0 : i32
    return %arg1, %arg0, %c0_i32 : i32, i32, i32
  }
}

</mosaic_0001>

<llo_original>
// kernel: tpu_custom_call.1
$region0: #{tpu_custom_call.1}
  #allocation0 [shape = 'u32[]', space=smem, size = 0x4, offset = 0x4, fixed_abs, tag = 'smem constant byte address 0x4 - core index']
  #allocation1 [shape = 'u32[144,128]{1,0:T(1,128)}', space=vmem, size = 0x12000, scoped, tag = 'internal scratch']
  #allocation2 [shape = 'f32[8,128]{1,0:T(8,128)}', space=vmem, size = 0x1000, scoped, tag = 'scratch operand']
  %s0 = inlined_call_operand.hbm [shape: f32[4], index: 0, kind: input, shape index: {}]
  %s1 = inlined_call_operand.hbm [shape: f32[8,128], index: 1, kind: input, shape index: {}]
  %s2 = inlined_call_operand.hbm [shape: f32[128,128], index: 2, kind: input, shape index: {}]
  %s3 = inlined_call_operand.vmem [shape: f32[1,128], index: 3, kind: input, shape index: {}]
  %s4 = inlined_call_operand.hbm [shape: f32[128,128], index: 4, kind: input, shape index: {}]
  %s5 = inlined_call_operand.vmem [shape: f32[1,128], index: 5, kind: input, shape index: {}]
  %s6 = inlined_call_operand.hbm [shape: f32[4,8,128], index: 6, kind: output, shape index: {}]
  %s7 = sld [smem:[#allocation0]]
  $region77: #{tpu_custom_call.1} parent=0
    _
  %s9 = ssub.s32 1, %s7
  %s10 = scalar_select 0, %s9, %s7
  $region1: #{tpu_custom_call.1} parent=0
    #allocation3 [shape = 'u8[512]{0}', space=smem, size = 0x200, scoped, tag = 'input window, operand 0, single buffered']
    #allocation4 [shape = 's32[2]{0}', space=sflag, size = 0x8, scoped, tag = 'scoped memory for tpu_custom_call.1']
    #allocation5 [shape = 's32[2]{0}', space=sflag, size = 0x8, scoped, tag = 'scoped memory for tpu_custom_call.1']
    #allocation6 [shape = 's32[2]{0}', space=sflag, size = 0x8, scoped, tag = 'scoped memory for tpu_custom_call.1']
    #allocation7 [shape = 'u8[4096]{0}', space=vmem, size = 0x1000, scoped, tag = 'input window, operand 1, single buffered']
    #allocation8 [shape = 'u8[65536]{0}', space=vmem, size = 0x10000, scoped, tag = 'input window, operand 2, single buffered']
    #allocation9 [shape = 's32[1]{0}', space=sflag, size = 0x4, scoped, tag = 'scoped memory for tpu_custom_call.1']
    #allocation10 [shape = 'u8[65536]{0}', space=vmem, size = 0x10000, scoped, tag = 'input window, operand 4, single buffered']
    #allocation11 [shape = 'u8[8192]{0}', space=vmem, size = 0x2000, scoped, tag = 'output window, operand 0']
    %11 = vsyncpa [#allocation6], 0
    %12 = vsyncpa [#allocation4], 0
    %13 = vsyncpa [#allocation9], 0
    %14 = vsyncpa [#allocation5], 0
    %s15 = scalar_lea.sflag [#allocation5], 1
    %16 = vsyncpa %s15, 0
    loop: start=0, step=1, limit=6
    $region2: #{tpu_custom_call.1} parent=1 // loop_pre_header
      _
    $region3: #{tpu_custom_call.1} parent=1 // loop_header
      %s18 = sphi 0, %s22
      %p19 = scmp.ge.s32.totalorder %s18, 6
      %s25 = sphi 0, %s37
      %s26 = sphi 0, %s33
      %s27 = sphi 0, %s25
      %s28 = sphi 0, %s26
      %s29 = sphi 0, %s27
      %s30 = sphi 0, %s28
      %s38 = sphi 0, %s38
      %s40 = sphi 0, %s38
      %s41 = sphi 0, %s40
      %s55 = sphi 0, %s41
      %s61 = sphi 0, %s63
      %s64 = sphi 0, %s61
      %s65 = sphi 0, %s64
      %s81 = sphi 0, %s65
      %s85 = sphi 0, %s85
      %s87 = sphi 0, %s85
      %s88 = sphi 0, %s87
      %s102 = sphi 0, %s88
      %s106 = sphi 0, %s106
      %s108 = sphi 0, %s106
      %s109 = sphi 0, %s108
      %s123 = sphi 0, %s109
      %s127 = sphi 0, %s127
      %s129 = sphi 0, %s127
      %s130 = sphi 0, %s129
      %s144 = sphi 0, %s130
      %s148 = sphi 0, %s148
      %s150 = sphi 0, %s148
      %s151 = sphi 0, %s150
      %s165 = sphi 0, %s151
      %s173 = sphi 0, %s175
      %s176 = sphi 0, %s173
      %s177 = sphi 0, %s176
      %s193 = sphi 0, %s177
    $region4: #{tpu_custom_call.1} parent=1 // loop_header_branch
      %21 = sbr.rel (%p19) target = $region8
    $region5: #{tpu_custom_call.1} parent=1 // loop_body
      %s23 = ssub.s32 %s18, 1
      %s24 = ssub.s32 %s18, 2
      %s31 = sadd.s32 1, %s26
      %p32 = scmp.ge.s32.totalorder %s31, 4
      %s33 = scalar_select %p32, 0, %s31
      %s34 = sadd.s32 1, %s25
      %s35 = scalar_select %p32, %s34, %s25
      %p36 = scmp.ge.s32.totalorder %s35, 1
      %s37 = scalar_select %p36, 0, %s35
      %s39 = sadd.s32 %s38, 1
      %p42 = scmp.eq.s32.totalorder %s18, 3
      %p43 = scmp.ne.s32.totalorder %s38, %s40
      %p44 = scmp.eq.s32.totalorder %s18, 0
      %p45 = por %p43, %p44
      %p46 = scmp.ne.s32.totalorder %s38, %s40
      %p47 = scmp.eq.s32.totalorder %s23, 3
      %p48 = por %p46, %p47
      %p49 = scmp.ne.s32.totalorder %s40, %s41
      %p50 = scmp.eq.s32.totalorder %s23, 0
      %p51 = por %p49, %p50
      %p52 = scmp.ne.s32.totalorder %s40, %s41
      %p53 = scmp.eq.s32.totalorder %s24, 3
      %p54 = por %p52, %p53
      %p56 = scmp.ne.s32.totalorder %s41, %s55
      %p57 = scmp.eq.s32.totalorder %s24, 0
      %p58 = por %p56, %p57
      %s59 = ssub.s32 %s25, %s37
      %p60 = scmp.eq.s32.totalorder %s59, 0
      %s62 = sadd.s32 %s61, 1
      %s63 = scalar_select %p60, %s61, %s62
      %p66 = pneg %p60
      %p67 = scmp.eq.s32.totalorder %s18, 3
      %p68 = por %p66, %p67
      %p69 = scmp.ne.s32.totalorder %s61, %s64
      %p70 = scmp.eq.s32.totalorder %s18, 0
      %p71 = por %p69, %p70
      %p72 = scmp.ne.s32.totalorder %s61, %s64
      %p73 = scmp.eq.s32.totalorder %s23, 3
      %p74 = por %p72, %p73
      %p75 = scmp.ne.s32.totalorder %s64, %s65
      %p76 = scmp.eq.s32.totalorder %s23, 0
      %p77 = por %p75, %p76
      %p78 = scmp.ne.s32.totalorder %s64, %s65
      %p79 = scmp.eq.s32.totalorder %s24, 3
      %p80 = por %p78, %p79
      %p82 = scmp.ne.s32.totalorder %s65, %s81
      %p83 = scmp.eq.s32.totalorder %s24, 0
      %p84 = por %p82, %p83
      %s86 = sadd.s32 %s85, 1
      %p89 = scmp.eq.s32.totalorder %s18, 3
      %p90 = scmp.ne.s32.totalorder %s85, %s87
      %p91 = scmp.eq.s32.totalorder %s18, 0
      %p92 = por %p90, %p91
      %p93 = scmp.ne.s32.totalorder %s85, %s87
      %p94 = scmp.eq.s32.totalorder %s23, 3
      %p95 = por %p93, %p94
      %p96 = scmp.ne.s32.totalorder %s87, %s88
      %p97 = scmp.eq.s32.totalorder %s23, 0
      %p98 = por %p96, %p97
      %p99 = scmp.ne.s32.totalorder %s87, %s88
      %p100 = scmp.eq.s32.totalorder %s24, 3
      %p101 = por %p99, %p100
      %p103 = scmp.ne.s32.totalorder %s88, %s102
      %p104 = scmp.eq.s32.totalorder %s24, 0
      %p105 = por %p103, %p104
      %s107 = sadd.s32 %s106, 1
      %p110 = scmp.eq.s32.totalorder %s18, 3
      %p111 = scmp.ne.s32.totalorder %s106, %s108
      %p112 = scmp.eq.s32.totalorder %s18, 0
      %p113 = por %p111, %p112
      %p114 = scmp.ne.s32.totalorder %s106, %s108
      %p115 = scmp.eq.s32.totalorder %s23, 3
      %p116 = por %p114, %p115
      %p117 = scmp.ne.s32.totalorder %s108, %s109
      %p118 = scmp.eq.s32.totalorder %s23, 0
      %p119 = por %p117, %p118
      %p120 = scmp.ne.s32.totalorder %s108, %s109
      %p121 = scmp.eq.s32.totalorder %s24, 3
      %p122 = por %p120, %p121
      %p124 = scmp.ne.s32.totalorder %s109, %s123
      %p125 = scmp.eq.s32.totalorder %s24, 0
      %p126 = por %p124, %p125
      %s128 = sadd.s32 %s127, 1
      %p131 = scmp.eq.s32.totalorder %s18, 3
      %p132 = scmp.ne.s32.totalorder %s127, %s129
      %p133 = scmp.eq.s32.totalorder %s18, 0
      %p134 = por %p132, %p133
      %p135 = scmp.ne.s32.totalorder %s127, %s129
      %p136 = scmp.eq.s32.totalorder %s23, 3
      %p137 = por %p135, %p136
      %p138 = scmp.ne.s32.totalorder %s129, %s130
      %p139 = scmp.eq.s32.totalorder %s23, 0
      %p140 = por %p138, %p139
      %p141 = scmp.ne.s32.totalorder %s129, %s130
      %p142 = scmp.eq.s32.totalorder %s24, 3
      %p143 = por %p141, %p142
      %p145 = scmp.ne.s32.totalorder %s130, %s144
      %p146 = scmp.eq.s32.totalorder %s24, 0
      %p147 = por %p145, %p146
      %s149 = sadd.s32 %s148, 1
      %p152 = scmp.eq.s32.totalorder %s18, 3
      %p153 = scmp.ne.s32.totalorder %s148, %s150
      %p154 = scmp.eq.s32.totalorder %s18, 0
      %p155 = por %p153, %p154
      %p156 = scmp.ne.s32.totalorder %s148, %s150
      %p157 = scmp.eq.s32.totalorder %s23, 3
      %p158 = por %p156, %p157
      %p159 = scmp.ne.s32.totalorder %s150, %s151
      %p160 = scmp.eq.s32.totalorder %s23, 0
      %p161 = por %p159, %p160
      %p162 = scmp.ne.s32.totalorder %s150, %s151
      %p163 = scmp.eq.s32.totalorder %s24, 3
      %p164 = por %p162, %p163
      %p166 = scmp.ne.s32.totalorder %s151, %s165
      %p167 = scmp.eq.s32.totalorder %s24, 0
      %p168 = por %p166, %p167
      %s169 = ssub.s32 %s26, %s33
      %s170 = ssub.s32 %s25, %s37
      %s171 = sor.u32 %s169, %s170
      %p172 = scmp.eq.s32.totalorder %s171, 0
      %s174 = sadd.s32 %s173, 1
      %s175 = scalar_select %p172, %s173, %s174
      %p178 = pneg %p172
      %p179 = scmp.eq.s32.totalorder %s18, 3
      %p180 = por %p178, %p179
      %p181 = scmp.ne.s32.totalorder %s173, %s176
      %p182 = scmp.eq.s32.totalorder %s18, 0
      %p183 = por %p181, %p182
      %p184 = scmp.ne.s32.totalorder %s173, %s176
      %p185 = scmp.eq.s32.totalorder %s23, 3
      %p186 = por %p184, %p185
      %p187 = scmp.ne.s32.totalorder %s176, %s177
      %p188 = scmp.eq.s32.totalorder %s23, 0
      %p189 = por %p187, %p188
      %p190 = scmp.ne.s32.totalorder %s176, %s177
      %p191 = scmp.eq.s32.totalorder %s24, 3
      %p192 = por %p190, %p191
      %p194 = scmp.ne.s32.totalorder %s177, %s193
      %p195 = scmp.eq.s32.totalorder %s24, 0
      %p196 = por %p194, %p195
      %p197 = scmp.le.s32.totalorder 1, %s18
      %p198 = scmp.lt.s32.totalorder %s18, 5
      %p199 = pnand %p197, %p198
      %p200 = pneg %p199
      // Predicated region
      $region9: #{tpu_custom_call.1} parent=5 // pred_check
        _
      $region10: #{tpu_custom_call.1} parent=5 // pred_check_branch
        %202 = sbr.rel (%p199) target = $region12
      $region11: #{tpu_custom_call.1} parent=5 // pred_region
        %s203 = ssub.s32 %s18, 1
        // Predicated region
        $region13: #{tpu_custom_call.1} parent=11 // pred_check
          %p204 = pneg %p51
        $region14: #{tpu_custom_call.1} parent=11 // pred_check_branch
          %206 = sbr.rel (%p204) target = $region16
        $region15: #{tpu_custom_call.1} parent=11 // pred_region
          %s208 = ssub.s32 16, 16
          %209 = vsyncadd [#allocation6], %s208
          %212 = dma.hbm_to_smem %s0, 16, [#allocation3], [#allocation6]
        $region16: #{tpu_custom_call.1} parent=11 // pred_fallthru
          _
        // Predicated region
        $region17: #{tpu_custom_call.1} parent=11 // pred_check
          %p213 = pneg %p77
        $region18: #{tpu_custom_call.1} parent=11 // pred_check_branch
          %215 = sbr.rel (%p213) target = $region20
        $region19: #{tpu_custom_call.1} parent=11 // pred_region
          %s217 = ssub.s32 128, 128
          %218 = vsyncadd [#allocation4], %s217
          %s219 = smul.addr %s27, 128
          %s220 = scalar_lea.hbm %s1, %s219
          %s222 = sshll.u32 [#allocation7], 4
          %s223 = int_to_ptr.vmem [resolvable:$true] %s222
          %225 = dma.hbm_to_vmem [thread:$0]  %s220, 128, %s223, [#allocation4]
        $region20: #{tpu_custom_call.1} parent=11 // pred_fallthru
          _
        // Predicated region
        $region21: #{tpu_custom_call.1} parent=11 // pred_check
          %p226 = pneg %p98
        $region22: #{tpu_custom_call.1} parent=11 // pred_check_branch
          %228 = sbr.rel (%p226) target = $region24
        $region23: #{tpu_custom_call.1} parent=11 // pred_region
          %s230 = ssub.s32 2048, 2048
          %231 = vsyncadd [#allocation9], %s230
          %s232 = sshll.u32 [#allocation8], 4
          %s233 = int_to_ptr.vmem [resolvable:$true] %s232
          %238 = dma.hbm_to_vmem [thread:$0]  %s2, 2048, %s233, [#allocation9], 128, 128, 8
        $region24: #{tpu_custom_call.1} parent=11 // pred_fallthru
          _
        // Predicated region
        $region25: #{tpu_custom_call.1} parent=11 // pred_check
          %p239 = pneg %p119
        $region26: #{tpu_custom_call.1} parent=11 // pred_check_branch
          %241 = sbr.rel (%p239) target = $region28
        $region27: #{tpu_custom_call.1} parent=11 // pred_region
          _
        $region28: #{tpu_custom_call.1} parent=11 // pred_fallthru
          _
        // Predicated region
        $region29: #{tpu_custom_call.1} parent=11 // pred_check
          %p242 = pneg %p140
        $region30: #{tpu_custom_call.1} parent=11 // pred_check_branch
          %244 = sbr.rel (%p242) target = $region32
        $region31: #{tpu_custom_call.1} parent=11 // pred_region
          %s246 = ssub.s32 2048, 2048
          %247 = vsyncadd [#allocation9], %s246
          %s248 = sshll.u32 [#allocation10], 4
          %s249 = int_to_ptr.vmem [resolvable:$true] %s248
          %254 = dma.hbm_to_vmem [thread:$0]  %s4, 2048, %s249, [#allocation9], 128, 128, 8
        $region32: #{tpu_custom_call.1} parent=11 // pred_fallthru
          _
        // Predicated region
        $region33: #{tpu_custom_call.1} parent=11 // pred_check
          %p255 = pneg %p161
        $region34: #{tpu_custom_call.1} parent=11 // pred_check_branch
          %257 = sbr.rel (%p255) target = $region36
        $region35: #{tpu_custom_call.1} parent=11 // pred_region
          _
        $region36: #{tpu_custom_call.1} parent=11 // pred_fallthru
          _
      $region12: #{tpu_custom_call.1} parent=5 // pred_fallthru
        _
      %p258 = scmp.lt.s32.totalorder %s18, 4
      // Predicated region
      $region37: #{tpu_custom_call.1} parent=5 // pred_check
        %p259 = pneg %p258
      $region38: #{tpu_custom_call.1} parent=5 // pred_check_branch
        %261 = sbr.rel (%p259) target = $region40
      $region39: #{tpu_custom_call.1} parent=5 // pred_region
        _
      $region40: #{tpu_custom_call.1} parent=5 // pred_fallthru
        _
      %p262 = scmp.le.s32.totalorder 1, %s18
      %p263 = scmp.lt.s32.totalorder %s18, 5
      %p264 = pnand %p262, %p263
      %p265 = pneg %p264
      // Predicated region
      $region41: #{tpu_custom_call.1} parent=5 // pred_check
        _
      $region42: #{tpu_custom_call.1} parent=5 // pred_check_branch
        %267 = sbr.rel (%p264) target = $region44
      $region43: #{tpu_custom_call.1} parent=5 // pred_region
        %s268 = ssub.s32 %s18, 1
        // Predicated region
        $region45: #{tpu_custom_call.1} parent=43 // pred_check
          %p269 = pneg %p51
        $region46: #{tpu_custom_call.1} parent=43 // pred_check_branch
          %271 = sbr.rel (%p269) target = $region48
        $region47: #{tpu_custom_call.1} parent=43 // pred_region
          %272 = dma.done [#allocation6], 16
        $region48: #{tpu_custom_call.1} parent=43 // pred_fallthru
          _
        // Predicated region
        $region49: #{tpu_custom_call.1} parent=43 // pred_check
          %p273 = pneg %p77
        $region50: #{tpu_custom_call.1} parent=43 // pred_check_branch
          %275 = sbr.rel (%p273) target = $region52
        $region51: #{tpu_custom_call.1} parent=43 // pred_region
          %276 = dma.done [#allocation4], 128
        $region52: #{tpu_custom_call.1} parent=43 // pred_fallthru
          _
        // Predicated region
        $region53: #{tpu_custom_call.1} parent=43 // pred_check
          %p277 = pneg %p98
        $region54: #{tpu_custom_call.1} parent=43 // pred_check_branch
          %279 = sbr.rel (%p277) target = $region56
        $region55: #{tpu_custom_call.1} parent=43 // pred_region
          %280 = dma.done [#allocation9], 2048
        $region56: #{tpu_custom_call.1} parent=43 // pred_fallthru
          _
        // Predicated region
        $region57: #{tpu_custom_call.1} parent=43 // pred_check
          %p281 = pneg %p140
        $region58: #{tpu_custom_call.1} parent=43 // pred_check_branch
          %283 = sbr.rel (%p281) target = $region60
        $region59: #{tpu_custom_call.1} parent=43 // pred_region
          %284 = dma.done [#allocation9], 2048
        $region60: #{tpu_custom_call.1} parent=43 // pred_fallthru
          _
        %285 = sfence
        %p286 = pneg %p51
        %p287 = pneg %p48
        %p288 = pneg %p77
        %p289 = pneg %p74
        %p290 = pneg %p98
        %p291 = pneg %p95
        %p292 = pneg %p119
        %p293 = pneg %p116
        %p294 = pneg %p140
        %p295 = pneg %p137
        %p296 = pneg %p161
        %p297 = pneg %p158
        %p298 = pneg %p189
        %p299 = pneg %p186
        %s300 = sand.u32 %s176, 1
        %s301 = scalar_lea.sflag [#allocation5], %s300
        %s302 = sand.u32 %s176, 1
        %s303 = smul.addr %s302, 8
        %s304 = scalar_lea.vmem [#allocation11], %s303
        %p305 = scmp.eq.s32.totalorder %s28, 0
        // Predicated region
        $region61: #{tpu_custom_call.1} parent=43 // pred_check
          %p306 = pneg %p305
        $region62: #{tpu_custom_call.1} parent=43 // pred_check_branch
          %308 = sbr.rel (%p306) target = $region64
        $region63: #{tpu_custom_call.1} parent=43 // pred_region
          %v309 = vld [vmem:[#allocation7] sm:$0xff]
          %310 = vst [vmem:[#allocation2] sm:$0xff] %v309
        $region64: #{tpu_custom_call.1} parent=43 // pred_fallthru
          _
        %v311 = vld [vmem:[#allocation8] sm:$0xff]
        %v312 = vld [vmem:[#allocation8 + $0x8] sm:$0xff]
        %v313 = vld [vmem:[#allocation8 + $0x10] sm:$0xff]
        %v314 = vld [vmem:[#allocation8 + $0x18] sm:$0xff]
        %v315 = vld [vmem:[#allocation8 + $0x20] sm:$0xff]
        %v316 = vld [vmem:[#allocation8 + $0x28] sm:$0xff]
        %v317 = vld [vmem:[#allocation8 + $0x30] sm:$0xff]
        %v318 = vld [vmem:[#allocation8 + $0x38] sm:$0xff]
        %v319 = vld [vmem:[#allocation8 + $0x40] sm:$0xff]
        %v320 = vld [vmem:[#allocation8 + $0x48] sm:$0xff]
        %v321 = vld [vmem:[#allocation8 + $0x50] sm:$0xff]
        %v322 = vld [vmem:[#allocation8 + $0x58] sm:$0xff]
        %v323 = vld [vmem:[#allocation8 + $0x60] sm:$0xff]
        %v324 = vld [vmem:[#allocation8 + $0x68] sm:$0xff]
        %v325 = vld [vmem:[#allocation8 + $0x70] sm:$0xff]
        %v326 = vld [vmem:[#allocation8 + $0x78] sm:$0xff]
        %v327 = vld [vmem:[#allocation10] sm:$0xff]
        %v328 = vld [vmem:[#allocation10 + $0x8] sm:$0xff]
        %v329 = vld [vmem:[#allocation10 + $0x10] sm:$0xff]
        %v330 = vld [vmem:[#allocation10 + $0x18] sm:$0xff]
        %v331 = vld [vmem:[#allocation10 + $0x20] sm:$0xff]
        %v332 = vld [vmem:[#allocation10 + $0x28] sm:$0xff]
        %v333 = vld [vmem:[#allocation10 + $0x30] sm:$0xff]
        %v334 = vld [vmem:[#allocation10 + $0x38] sm:$0xff]
        %v335 = vld [vmem:[#allocation10 + $0x40] sm:$0xff]
        %v336 = vld [vmem:[#allocation10 + $0x48] sm:$0xff]
        %v337 = vld [vmem:[#allocation10 + $0x50] sm:$0xff]
        %v338 = vld [vmem:[#allocation10 + $0x58] sm:$0xff]
        %v339 = vld [vmem:[#allocation10 + $0x60] sm:$0xff]
        %v340 = vld [vmem:[#allocation10 + $0x68] sm:$0xff]
        %v341 = vld [vmem:[#allocation10 + $0x70] sm:$0xff]
        %v342 = vld [vmem:[#allocation10 + $0x78] sm:$0xff]
        %v343 = vld [vmem:[%s3] sm:$0x1]
        %v345 = vlaneseq
        %v346 = vshrl.u32 %v345, 7
        %v347 = vsub.s32 0, %v346
        %v348 = vrot.slane %v343, %v347
        %v350 = vld [vmem:[%s5] sm:$0x1]
        %v352 = vlaneseq
        %v353 = vshrl.u32 %v352, 7
        %v354 = vsub.s32 0, %v353
        %v355 = vrot.slane %v350, %v354
        %s357 = sld [smem:[#allocation3 + %s28]]
        %v358 = vrcp.pop 4.0
        %s359 = vtos %v358
        %s360 = smul.f32 %s357, %s359
        %v361 = vld [vmem:[#allocation2] sm:$0xff]
        %362 = vmatprep.subr.mxu0 0.0
        %363 = vmatpush1.msra.mxu0 %v311
        %364 = vmatprep.subr.mxu0 0.0
        %365 = vmatpush1.msra.mxu0 %v312
        %366 = vmatprep.subr.mxu0 0.0
        %367 = vmatpush1.msra.mxu0 %v313
        %368 = vmatprep.subr.mxu0 0.0
        %369 = vmatpush1.msra.mxu0 %v314
        %370 = vmatprep.subr.mxu0 0.0
        %371 = vmatpush1.msra.mxu0 %v315
        %372 = vmatprep.subr.mxu0 0.0
        %373 = vmatpush1.msra.mxu0 %v316
        %374 = vmatprep.subr.mxu0 0.0
        %375 = vmatpush1.msra.mxu0 %v317
        %376 = vmatprep.subr.mxu0 0.0
        %377 = vmatpush1.msra.mxu0 %v318
        %378 = vmatprep.subr.mxu0 0.0
        %379 = vmatpush1.msra.mxu0 %v319
        %380 = vmatprep.subr.mxu0 0.0
        %381 = vmatpush1.msra.mxu0 %v320
        %382 = vmatprep.subr.mxu0 0.0
        %383 = vmatpush1.msra.mxu0 %v321
        %384 = vmatprep.subr.mxu0 0.0
        %385 = vmatpush1.msra.mxu0 %v322
        %386 = vmatprep.subr.mxu0 0.0
        %387 = vmatpush1.msra.mxu0 %v323
        %388 = vmatprep.subr.mxu0 0.0
        %389 = vmatpush1.msra.mxu0 %v324
        %390 = vmatprep.subr.mxu0 0.0
        %391 = vmatpush1.msra.mxu0 %v325
        %392 = vmatprep.subr.mxu0 0.0
        %393 = vmatpush1.msra.mxu0 %v326
        %394 = vmatprep.subr.mxu0 0.0
        %395 = vmatpush1.msra.mxu0 0.0
        %396 = vmatprep.subr.mxu0 0.0
        %397 = vmatpush1.msra.mxu0 0.0
        %398 = vmatprep.subr.mxu0 0.0
        %399 = vmatpush1.msra.mxu0 0.0
        %400 = vmatprep.subr.mxu0 0.0
        %401 = vmatpush1.msra.mxu0 0.0
        %402 = vmatprep.subr.mxu0 0.0
        %403 = vmatpush1.msra.mxu0 0.0
        %404 = vmatprep.subr.mxu0 0.0
        %405 = vmatpush1.msra.mxu0 0.0
        %406 = vmatprep.subr.mxu0 0.0
        %407 = vmatpush1.msra.mxu0 0.0
        %408 = vmatprep.subr.mxu0 0.0
        %409 = vmatpush1.msra.mxu0 0.0
        %410 = vmatprep.subr.mxu0 0.0
        %411 = vmatpush1.msra.mxu0 0.0
        %412 = vmatprep.subr.mxu0 0.0
        %413 = vmatpush1.msra.mxu0 0.0
        %414 = vmatprep.subr.mxu0 0.0
        %415 = vmatpush1.msra.mxu0 0.0
        %416 = vmatprep.subr.mxu0 0.0
        %417 = vmatpush1.msra.mxu0 0.0
        %418 = vmatprep.subr.mxu0 0.0
        %419 = vmatpush1.msra.mxu0 0.0
        %420 = vmatprep.subr.mxu0 0.0
        %421 = vmatpush1.msra.mxu0 0.0
        %422 = vmatprep.subr.mxu0 0.0
        %423 = vmatpush1.msra.mxu0 0.0
        %424 = vmatprep.subr.mxu0 0.0
        %425 = vmatpush1.msra.mxu0 0.0
        %426 = vmatprep.mubr.f32.mxu0 0.0
        %427 = vmatmul.mubr.f32.gmra.mrb[0].mxu0 %v361
        %v428 = vpop.f32.mrb[0].mxu0
        %v429 = vadd.f32 %v348, %v428
        %v430 = vpop.f32.mrb[0].mxu0
        %431 = vdwg.mxu0
        %432 = vmatprep.subr.mxu0 0.0
        %433 = vmatpush1.msra.mxu0 %v327
        %434 = vmatprep.subr.mxu0 0.0
        %435 = vmatpush1.msra.mxu0 %v328
        %436 = vmatprep.subr.mxu0 0.0
        %437 = vmatpush1.msra.mxu0 %v329
        %438 = vmatprep.subr.mxu0 0.0
        %439 = vmatpush1.msra.mxu0 %v330
        %440 = vmatprep.subr.mxu0 0.0
        %441 = vmatpush1.msra.mxu0 %v331
        %442 = vmatprep.subr.mxu0 0.0
        %443 = vmatpush1.msra.mxu0 %v332
        %444 = vmatprep.subr.mxu0 0.0
        %445 = vmatpush1.msra.mxu0 %v333
        %446 = vmatprep.subr.mxu0 0.0
        %447 = vmatpush1.msra.mxu0 %v334
        %448 = vmatprep.subr.mxu0 0.0
        %449 = vmatpush1.msra.mxu0 %v335
        %450 = vmatprep.subr.mxu0 0.0
        %451 = vmatpush1.msra.mxu0 %v336
        %452 = vmatprep.subr.mxu0 0.0
        %453 = vmatpush1.msra.mxu0 %v337
        %454 = vmatprep.subr.mxu0 0.0
        %455 = vmatpush1.msra.mxu0 %v338
        %456 = vmatprep.subr.mxu0 0.0
        %457 = vmatpush1.msra.mxu0 %v339
        %458 = vmatprep.subr.mxu0 0.0
        %459 = vmatpush1.msra.mxu0 %v340
        %460 = vmatprep.subr.mxu0 0.0
        %461 = vmatpush1.msra.mxu0 %v341
        %462 = vmatprep.subr.mxu0 0.0
        %463 = vmatpush1.msra.mxu0 %v342
        %464 = vmatprep.subr.mxu0 0.0
        %465 = vmatpush1.msra.mxu0 0.0
        %466 = vmatprep.subr.mxu0 0.0
        %467 = vmatpush1.msra.mxu0 0.0
        %468 = vmatprep.subr.mxu0 0.0
        %469 = vmatpush1.msra.mxu0 0.0
        %470 = vmatprep.subr.mxu0 0.0
        %471 = vmatpush1.msra.mxu0 0.0
        %472 = vmatprep.subr.mxu0 0.0
        %473 = vmatpush1.msra.mxu0 0.0
        %474 = vmatprep.subr.mxu0 0.0
        %475 = vmatpush1.msra.mxu0 0.0
        %476 = vmatprep.subr.mxu0 0.0
        %477 = vmatpush1.msra.mxu0 0.0
        %478 = vmatprep.subr.mxu0 0.0
        %479 = vmatpush1.msra.mxu0 0.0
        %480 = vmatprep.subr.mxu0 0.0
        %481 = vmatpush1.msra.mxu0 0.0
        %482 = vmatprep.subr.mxu0 0.0
        %483 = vmatpush1.msra.mxu0 0.0
        %484 = vmatprep.subr.mxu0 0.0
        %485 = vmatpush1.msra.mxu0 0.0
        %486 = vmatprep.subr.mxu0 0.0
        %487 = vmatpush1.msra.mxu0 0.0
        %488 = vmatprep.subr.mxu0 0.0
        %489 = vmatpush1.msra.mxu0 0.0
        %490 = vmatprep.subr.mxu0 0.0
        %491 = vmatpush1.msra.mxu0 0.0
        %492 = vmatprep.subr.mxu0 0.0
        %493 = vmatpush1.msra.mxu0 0.0
        %494 = vmatprep.subr.mxu0 0.0
        %495 = vmatpush1.msra.mxu0 0.0
        %496 = vmatprep.mubr.f32.mxu0 0.0
        %497 = vmatmul.mubr.f32.gmra.mrb[0].mxu0 %v429
        %v498 = vpop.f32.mrb[0].mxu0
        %v499 = vadd.f32 %v355, %v498
        %v500 = vpop.f32.mrb[0].mxu0
        %501 = vdwg.mxu0
        %v502 = vmul.f32 %v361, %v499
        %503 = vadd.xlane.f32.xlu0 %v502
        %v504 = vpop.xlane.xlu0 %503
        %v505 = vsub.f32 %v499, %v504
        %v506 = vmul.f32 %v361, %v505
        %s507 = smul.f32 %s360, 0.5
        %v508 = vstv %s507
        %v509 = vmul.f32 %v508, %v506
        %v510 = vadd.f32 %v361, %v509
        %511 = vmatprep.subr.mxu0 0.0
        %512 = vmatpush1.msra.mxu0 %v311
        %513 = vmatprep.subr.mxu0 0.0
        %514 = vmatpush1.msra.mxu0 %v312
        %515 = vmatprep.subr.mxu0 0.0
        %516 = vmatpush1.msra.mxu0 %v313
        %517 = vmatprep.subr.mxu0 0.0
        %518 = vmatpush1.msra.mxu0 %v314
        %519 = vmatprep.subr.mxu0 0.0
        %520 = vmatpush1.msra.mxu0 %v315
        %521 = vmatprep.subr.mxu0 0.0
        %522 = vmatpush1.msra.mxu0 %v316
        %523 = vmatprep.subr.mxu0 0.0
        %524 = vmatpush1.msra.mxu0 %v317
        %525 = vmatprep.subr.mxu0 0.0
        %526 = vmatpush1.msra.mxu0 %v318
        %527 = vmatprep.subr.mxu0 0.0
        %528 = vmatpush1.msra.mxu0 %v319
        %529 = vmatprep.subr.mxu0 0.0
        %530 = vmatpush1.msra.mxu0 %v320
        %531 = vmatprep.subr.mxu0 0.0
        %532 = vmatpush1.msra.mxu0 %v321
        %533 = vmatprep.subr.mxu0 0.0
        %534 = vmatpush1.msra.mxu0 %v322
        %535 = vmatprep.subr.mxu0 0.0
        %536 = vmatpush1.msra.mxu0 %v323
        %537 = vmatprep.subr.mxu0 0.0
        %538 = vmatpush1.msra.mxu0 %v324
        %539 = vmatprep.subr.mxu0 0.0
        %540 = vmatpush1.msra.mxu0 %v325
        %541 = vmatprep.subr.mxu0 0.0
        %542 = vmatpush1.msra.mxu0 %v326
        %543 = vmatprep.subr.mxu0 0.0
        %544 = vmatpush1.msra.mxu0 0.0
        %545 = vmatprep.subr.mxu0 0.0
        %546 = vmatpush1.msra.mxu0 0.0
        %547 = vmatprep.subr.mxu0 0.0
        %548 = vmatpush1.msra.mxu0 0.0
        %549 = vmatprep.subr.mxu0 0.0
        %550 = vmatpush1.msra.mxu0 0.0
        %551 = vmatprep.subr.mxu0 0.0
        %552 = vmatpush1.msra.mxu0 0.0
        %553 = vmatprep.subr.mxu0 0.0
        %554 = vmatpush1.msra.mxu0 0.0
        %555 = vmatprep.subr.mxu0 0.0
        %556 = vmatpush1.msra.mxu0 0.0
        %557 = vmatprep.subr.mxu0 0.0
        %558 = vmatpush1.msra.mxu0 0.0
        %559 = vmatprep.subr.mxu0 0.0
        %560 = vmatpush1.msra.mxu0 0.0
        %561 = vmatprep.subr.mxu0 0.0
        %562 = vmatpush1.msra.mxu0 0.0
        %563 = vmatprep.subr.mxu0 0.0
        %564 = vmatpush1.msra.mxu0 0.0
        %565 = vmatprep.subr.mxu0 0.0
        %566 = vmatpush1.msra.mxu0 0.0
        %567 = vmatprep.subr.mxu0 0.0
        %568 = vmatpush1.msra.mxu0 0.0
        %569 = vmatprep.subr.mxu0 0.0
        %570 = vmatpush1.msra.mxu0 0.0
        %571 = vmatprep.subr.mxu0 0.0
        %572 = vmatpush1.msra.mxu0 0.0
        %573 = vmatprep.subr.mxu0 0.0
        %574 = vmatpush1.msra.mxu0 0.0
        %575 = vmatprep.mubr.f32.mxu0 0.0
        %576 = vmatmul.mubr.f32.gmra.mrb[0].mxu0 %v510
        %v577 = vpop.f32.mrb[0].mxu0
        %v578 = vadd.f32 %v348, %v577
        %v579 = vpop.f32.mrb[0].mxu0
        %580 = vdwg.mxu0
        %581 = vmatprep.subr.mxu0 0.0
        %582 = vmatpush1.msra.mxu0 %v327
        %583 = vmatprep.subr.mxu0 0.0
        %584 = vmatpush1.msra.mxu0 %v328
        %585 = vmatprep.subr.mxu0 0.0
        %586 = vmatpush1.msra.mxu0 %v329
        %587 = vmatprep.subr.mxu0 0.0
        %588 = vmatpush1.msra.mxu0 %v330
        %589 = vmatprep.subr.mxu0 0.0
        %590 = vmatpush1.msra.mxu0 %v331
        %591 = vmatprep.subr.mxu0 0.0
        %592 = vmatpush1.msra.mxu0 %v332
        %593 = vmatprep.subr.mxu0 0.0
        %594 = vmatpush1.msra.mxu0 %v333
        %595 = vmatprep.subr.mxu0 0.0
        %596 = vmatpush1.msra.mxu0 %v334
        %597 = vmatprep.subr.mxu0 0.0
        %598 = vmatpush1.msra.mxu0 %v335
        %599 = vmatprep.subr.mxu0 0.0
        %600 = vmatpush1.msra.mxu0 %v336
        %601 = vmatprep.subr.mxu0 0.0
        %602 = vmatpush1.msra.mxu0 %v337
        %603 = vmatprep.subr.mxu0 0.0
        %604 = vmatpush1.msra.mxu0 %v338
        %605 = vmatprep.subr.mxu0 0.0
        %606 = vmatpush1.msra.mxu0 %v339
        %607 = vmatprep.subr.mxu0 0.0
        %608 = vmatpush1.msra.mxu0 %v340
        %609 = vmatprep.subr.mxu0 0.0
        %610 = vmatpush1.msra.mxu0 %v341
        %611 = vmatprep.subr.mxu0 0.0
        %612 = vmatpush1.msra.mxu0 %v342
        %613 = vmatprep.subr.mxu0 0.0
        %614 = vmatpush1.msra.mxu0 0.0
        %615 = vmatprep.subr.mxu0 0.0
        %616 = vmatpush1.msra.mxu0 0.0
        %617 = vmatprep.subr.mxu0 0.0
        %618 = vmatpush1.msra.mxu0 0.0
        %619 = vmatprep.subr.mxu0 0.0
        %620 = vmatpush1.msra.mxu0 0.0
        %621 = vmatprep.subr.mxu0 0.0
        %622 = vmatpush1.msra.mxu0 0.0
        %623 = vmatprep.subr.mxu0 0.0
        %624 = vmatpush1.msra.mxu0 0.0
        %625 = vmatprep.subr.mxu0 0.0
        %626 = vmatpush1.msra.mxu0 0.0
        %627 = vmatprep.subr.mxu0 0.0
        %628 = vmatpush1.msra.mxu0 0.0
        %629 = vmatprep.subr.mxu0 0.0
        %630 = vmatpush1.msra.mxu0 0.0
        %631 = vmatprep.subr.mxu0 0.0
        %632 = vmatpush1.msra.mxu0 0.0
        %633 = vmatprep.subr.mxu0 0.0
        %634 = vmatpush1.msra.mxu0 0.0
        %635 = vmatprep.subr.mxu0 0.0
        %636 = vmatpush1.msra.mxu0 0.0
        %637 = vmatprep.subr.mxu0 0.0
        %638 = vmatpush1.msra.mxu0 0.0
        %639 = vmatprep.subr.mxu0 0.0
        %640 = vmatpush1.msra.mxu0 0.0
        %641 = vmatprep.subr.mxu0 0.0
        %642 = vmatpush1.msra.mxu0 0.0
        %643 = vmatprep.subr.mxu0 0.0
        %644 = vmatpush1.msra.mxu0 0.0
        %645 = vmatprep.mubr.f32.mxu0 0.0
        %646 = vmatmul.mubr.f32.gmra.mrb[0].mxu0 %v578
        %v647 = vpop.f32.mrb[0].mxu0
        %v648 = vadd.f32 %v355, %v647
        %v649 = vpop.f32.mrb[0].mxu0
        %650 = vdwg.mxu0
        %v651 = vmul.f32 %v510, %v648
        %652 = vadd.xlane.f32.xlu0 %v651
        %v653 = vpop.xlane.xlu0 %652
        %v654 = vsub.f32 %v648, %v653
        %v655 = vmul.f32 %v510, %v654
        %v656 = vmul.f32 %v508, %v655
        %v657 = vadd.f32 %v361, %v656
        %658 = vmatprep.subr.mxu0 0.0
        %659 = vmatpush1.msra.mxu0 %v311
        %660 = vmatprep.subr.mxu0 0.0
        %661 = vmatpush1.msra.mxu0 %v312
        %662 = vmatprep.subr.mxu0 0.0
        %663 = vmatpush1.msra.mxu0 %v313
        %664 = vmatprep.subr.mxu0 0.0
        %665 = vmatpush1.msra.mxu0 %v314
        %666 = vmatprep.subr.mxu0 0.0
        %667 = vmatpush1.msra.mxu0 %v315
        %668 = vmatprep.subr.mxu0 0.0
        %669 = vmatpush1.msra.mxu0 %v316
        %670 = vmatprep.subr.mxu0 0.0
        %671 = vmatpush1.msra.mxu0 %v317
        %672 = vmatprep.subr.mxu0 0.0
        %673 = vmatpush1.msra.mxu0 %v318
        %674 = vmatprep.subr.mxu0 0.0
        %675 = vmatpush1.msra.mxu0 %v319
        %676 = vmatprep.subr.mxu0 0.0
        %677 = vmatpush1.msra.mxu0 %v320
        %678 = vmatprep.subr.mxu0 0.0
        %679 = vmatpush1.msra.mxu0 %v321
        %680 = vmatprep.subr.mxu0 0.0
        %681 = vmatpush1.msra.mxu0 %v322
        %682 = vmatprep.subr.mxu0 0.0
        %683 = vmatpush1.msra.mxu0 %v323
        %684 = vmatprep.subr.mxu0 0.0
        %685 = vmatpush1.msra.mxu0 %v324
        %686 = vmatprep.subr.mxu0 0.0
        %687 = vmatpush1.msra.mxu0 %v325
        %688 = vmatprep.subr.mxu0 0.0
        %689 = vmatpush1.msra.mxu0 %v326
        %690 = vmatprep.subr.mxu0 0.0
        %691 = vmatpush1.msra.mxu0 0.0
        %692 = vmatprep.subr.mxu0 0.0
        %693 = vmatpush1.msra.mxu0 0.0
        %694 = vmatprep.subr.mxu0 0.0
        %695 = vmatpush1.msra.mxu0 0.0
        %696 = vmatprep.subr.mxu0 0.0
        %697 = vmatpush1.msra.mxu0 0.0
        %698 = vmatprep.subr.mxu0 0.0
        %699 = vmatpush1.msra.mxu0 0.0
        %700 = vmatprep.subr.mxu0 0.0
        %701 = vmatpush1.msra.mxu0 0.0
        %702 = vmatprep.subr.mxu0 0.0
        %703 = vmatpush1.msra.mxu0 0.0
        %704 = vmatprep.subr.mxu0 0.0
        %705 = vmatpush1.msra.mxu0 0.0
        %706 = vmatprep.subr.mxu0 0.0
        %707 = vmatpush1.msra.mxu0 0.0
        %708 = vmatprep.subr.mxu0 0.0
        %709 = vmatpush1.msra.mxu0 0.0
        %710 = vmatprep.subr.mxu0 0.0
        %711 = vmatpush1.msra.mxu0 0.0
        %712 = vmatprep.subr.mxu0 0.0
        %713 = vmatpush1.msra.mxu0 0.0
        %714 = vmatprep.subr.mxu0 0.0
        %715 = vmatpush1.msra.mxu0 0.0
        %716 = vmatprep.subr.mxu0 0.0
        %717 = vmatpush1.msra.mxu0 0.0
        %718 = vmatprep.subr.mxu0 0.0
        %719 = vmatpush1.msra.mxu0 0.0
        %720 = vmatprep.subr.mxu0 0.0
        %721 = vmatpush1.msra.mxu0 0.0
        %722 = vmatprep.mubr.f32.mxu0 0.0
        %723 = vmatmul.mubr.f32.gmra.mrb[0].mxu0 %v657
        %v724 = vpop.f32.mrb[0].mxu0
        %v725 = vadd.f32 %v348, %v724
        %v726 = vpop.f32.mrb[0].mxu0
        %727 = vdwg.mxu0
        %728 = vmatprep.subr.mxu0 0.0
        %729 = vmatpush1.msra.mxu0 %v327
        %730 = vmatprep.subr.mxu0 0.0
        %731 = vmatpush1.msra.mxu0 %v328
        %732 = vmatprep.subr.mxu0 0.0
        %733 = vmatpush1.msra.mxu0 %v329
        %734 = vmatprep.subr.mxu0 0.0
        %735 = vmatpush1.msra.mxu0 %v330
        %736 = vmatprep.subr.mxu0 0.0
        %737 = vmatpush1.msra.mxu0 %v331
        %738 = vmatprep.subr.mxu0 0.0
        %739 = vmatpush1.msra.mxu0 %v332
        %740 = vmatprep.subr.mxu0 0.0
        %741 = vmatpush1.msra.mxu0 %v333
        %742 = vmatprep.subr.mxu0 0.0
        %743 = vmatpush1.msra.mxu0 %v334
        %744 = vmatprep.subr.mxu0 0.0
        %745 = vmatpush1.msra.mxu0 %v335
        %746 = vmatprep.subr.mxu0 0.0
        %747 = vmatpush1.msra.mxu0 %v336
        %748 = vmatprep.subr.mxu0 0.0
        %749 = vmatpush1.msra.mxu0 %v337
        %750 = vmatprep.subr.mxu0 0.0
        %751 = vmatpush1.msra.mxu0 %v338
        %752 = vmatprep.subr.mxu0 0.0
        %753 = vmatpush1.msra.mxu0 %v339
        %754 = vmatprep.subr.mxu0 0.0
        %755 = vmatpush1.msra.mxu0 %v340
        %756 = vmatprep.subr.mxu0 0.0
        %757 = vmatpush1.msra.mxu0 %v341
        %758 = vmatprep.subr.mxu0 0.0
        %759 = vmatpush1.msra.mxu0 %v342
        %760 = vmatprep.subr.mxu0 0.0
        %761 = vmatpush1.msra.mxu0 0.0
        %762 = vmatprep.subr.mxu0 0.0
        %763 = vmatpush1.msra.mxu0 0.0
        %764 = vmatprep.subr.mxu0 0.0
        %765 = vmatpush1.msra.mxu0 0.0
        %766 = vmatprep.subr.mxu0 0.0
        %767 = vmatpush1.msra.mxu0 0.0
        %768 = vmatprep.subr.mxu0 0.0
        %769 = vmatpush1.msra.mxu0 0.0
        %770 = vmatprep.subr.mxu0 0.0
        %771 = vmatpush1.msra.mxu0 0.0
        %772 = vmatprep.subr.mxu0 0.0
        %773 = vmatpush1.msra.mxu0 0.0
        %774 = vmatprep.subr.mxu0 0.0
        %775 = vmatpush1.msra.mxu0 0.0
        %776 = vmatprep.subr.mxu0 0.0
        %777 = vmatpush1.msra.mxu0 0.0
        %778 = vmatprep.subr.mxu0 0.0
        %779 = vmatpush1.msra.mxu0 0.0
        %780 = vmatprep.subr.mxu0 0.0
        %781 = vmatpush1.msra.mxu0 0.0
        %782 = vmatprep.subr.mxu0 0.0
        %783 = vmatpush1.msra.mxu0 0.0
        %784 = vmatprep.subr.mxu0 0.0
        %785 = vmatpush1.msra.mxu0 0.0
        %786 = vmatprep.subr.mxu0 0.0
        %787 = vmatpush1.msra.mxu0 0.0
        %788 = vmatprep.subr.mxu0 0.0
        %789 = vmatpush1.msra.mxu0 0.0
        %790 = vmatprep.subr.mxu0 0.0
        %791 = vmatpush1.msra.mxu0 0.0
        %792 = vmatprep.mubr.f32.mxu0 0.0
        %793 = vmatmul.mubr.f32.gmra.mrb[0].mxu0 %v725
        %v794 = vpop.f32.mrb[0].mxu0
        %v795 = vadd.f32 %v355, %v794
        %v796 = vpop.f32.mrb[0].mxu0
        %797 = vdwg.mxu0
        %v798 = vmul.f32 %v657, %v795
        %799 = vadd.xlane.f32.xlu0 %v798
        %v800 = vpop.xlane.xlu0 %799
        %v801 = vsub.f32 %v795, %v800
        %v802 = vmul.f32 %v657, %v801
        %v803 = vstv %s360
        %v804 = vmul.f32 %v803, %v802
        %v805 = vadd.f32 %v361, %v804
        %806 = vmatprep.subr.mxu0 0.0
        %807 = vmatpush1.msra.mxu0 %v311
        %808 = vmatprep.subr.mxu0 0.0
        %809 = vmatpush1.msra.mxu0 %v312
        %810 = vmatprep.subr.mxu0 0.0
        %811 = vmatpush1.msra.mxu0 %v313
        %812 = vmatprep.subr.mxu0 0.0
        %813 = vmatpush1.msra.mxu0 %v314
        %814 = vmatprep.subr.mxu0 0.0
        %815 = vmatpush1.msra.mxu0 %v315
        %816 = vmatprep.subr.mxu0 0.0
        %817 = vmatpush1.msra.mxu0 %v316
        %818 = vmatprep.subr.mxu0 0.0
        %819 = vmatpush1.msra.mxu0 %v317
        %820 = vmatprep.subr.mxu0 0.0
        %821 = vmatpush1.msra.mxu0 %v318
        %822 = vmatprep.subr.mxu0 0.0
        %823 = vmatpush1.msra.mxu0 %v319
        %824 = vmatprep.subr.mxu0 0.0
        %825 = vmatpush1.msra.mxu0 %v320
        %826 = vmatprep.subr.mxu0 0.0
        %827 = vmatpush1.msra.mxu0 %v321
        %828 = vmatprep.subr.mxu0 0.0
        %829 = vmatpush1.msra.mxu0 %v322
        %830 = vmatprep.subr.mxu0 0.0
        %831 = vmatpush1.msra.mxu0 %v323
        %832 = vmatprep.subr.mxu0 0.0
        %833 = vmatpush1.msra.mxu0 %v324
        %834 = vmatprep.subr.mxu0 0.0
        %835 = vmatpush1.msra.mxu0 %v325
        %836 = vmatprep.subr.mxu0 0.0
        %837 = vmatpush1.msra.mxu0 %v326
        %838 = vmatprep.subr.mxu0 0.0
        %839 = vmatpush1.msra.mxu0 0.0
        %840 = vmatprep.subr.mxu0 0.0
        %841 = vmatpush1.msra.mxu0 0.0
        %842 = vmatprep.subr.mxu0 0.0
        %843 = vmatpush1.msra.mxu0 0.0
        %844 = vmatprep.subr.mxu0 0.0
        %845 = vmatpush1.msra.mxu0 0.0
        %846 = vmatprep.subr.mxu0 0.0
        %847 = vmatpush1.msra.mxu0 0.0
        %848 = vmatprep.subr.mxu0 0.0
        %849 = vmatpush1.msra.mxu0 0.0
        %850 = vmatprep.subr.mxu0 0.0
        %851 = vmatpush1.msra.mxu0 0.0
        %852 = vmatprep.subr.mxu0 0.0
        %853 = vmatpush1.msra.mxu0 0.0
        %854 = vmatprep.subr.mxu0 0.0
        %855 = vmatpush1.msra.mxu0 0.0
        %856 = vmatprep.subr.mxu0 0.0
        %857 = vmatpush1.msra.mxu0 0.0
        %858 = vmatprep.subr.mxu0 0.0
        %859 = vmatpush1.msra.mxu0 0.0
        %860 = vmatprep.subr.mxu0 0.0
        %861 = vmatpush1.msra.mxu0 0.0
        %862 = vmatprep.subr.mxu0 0.0
        %863 = vmatpush1.msra.mxu0 0.0
        %864 = vmatprep.subr.mxu0 0.0
        %865 = vmatpush1.msra.mxu0 0.0
        %866 = vmatprep.subr.mxu0 0.0
        %867 = vmatpush1.msra.mxu0 0.0
        %868 = vmatprep.subr.mxu0 0.0
        %869 = vmatpush1.msra.mxu0 0.0
        %870 = vmatprep.mubr.f32.mxu0 0.0
        %871 = vmatmul.mubr.f32.gmra.mrb[0].mxu0 %v805
        %v872 = vpop.f32.mrb[0].mxu0
        %v873 = vadd.f32 %v348, %v872
        %v874 = vpop.f32.mrb[0].mxu0
        %875 = vdwg.mxu0
        %876 = vmatprep.subr.mxu0 0.0
        %877 = vmatpush1.msra.mxu0 %v327
        %878 = vmatprep.subr.mxu0 0.0
        %879 = vmatpush1.msra.mxu0 %v328
        %880 = vmatprep.subr.mxu0 0.0
        %881 = vmatpush1.msra.mxu0 %v329
        %882 = vmatprep.subr.mxu0 0.0
        %883 = vmatpush1.msra.mxu0 %v330
        %884 = vmatprep.subr.mxu0 0.0
        %885 = vmatpush1.msra.mxu0 %v331
        %886 = vmatprep.subr.mxu0 0.0
        %887 = vmatpush1.msra.mxu0 %v332
        %888 = vmatprep.subr.mxu0 0.0
        %889 = vmatpush1.msra.mxu0 %v333
        %890 = vmatprep.subr.mxu0 0.0
        %891 = vmatpush1.msra.mxu0 %v334
        %892 = vmatprep.subr.mxu0 0.0
        %893 = vmatpush1.msra.mxu0 %v335
        %894 = vmatprep.subr.mxu0 0.0
        %895 = vmatpush1.msra.mxu0 %v336
        %896 = vmatprep.subr.mxu0 0.0
        %897 = vmatpush1.msra.mxu0 %v337
        %898 = vmatprep.subr.mxu0 0.0
        %899 = vmatpush1.msra.mxu0 %v338
        %900 = vmatprep.subr.mxu0 0.0
        %901 = vmatpush1.msra.mxu0 %v339
        %902 = vmatprep.subr.mxu0 0.0
        %903 = vmatpush1.msra.mxu0 %v340
        %904 = vmatprep.subr.mxu0 0.0
        %905 = vmatpush1.msra.mxu0 %v341
        %906 = vmatprep.subr.mxu0 0.0
        %907 = vmatpush1.msra.mxu0 %v342
        %908 = vmatprep.subr.mxu0 0.0
        %909 = vmatpush1.msra.mxu0 0.0
        %910 = vmatprep.subr.mxu0 0.0
        %911 = vmatpush1.msra.mxu0 0.0
        %912 = vmatprep.subr.mxu0 0.0
        %913 = vmatpush1.msra.mxu0 0.0
        %914 = vmatprep.subr.mxu0 0.0
        %915 = vmatpush1.msra.mxu0 0.0
        %916 = vmatprep.subr.mxu0 0.0
        %917 = vmatpush1.msra.mxu0 0.0
        %918 = vmatprep.subr.mxu0 0.0
        %919 = vmatpush1.msra.mxu0 0.0
        %920 = vmatprep.subr.mxu0 0.0
        %921 = vmatpush1.msra.mxu0 0.0
        %922 = vmatprep.subr.mxu0 0.0
        %923 = vmatpush1.msra.mxu0 0.0
        %924 = vmatprep.subr.mxu0 0.0
        %925 = vmatpush1.msra.mxu0 0.0
        %926 = vmatprep.subr.mxu0 0.0
        %927 = vmatpush1.msra.mxu0 0.0
        %928 = vmatprep.subr.mxu0 0.0
        %929 = vmatpush1.msra.mxu0 0.0
        %930 = vmatprep.subr.mxu0 0.0
        %931 = vmatpush1.msra.mxu0 0.0
        %932 = vmatprep.subr.mxu0 0.0
        %933 = vmatpush1.msra.mxu0 0.0
        %934 = vmatprep.subr.mxu0 0.0
        %935 = vmatpush1.msra.mxu0 0.0
        %936 = vmatprep.subr.mxu0 0.0
        %937 = vmatpush1.msra.mxu0 0.0
        %938 = vmatprep.subr.mxu0 0.0
        %939 = vmatpush1.msra.mxu0 0.0
        %940 = vmatprep.mubr.f32.mxu0 0.0
        %941 = vmatmul.mubr.f32.gmra.mrb[0].mxu0 %v873
        %v942 = vpop.f32.mrb[0].mxu0
        %v943 = vadd.f32 %v355, %v942
        %v944 = vpop.f32.mrb[0].mxu0
        %945 = vdwg.mxu0
        %v946 = vmul.f32 %v805, %v943
        %947 = vadd.xlane.f32.xlu0 %v946
        %v948 = vpop.xlane.xlu0 %947
        %v949 = vsub.f32 %v943, %v948
        %v950 = vmul.f32 %v805, %v949
        %v951 = vrcp.pop 6.0
        %s952 = vtos %v951
        %s953 = smul.f32 %s360, %s952
        %v954 = vadd.f32 %v655, %v802
        %v955 = vmul.f32 %v954, 2.0
        %v956 = vadd.f32 %v506, %v955
        %v957 = vadd.f32 %v956, %v950
        %v958 = vstv %s953
        %v959 = vmul.f32 %v958, %v957
        %v960 = vadd.f32 %v361, %v959
        %961 = vmatprep.subr.mxu0 0.0
        %962 = vmatpush1.msra.mxu0 %v311
        %963 = vmatprep.subr.mxu0 0.0
        %964 = vmatpush1.msra.mxu0 %v312
        %965 = vmatprep.subr.mxu0 0.0
        %966 = vmatpush1.msra.mxu0 %v313
        %967 = vmatprep.subr.mxu0 0.0
        %968 = vmatpush1.msra.mxu0 %v314
        %969 = vmatprep.subr.mxu0 0.0
        %970 = vmatpush1.msra.mxu0 %v315
        %971 = vmatprep.subr.mxu0 0.0
        %972 = vmatpush1.msra.mxu0 %v316
        %973 = vmatprep.subr.mxu0 0.0
        %974 = vmatpush1.msra.mxu0 %v317
        %975 = vmatprep.subr.mxu0 0.0
        %976 = vmatpush1.msra.mxu0 %v318
        %977 = vmatprep.subr.mxu0 0.0
        %978 = vmatpush1.msra.mxu0 %v319
        %979 = vmatprep.subr.mxu0 0.0
        %980 = vmatpush1.msra.mxu0 %v320
        %981 = vmatprep.subr.mxu0 0.0
        %982 = vmatpush1.msra.mxu0 %v321
        %983 = vmatprep.subr.mxu0 0.0
        %984 = vmatpush1.msra.mxu0 %v322
        %985 = vmatprep.subr.mxu0 0.0
        %986 = vmatpush1.msra.mxu0 %v323
        %987 = vmatprep.subr.mxu0 0.0
        %988 = vmatpush1.msra.mxu0 %v324
        %989 = vmatprep.subr.mxu0 0.0
        %990 = vmatpush1.msra.mxu0 %v325
        %991 = vmatprep.subr.mxu0 0.0
        %992 = vmatpush1.msra.mxu0 %v326
        %993 = vmatprep.subr.mxu0 0.0
        %994 = vmatpush1.msra.mxu0 0.0
        %995 = vmatprep.subr.mxu0 0.0
        %996 = vmatpush1.msra.mxu0 0.0
        %997 = vmatprep.subr.mxu0 0.0
        %998 = vmatpush1.msra.mxu0 0.0
        %999 = vmatprep.subr.mxu0 0.0
        %1000 = vmatpush1.msra.mxu0 0.0
        %1001 = vmatprep.subr.mxu0 0.0
        %1002 = vmatpush1.msra.mxu0 0.0
        %1003 = vmatprep.subr.mxu0 0.0
        %1004 = vmatpush1.msra.mxu0 0.0
        %1005 = vmatprep.subr.mxu0 0.0
        %1006 = vmatpush1.msra.mxu0 0.0
        %1007 = vmatprep.subr.mxu0 0.0
        %1008 = vmatpush1.msra.mxu0 0.0
        %1009 = vmatprep.subr.mxu0 0.0
        %1010 = vmatpush1.msra.mxu0 0.0
        %1011 = vmatprep.subr.mxu0 0.0
        %1012 = vmatpush1.msra.mxu0 0.0
        %1013 = vmatprep.subr.mxu0 0.0
        %1014 = vmatpush1.msra.mxu0 0.0
        %1015 = vmatprep.subr.mxu0 0.0
        %1016 = vmatpush1.msra.mxu0 0.0
        %1017 = vmatprep.subr.mxu0 0.0
        %1018 = vmatpush1.msra.mxu0 0.0
        %1019 = vmatprep.subr.mxu0 0.0
        %1020 = vmatpush1.msra.mxu0 0.0
        %1021 = vmatprep.subr.mxu0 0.0
        %1022 = vmatpush1.msra.mxu0 0.0
        %1023 = vmatprep.subr.mxu0 0.0
        %1024 = vmatpush1.msra.mxu0 0.0
        %1025 = vmatprep.mubr.f32.mxu0 0.0
        %1026 = vmatmul.mubr.f32.gmra.mrb[0].mxu0 %v960
        %v1027 = vpop.f32.mrb[0].mxu0
        %v1028 = vadd.f32 %v348, %v1027
        %v1029 = vpop.f32.mrb[0].mxu0
        %1030 = vdwg.mxu0
        %1031 = vmatprep.subr.mxu0 0.0
        %1032 = vmatpush1.msra.mxu0 %v327
        %1033 = vmatprep.subr.mxu0 0.0
        %1034 = vmatpush1.msra.mxu0 %v328
        %1035 = vmatprep.subr.mxu0 0.0
        %1036 = vmatpush1.msra.mxu0 %v329
        %1037 = vmatprep.subr.mxu0 0.0
        %1038 = vmatpush1.msra.mxu0 %v330
        %1039 = vmatprep.subr.mxu0 0.0
        %1040 = vmatpush1.msra.mxu0 %v331
        %1041 = vmatprep.subr.mxu0 0.0
        %1042 = vmatpush1.msra.mxu0 %v332
        %1043 = vmatprep.subr.mxu0 0.0
        %1044 = vmatpush1.msra.mxu0 %v333
        %1045 = vmatprep.subr.mxu0 0.0
        %1046 = vmatpush1.msra.mxu0 %v334
        %1047 = vmatprep.subr.mxu0 0.0
        %1048 = vmatpush1.msra.mxu0 %v335
        %1049 = vmatprep.subr.mxu0 0.0
        %1050 = vmatpush1.msra.mxu0 %v336
        %1051 = vmatprep.subr.mxu0 0.0
        %1052 = vmatpush1.msra.mxu0 %v337
        %1053 = vmatprep.subr.mxu0 0.0
        %1054 = vmatpush1.msra.mxu0 %v338
        %1055 = vmatprep.subr.mxu0 0.0
        %1056 = vmatpush1.msra.mxu0 %v339
        %1057 = vmatprep.subr.mxu0 0.0
        %1058 = vmatpush1.msra.mxu0 %v340
        %1059 = vmatprep.subr.mxu0 0.0
        %1060 = vmatpush1.msra.mxu0 %v341
        %1061 = vmatprep.subr.mxu0 0.0
        %1062 = vmatpush1.msra.mxu0 %v342
        %1063 = vmatprep.subr.mxu0 0.0
        %1064 = vmatpush1.msra.mxu0 0.0
        %1065 = vmatprep.subr.mxu0 0.0
        %1066 = vmatpush1.msra.mxu0 0.0
        %1067 = vmatprep.subr.mxu0 0.0
        %1068 = vmatpush1.msra.mxu0 0.0
        %1069 = vmatprep.subr.mxu0 0.0
        %1070 = vmatpush1.msra.mxu0 0.0
        %1071 = vmatprep.subr.mxu0 0.0
        %1072 = vmatpush1.msra.mxu0 0.0
        %1073 = vmatprep.subr.mxu0 0.0
        %1074 = vmatpush1.msra.mxu0 0.0
        %1075 = vmatprep.subr.mxu0 0.0
        %1076 = vmatpush1.msra.mxu0 0.0
        %1077 = vmatprep.subr.mxu0 0.0
        %1078 = vmatpush1.msra.mxu0 0.0
        %1079 = vmatprep.subr.mxu0 0.0
        %1080 = vmatpush1.msra.mxu0 0.0
        %1081 = vmatprep.subr.mxu0 0.0
        %1082 = vmatpush1.msra.mxu0 0.0
        %1083 = vmatprep.subr.mxu0 0.0
        %1084 = vmatpush1.msra.mxu0 0.0
        %1085 = vmatprep.subr.mxu0 0.0
        %1086 = vmatpush1.msra.mxu0 0.0
        %1087 = vmatprep.subr.mxu0 0.0
        %1088 = vmatpush1.msra.mxu0 0.0
        %1089 = vmatprep.subr.mxu0 0.0
        %1090 = vmatpush1.msra.mxu0 0.0
        %1091 = vmatprep.subr.mxu0 0.0
        %1092 = vmatpush1.msra.mxu0 0.0
        %1093 = vmatprep.subr.mxu0 0.0
        %1094 = vmatpush1.msra.mxu0 0.0
        %1095 = vmatprep.mubr.f32.mxu0 0.0
        %1096 = vmatmul.mubr.f32.gmra.mrb[0].mxu0 %v1028
        %v1097 = vpop.f32.mrb[0].mxu0
        %v1098 = vadd.f32 %v355, %v1097
        %v1099 = vpop.f32.mrb[0].mxu0
        %1100 = vdwg.mxu0
        %v1101 = vmul.f32 %v960, %v1098
        %1102 = vadd.xlane.f32.xlu0 %v1101
        %v1103 = vpop.xlane.xlu0 %1102
        %v1104 = vsub.f32 %v1098, %v1103
        %v1105 = vmul.f32 %v960, %v1104
        %v1106 = vmul.f32 %v508, %v1105
        %v1107 = vadd.f32 %v960, %v1106
        %1108 = vmatprep.subr.mxu0 0.0
        %1109 = vmatpush1.msra.mxu0 %v311
        %1110 = vmatprep.subr.mxu0 0.0
        %1111 = vmatpush1.msra.mxu0 %v312
        %1112 = vmatprep.subr.mxu0 0.0
        %1113 = vmatpush1.msra.mxu0 %v313
        %1114 = vmatprep.subr.mxu0 0.0
        %1115 = vmatpush1.msra.mxu0 %v314
        %1116 = vmatprep.subr.mxu0 0.0
        %1117 = vmatpush1.msra.mxu0 %v315
        %1118 = vmatprep.subr.mxu0 0.0
        %1119 = vmatpush1.msra.mxu0 %v316
        %1120 = vmatprep.subr.mxu0 0.0
        %1121 = vmatpush1.msra.mxu0 %v317
        %1122 = vmatprep.subr.mxu0 0.0
        %1123 = vmatpush1.msra.mxu0 %v318
        %1124 = vmatprep.subr.mxu0 0.0
        %1125 = vmatpush1.msra.mxu0 %v319
        %1126 = vmatprep.subr.mxu0 0.0
        %1127 = vmatpush1.msra.mxu0 %v320
        %1128 = vmatprep.subr.mxu0 0.0
        %1129 = vmatpush1.msra.mxu0 %v321
        %1130 = vmatprep.subr.mxu0 0.0
        %1131 = vmatpush1.msra.mxu0 %v322
        %1132 = vmatprep.subr.mxu0 0.0
        %1133 = vmatpush1.msra.mxu0 %v323
        %1134 = vmatprep.subr.mxu0 0.0
        %1135 = vmatpush1.msra.mxu0 %v324
        %1136 = vmatprep.subr.mxu0 0.0
        %1137 = vmatpush1.msra.mxu0 %v325
        %1138 = vmatprep.subr.mxu0 0.0
        %1139 = vmatpush1.msra.mxu0 %v326
        %1140 = vmatprep.subr.mxu0 0.0
        %1141 = vmatpush1.msra.mxu0 0.0
        %1142 = vmatprep.subr.mxu0 0.0
        %1143 = vmatpush1.msra.mxu0 0.0
        %1144 = vmatprep.subr.mxu0 0.0
        %1145 = vmatpush1.msra.mxu0 0.0
        %1146 = vmatprep.subr.mxu0 0.0
        %1147 = vmatpush1.msra.mxu0 0.0
        %1148 = vmatprep.subr.mxu0 0.0
        %1149 = vmatpush1.msra.mxu0 0.0
        %1150 = vmatprep.subr.mxu0 0.0
        %1151 = vmatpush1.msra.mxu0 0.0
        %1152 = vmatprep.subr.mxu0 0.0
        %1153 = vmatpush1.msra.mxu0 0.0
        %1154 = vmatprep.subr.mxu0 0.0
        %1155 = vmatpush1.msra.mxu0 0.0
        %1156 = vmatprep.subr.mxu0 0.0
        %1157 = vmatpush1.msra.mxu0 0.0
        %1158 = vmatprep.subr.mxu0 0.0
        %1159 = vmatpush1.msra.mxu0 0.0
        %1160 = vmatprep.subr.mxu0 0.0
        %1161 = vmatpush1.msra.mxu0 0.0
        %1162 = vmatprep.subr.mxu0 0.0
        %1163 = vmatpush1.msra.mxu0 0.0
        %1164 = vmatprep.subr.mxu0 0.0
        %1165 = vmatpush1.msra.mxu0 0.0
        %1166 = vmatprep.subr.mxu0 0.0
        %1167 = vmatpush1.msra.mxu0 0.0
        %1168 = vmatprep.subr.mxu0 0.0
        %1169 = vmatpush1.msra.mxu0 0.0
        %1170 = vmatprep.subr.mxu0 0.0
        %1171 = vmatpush1.msra.mxu0 0.0
        %1172 = vmatprep.mubr.f32.mxu0 0.0
        %1173 = vmatmul.mubr.f32.gmra.mrb[0].mxu0 %v1107
        %v1174 = vpop.f32.mrb[0].mxu0
        %v1175 = vadd.f32 %v348, %v1174
        %v1176 = vpop.f32.mrb[0].mxu0
        %1177 = vdwg.mxu0
        %1178 = vmatprep.subr.mxu0 0.0
        %1179 = vmatpush1.msra.mxu0 %v327
        %1180 = vmatprep.subr.mxu0 0.0
        %1181 = vmatpush1.msra.mxu0 %v328
        %1182 = vmatprep.subr.mxu0 0.0
        %1183 = vmatpush1.msra.mxu0 %v329
        %1184 = vmatprep.subr.mxu0 0.0
        %1185 = vmatpush1.msra.mxu0 %v330
        %1186 = vmatprep.subr.mxu0 0.0
        %1187 = vmatpush1.msra.mxu0 %v331
        %1188 = vmatprep.subr.mxu0 0.0
        %1189 = vmatpush1.msra.mxu0 %v332
        %1190 = vmatprep.subr.mxu0 0.0
        %1191 = vmatpush1.msra.mxu0 %v333
        %1192 = vmatprep.subr.mxu0 0.0
        %1193 = vmatpush1.msra.mxu0 %v334
        %1194 = vmatprep.subr.mxu0 0.0
        %1195 = vmatpush1.msra.mxu0 %v335
        %1196 = vmatprep.subr.mxu0 0.0
        %1197 = vmatpush1.msra.mxu0 %v336
        %1198 = vmatprep.subr.mxu0 0.0
        %1199 = vmatpush1.msra.mxu0 %v337
        %1200 = vmatprep.subr.mxu0 0.0
        %1201 = vmatpush1.msra.mxu0 %v338
        %1202 = vmatprep.subr.mxu0 0.0
        %1203 = vmatpush1.msra.mxu0 %v339
        %1204 = vmatprep.subr.mxu0 0.0
        %1205 = vmatpush1.msra.mxu0 %v340
        %1206 = vmatprep.subr.mxu0 0.0
        %1207 = vmatpush1.msra.mxu0 %v341
        %1208 = vmatprep.subr.mxu0 0.0
        %1209 = vmatpush1.msra.mxu0 %v342
        %1210 = vmatprep.subr.mxu0 0.0
        %1211 = vmatpush1.msra.mxu0 0.0
        %1212 = vmatprep.subr.mxu0 0.0
        %1213 = vmatpush1.msra.mxu0 0.0
        %1214 = vmatprep.subr.mxu0 0.0
        %1215 = vmatpush1.msra.mxu0 0.0
        %1216 = vmatprep.subr.mxu0 0.0
        %1217 = vmatpush1.msra.mxu0 0.0
        %1218 = vmatprep.subr.mxu0 0.0
        %1219 = vmatpush1.msra.mxu0 0.0
        %1220 = vmatprep.subr.mxu0 0.0
        %1221 = vmatpush1.msra.mxu0 0.0
        %1222 = vmatprep.subr.mxu0 0.0
        %1223 = vmatpush1.msra.mxu0 0.0
        %1224 = vmatprep.subr.mxu0 0.0
        %1225 = vmatpush1.msra.mxu0 0.0
        %1226 = vmatprep.subr.mxu0 0.0
        %1227 = vmatpush1.msra.mxu0 0.0
        %1228 = vmatprep.subr.mxu0 0.0
        %1229 = vmatpush1.msra.mxu0 0.0
        %1230 = vmatprep.subr.mxu0 0.0
        %1231 = vmatpush1.msra.mxu0 0.0
        %1232 = vmatprep.subr.mxu0 0.0
        %1233 = vmatpush1.msra.mxu0 0.0
        %1234 = vmatprep.subr.mxu0 0.0
        %1235 = vmatpush1.msra.mxu0 0.0
        %1236 = vmatprep.subr.mxu0 0.0
        %1237 = vmatpush1.msra.mxu0 0.0
        %1238 = vmatprep.subr.mxu0 0.0
        %1239 = vmatpush1.msra.mxu0 0.0
        %1240 = vmatprep.subr.mxu0 0.0
        %1241 = vmatpush1.msra.mxu0 0.0
        %1242 = vmatprep.mubr.f32.mxu0 0.0
        %1243 = vmatmul.mubr.f32.gmra.mrb[0].mxu0 %v1175
        %v1244 = vpop.f32.mrb[0].mxu0
        %v1245 = vadd.f32 %v355, %v1244
        %v1246 = vpop.f32.mrb[0].mxu0
        %1247 = vdwg.mxu0
        %v1248 = vmul.f32 %v1107, %v1245
        %1249 = vadd.xlane.f32.xlu0 %v1248
        %v1250 = vpop.xlane.xlu0 %1249
        %v1251 = vsub.f32 %v1245, %v1250
        %v1252 = vmul.f32 %v1107, %v1251
        %v1253 = vmul.f32 %v508, %v1252
        %v1254 = vadd.f32 %v960, %v1253
        %1255 = vmatprep.subr.mxu0 0.0
        %1256 = vmatpush1.msra.mxu0 %v311
        %1257 = vmatprep.subr.mxu0 0.0
        %1258 = vmatpush1.msra.mxu0 %v312
        %1259 = vmatprep.subr.mxu0 0.0
        %1260 = vmatpush1.msra.mxu0 %v313
        %1261 = vmatprep.subr.mxu0 0.0
        %1262 = vmatpush1.msra.mxu0 %v314
        %1263 = vmatprep.subr.mxu0 0.0
        %1264 = vmatpush1.msra.mxu0 %v315
        %1265 = vmatprep.subr.mxu0 0.0
        %1266 = vmatpush1.msra.mxu0 %v316
        %1267 = vmatprep.subr.mxu0 0.0
        %1268 = vmatpush1.msra.mxu0 %v317
        %1269 = vmatprep.subr.mxu0 0.0
        %1270 = vmatpush1.msra.mxu0 %v318
        %1271 = vmatprep.subr.mxu0 0.0
        %1272 = vmatpush1.msra.mxu0 %v319
        %1273 = vmatprep.subr.mxu0 0.0
        %1274 = vmatpush1.msra.mxu0 %v320
        %1275 = vmatprep.subr.mxu0 0.0
        %1276 = vmatpush1.msra.mxu0 %v321
        %1277 = vmatprep.subr.mxu0 0.0
        %1278 = vmatpush1.msra.mxu0 %v322
        %1279 = vmatprep.subr.mxu0 0.0
        %1280 = vmatpush1.msra.mxu0 %v323
        %1281 = vmatprep.subr.mxu0 0.0
        %1282 = vmatpush1.msra.mxu0 %v324
        %1283 = vmatprep.subr.mxu0 0.0
        %1284 = vmatpush1.msra.mxu0 %v325
        %1285 = vmatprep.subr.mxu0 0.0
        %1286 = vmatpush1.msra.mxu0 %v326
        %1287 = vmatprep.subr.mxu0 0.0
        %1288 = vmatpush1.msra.mxu0 0.0
        %1289 = vmatprep.subr.mxu0 0.0
        %1290 = vmatpush1.msra.mxu0 0.0
        %1291 = vmatprep.subr.mxu0 0.0
        %1292 = vmatpush1.msra.mxu0 0.0
        %1293 = vmatprep.subr.mxu0 0.0
        %1294 = vmatpush1.msra.mxu0 0.0
        %1295 = vmatprep.subr.mxu0 0.0
        %1296 = vmatpush1.msra.mxu0 0.0
        %1297 = vmatprep.subr.mxu0 0.0
        %1298 = vmatpush1.msra.mxu0 0.0
        %1299 = vmatprep.subr.mxu0 0.0
        %1300 = vmatpush1.msra.mxu0 0.0
        %1301 = vmatprep.subr.mxu0 0.0
        %1302 = vmatpush1.msra.mxu0 0.0
        %1303 = vmatprep.subr.mxu0 0.0
        %1304 = vmatpush1.msra.mxu0 0.0
        %1305 = vmatprep.subr.mxu0 0.0
        %1306 = vmatpush1.msra.mxu0 0.0
        %1307 = vmatprep.subr.mxu0 0.0
        %1308 = vmatpush1.msra.mxu0 0.0
        %1309 = vmatprep.subr.mxu0 0.0
        %1310 = vmatpush1.msra.mxu0 0.0
        %1311 = vmatprep.subr.mxu0 0.0
        %1312 = vmatpush1.msra.mxu0 0.0
        %1313 = vmatprep.subr.mxu0 0.0
        %1314 = vmatpush1.msra.mxu0 0.0
        %1315 = vmatprep.subr.mxu0 0.0
        %1316 = vmatpush1.msra.mxu0 0.0
        %1317 = vmatprep.subr.mxu0 0.0
        %1318 = vmatpush1.msra.mxu0 0.0
        %1319 = vmatprep.mubr.f32.mxu0 0.0
        %1320 = vmatmul.mubr.f32.gmra.mrb[0].mxu0 %v1254
        %v1321 = vpop.f32.mrb[0].mxu0
        %v1322 = vadd.f32 %v348, %v1321
        %v1323 = vpop.f32.mrb[0].mxu0
        %1324 = vdwg.mxu0
        %1325 = vmatprep.subr.mxu0 0.0
        %1326 = vmatpush1.msra.mxu0 %v327
        %1327 = vmatprep.subr.mxu0 0.0
        %1328 = vmatpush1.msra.mxu0 %v328
        %1329 = vmatprep.subr.mxu0 0.0
        %1330 = vmatpush1.msra.mxu0 %v329
        %1331 = vmatprep.subr.mxu0 0.0
        %1332 = vmatpush1.msra.mxu0 %v330
        %1333 = vmatprep.subr.mxu0 0.0
        %1334 = vmatpush1.msra.mxu0 %v331
        %1335 = vmatprep.subr.mxu0 0.0
        %1336 = vmatpush1.msra.mxu0 %v332
        %1337 = vmatprep.subr.mxu0 0.0
        %1338 = vmatpush1.msra.mxu0 %v333
        %1339 = vmatprep.subr.mxu0 0.0
        %1340 = vmatpush1.msra.mxu0 %v334
        %1341 = vmatprep.subr.mxu0 0.0
        %1342 = vmatpush1.msra.mxu0 %v335
        %1343 = vmatprep.subr.mxu0 0.0
        %1344 = vmatpush1.msra.mxu0 %v336
        %1345 = vmatprep.subr.mxu0 0.0
        %1346 = vmatpush1.msra.mxu0 %v337
        %1347 = vmatprep.subr.mxu0 0.0
        %1348 = vmatpush1.msra.mxu0 %v338
        %1349 = vmatprep.subr.mxu0 0.0
        %1350 = vmatpush1.msra.mxu0 %v339
        %1351 = vmatprep.subr.mxu0 0.0
        %1352 = vmatpush1.msra.mxu0 %v340
        %1353 = vmatprep.subr.mxu0 0.0
        %1354 = vmatpush1.msra.mxu0 %v341
        %1355 = vmatprep.subr.mxu0 0.0
        %1356 = vmatpush1.msra.mxu0 %v342
        %1357 = vmatprep.subr.mxu0 0.0
        %1358 = vmatpush1.msra.mxu0 0.0
        %1359 = vmatprep.subr.mxu0 0.0
        %1360 = vmatpush1.msra.mxu0 0.0
        %1361 = vmatprep.subr.mxu0 0.0
        %1362 = vmatpush1.msra.mxu0 0.0
        %1363 = vmatprep.subr.mxu0 0.0
        %1364 = vmatpush1.msra.mxu0 0.0
        %1365 = vmatprep.subr.mxu0 0.0
        %1366 = vmatpush1.msra.mxu0 0.0
        %1367 = vmatprep.subr.mxu0 0.0
        %1368 = vmatpush1.msra.mxu0 0.0
        %1369 = vmatprep.subr.mxu0 0.0
        %1370 = vmatpush1.msra.mxu0 0.0
        %1371 = vmatprep.subr.mxu0 0.0
        %1372 = vmatpush1.msra.mxu0 0.0
        %1373 = vmatprep.subr.mxu0 0.0
        %1374 = vmatpush1.msra.mxu0 0.0
        %1375 = vmatprep.subr.mxu0 0.0
        %1376 = vmatpush1.msra.mxu0 0.0
        %1377 = vmatprep.subr.mxu0 0.0
        %1378 = vmatpush1.msra.mxu0 0.0
        %1379 = vmatprep.subr.mxu0 0.0
        %1380 = vmatpush1.msra.mxu0 0.0
        %1381 = vmatprep.subr.mxu0 0.0
        %1382 = vmatpush1.msra.mxu0 0.0
        %1383 = vmatprep.subr.mxu0 0.0
        %1384 = vmatpush1.msra.mxu0 0.0
        %1385 = vmatprep.subr.mxu0 0.0
        %1386 = vmatpush1.msra.mxu0 0.0
        %1387 = vmatprep.subr.mxu0 0.0
        %1388 = vmatpush1.msra.mxu0 0.0
        %1389 = vmatprep.mubr.f32.mxu0 0.0
        %1390 = vmatmul.mubr.f32.gmra.mrb[0].mxu0 %v1322
        %v1391 = vpop.f32.mrb[0].mxu0
        %v1392 = vadd.f32 %v355, %v1391
        %v1393 = vpop.f32.mrb[0].mxu0
        %1394 = vdwg.mxu0
        %v1395 = vmul.f32 %v1254, %v1392
        %1396 = vadd.xlane.f32.xlu0 %v1395
        %v1397 = vpop.xlane.xlu0 %1396
        %v1398 = vsub.f32 %v1392, %v1397
        %v1399 = vmul.f32 %v1254, %v1398
        %v1400 = vmul.f32 %v803, %v1399
        %v1401 = vadd.f32 %v960, %v1400
        %1402 = vmatprep.subr.mxu0 0.0
        %1403 = vmatpush1.msra.mxu0 %v311
        %1404 = vmatprep.subr.mxu0 0.0
        %1405 = vmatpush1.msra.mxu0 %v312
        %1406 = vmatprep.subr.mxu0 0.0
        %1407 = vmatpush1.msra.mxu0 %v313
        %1408 = vmatprep.subr.mxu0 0.0
        %1409 = vmatpush1.msra.mxu0 %v314
        %1410 = vmatprep.subr.mxu0 0.0
        %1411 = vmatpush1.msra.mxu0 %v315
        %1412 = vmatprep.subr.mxu0 0.0
        %1413 = vmatpush1.msra.mxu0 %v316
        %1414 = vmatprep.subr.mxu0 0.0
        %1415 = vmatpush1.msra.mxu0 %v317
        %1416 = vmatprep.subr.mxu0 0.0
        %1417 = vmatpush1.msra.mxu0 %v318
        %1418 = vmatprep.subr.mxu0 0.0
        %1419 = vmatpush1.msra.mxu0 %v319
        %1420 = vmatprep.subr.mxu0 0.0
        %1421 = vmatpush1.msra.mxu0 %v320
        %1422 = vmatprep.subr.mxu0 0.0
        %1423 = vmatpush1.msra.mxu0 %v321
        %1424 = vmatprep.subr.mxu0 0.0
        %1425 = vmatpush1.msra.mxu0 %v322
        %1426 = vmatprep.subr.mxu0 0.0
        %1427 = vmatpush1.msra.mxu0 %v323
        %1428 = vmatprep.subr.mxu0 0.0
        %1429 = vmatpush1.msra.mxu0 %v324
        %1430 = vmatprep.subr.mxu0 0.0
        %1431 = vmatpush1.msra.mxu0 %v325
        %1432 = vmatprep.subr.mxu0 0.0
        %1433 = vmatpush1.msra.mxu0 %v326
        %1434 = vmatprep.subr.mxu0 0.0
        %1435 = vmatpush1.msra.mxu0 0.0
        %1436 = vmatprep.subr.mxu0 0.0
        %1437 = vmatpush1.msra.mxu0 0.0
        %1438 = vmatprep.subr.mxu0 0.0
        %1439 = vmatpush1.msra.mxu0 0.0
        %1440 = vmatprep.subr.mxu0 0.0
        %1441 = vmatpush1.msra.mxu0 0.0
        %1442 = vmatprep.subr.mxu0 0.0
        %1443 = vmatpush1.msra.mxu0 0.0
        %1444 = vmatprep.subr.mxu0 0.0
        %1445 = vmatpush1.msra.mxu0 0.0
        %1446 = vmatprep.subr.mxu0 0.0
        %1447 = vmatpush1.msra.mxu0 0.0
        %1448 = vmatprep.subr.mxu0 0.0
        %1449 = vmatpush1.msra.mxu0 0.0
        %1450 = vmatprep.subr.mxu0 0.0
        %1451 = vmatpush1.msra.mxu0 0.0
        %1452 = vmatprep.subr.mxu0 0.0
        %1453 = vmatpush1.msra.mxu0 0.0
        %1454 = vmatprep.subr.mxu0 0.0
        %1455 = vmatpush1.msra.mxu0 0.0
        %1456 = vmatprep.subr.mxu0 0.0
        %1457 = vmatpush1.msra.mxu0 0.0
        %1458 = vmatprep.subr.mxu0 0.0
        %1459 = vmatpush1.msra.mxu0 0.0
        %1460 = vmatprep.subr.mxu0 0.0
        %1461 = vmatpush1.msra.mxu0 0.0
        %1462 = vmatprep.subr.mxu0 0.0
        %1463 = vmatpush1.msra.mxu0 0.0
        %1464 = vmatprep.subr.mxu0 0.0
        %1465 = vmatpush1.msra.mxu0 0.0
        %1466 = vmatprep.mubr.f32.mxu0 0.0
        %1467 = vmatmul.mubr.f32.gmra.mrb[0].mxu0 %v1401
        %v1468 = vpop.f32.mrb[0].mxu0
        %v1469 = vadd.f32 %v348, %v1468
        %v1470 = vpop.f32.mrb[0].mxu0
        %1471 = vdwg.mxu0
        %1472 = vmatprep.subr.mxu0 0.0
        %1473 = vmatpush1.msra.mxu0 %v327
        %1474 = vmatprep.subr.mxu0 0.0
        %1475 = vmatpush1.msra.mxu0 %v328
        %1476 = vmatprep.subr.mxu0 0.0
        %1477 = vmatpush1.msra.mxu0 %v329
        %1478 = vmatprep.subr.mxu0 0.0
        %1479 = vmatpush1.msra.mxu0 %v330
        %1480 = vmatprep.subr.mxu0 0.0
        %1481 = vmatpush1.msra.mxu0 %v331
        %1482 = vmatprep.subr.mxu0 0.0
        %1483 = vmatpush1.msra.mxu0 %v332
        %1484 = vmatprep.subr.mxu0 0.0
        %1485 = vmatpush1.msra.mxu0 %v333
        %1486 = vmatprep.subr.mxu0 0.0
        %1487 = vmatpush1.msra.mxu0 %v334
        %1488 = vmatprep.subr.mxu0 0.0
        %1489 = vmatpush1.msra.mxu0 %v335
        %1490 = vmatprep.subr.mxu0 0.0
        %1491 = vmatpush1.msra.mxu0 %v336
        %1492 = vmatprep.subr.mxu0 0.0
        %1493 = vmatpush1.msra.mxu0 %v337
        %1494 = vmatprep.subr.mxu0 0.0
        %1495 = vmatpush1.msra.mxu0 %v338
        %1496 = vmatprep.subr.mxu0 0.0
        %1497 = vmatpush1.msra.mxu0 %v339
        %1498 = vmatprep.subr.mxu0 0.0
        %1499 = vmatpush1.msra.mxu0 %v340
        %1500 = vmatprep.subr.mxu0 0.0
        %1501 = vmatpush1.msra.mxu0 %v341
        %1502 = vmatprep.subr.mxu0 0.0
        %1503 = vmatpush1.msra.mxu0 %v342
        %1504 = vmatprep.subr.mxu0 0.0
        %1505 = vmatpush1.msra.mxu0 0.0
        %1506 = vmatprep.subr.mxu0 0.0
        %1507 = vmatpush1.msra.mxu0 0.0
        %1508 = vmatprep.subr.mxu0 0.0
        %1509 = vmatpush1.msra.mxu0 0.0
        %1510 = vmatprep.subr.mxu0 0.0
        %1511 = vmatpush1.msra.mxu0 0.0
        %1512 = vmatprep.subr.mxu0 0.0
        %1513 = vmatpush1.msra.mxu0 0.0
        %1514 = vmatprep.subr.mxu0 0.0
        %1515 = vmatpush1.msra.mxu0 0.0
        %1516 = vmatprep.subr.mxu0 0.0
        %1517 = vmatpush1.msra.mxu0 0.0
        %1518 = vmatprep.subr.mxu0 0.0
        %1519 = vmatpush1.msra.mxu0 0.0
        %1520 = vmatprep.subr.mxu0 0.0
        %1521 = vmatpush1.msra.mxu0 0.0
        %1522 = vmatprep.subr.mxu0 0.0
        %1523 = vmatpush1.msra.mxu0 0.0
        %1524 = vmatprep.subr.mxu0 0.0
        %1525 = vmatpush1.msra.mxu0 0.0
        %1526 = vmatprep.subr.mxu0 0.0
        %1527 = vmatpush1.msra.mxu0 0.0
        %1528 = vmatprep.subr.mxu0 0.0
        %1529 = vmatpush1.msra.mxu0 0.0
        %1530 = vmatprep.subr.mxu0 0.0
        %1531 = vmatpush1.msra.mxu0 0.0
        %1532 = vmatprep.subr.mxu0 0.0
        %1533 = vmatpush1.msra.mxu0 0.0
        %1534 = vmatprep.subr.mxu0 0.0
        %1535 = vmatpush1.msra.mxu0 0.0
        %1536 = vmatprep.mubr.f32.mxu0 0.0
        %1537 = vmatmul.mubr.f32.gmra.mrb[0].mxu0 %v1469
        %v1538 = vpop.f32.mrb[0].mxu0
        %v1539 = vadd.f32 %v355, %v1538
        %v1540 = vpop.f32.mrb[0].mxu0
        %1541 = vdwg.mxu0
        %v1542 = vmul.f32 %v1401, %v1539
        %1543 = vadd.xlane.f32.xlu0 %v1542
        %v1544 = vpop.xlane.xlu0 %1543
        %v1545 = vsub.f32 %v1539, %v1544
        %v1546 = vmul.f32 %v1401, %v1545
        %v1547 = vadd.f32 %v1252, %v1399
        %v1548 = vmul.f32 %v1547, 2.0
        %v1549 = vadd.f32 %v1105, %v1548
        %v1550 = vadd.f32 %v1549, %v1546
        %v1551 = vmul.f32 %v958, %v1550
        %v1552 = vadd.f32 %v960, %v1551
        %1553 = vmatprep.subr.mxu0 0.0
        %1554 = vmatpush1.msra.mxu0 %v311
        %1555 = vmatprep.subr.mxu0 0.0
        %1556 = vmatpush1.msra.mxu0 %v312
        %1557 = vmatprep.subr.mxu0 0.0
        %1558 = vmatpush1.msra.mxu0 %v313
        %1559 = vmatprep.subr.mxu0 0.0
        %1560 = vmatpush1.msra.mxu0 %v314
        %1561 = vmatprep.subr.mxu0 0.0
        %1562 = vmatpush1.msra.mxu0 %v315
        %1563 = vmatprep.subr.mxu0 0.0
        %1564 = vmatpush1.msra.mxu0 %v316
        %1565 = vmatprep.subr.mxu0 0.0
        %1566 = vmatpush1.msra.mxu0 %v317
        %1567 = vmatprep.subr.mxu0 0.0
        %1568 = vmatpush1.msra.mxu0 %v318
        %1569 = vmatprep.subr.mxu0 0.0
        %1570 = vmatpush1.msra.mxu0 %v319
        %1571 = vmatprep.subr.mxu0 0.0
        %1572 = vmatpush1.msra.mxu0 %v320
        %1573 = vmatprep.subr.mxu0 0.0
        %1574 = vmatpush1.msra.mxu0 %v321
        %1575 = vmatprep.subr.mxu0 0.0
        %1576 = vmatpush1.msra.mxu0 %v322
        %1577 = vmatprep.subr.mxu0 0.0
        %1578 = vmatpush1.msra.mxu0 %v323
        %1579 = vmatprep.subr.mxu0 0.0
        %1580 = vmatpush1.msra.mxu0 %v324
        %1581 = vmatprep.subr.mxu0 0.0
        %1582 = vmatpush1.msra.mxu0 %v325
        %1583 = vmatprep.subr.mxu0 0.0
        %1584 = vmatpush1.msra.mxu0 %v326
        %1585 = vmatprep.subr.mxu0 0.0
        %1586 = vmatpush1.msra.mxu0 0.0
        %1587 = vmatprep.subr.mxu0 0.0
        %1588 = vmatpush1.msra.mxu0 0.0
        %1589 = vmatprep.subr.mxu0 0.0
        %1590 = vmatpush1.msra.mxu0 0.0
        %1591 = vmatprep.subr.mxu0 0.0
        %1592 = vmatpush1.msra.mxu0 0.0
        %1593 = vmatprep.subr.mxu0 0.0
        %1594 = vmatpush1.msra.mxu0 0.0
        %1595 = vmatprep.subr.mxu0 0.0
        %1596 = vmatpush1.msra.mxu0 0.0
        %1597 = vmatprep.subr.mxu0 0.0
        %1598 = vmatpush1.msra.mxu0 0.0
        %1599 = vmatprep.subr.mxu0 0.0
        %1600 = vmatpush1.msra.mxu0 0.0
        %1601 = vmatprep.subr.mxu0 0.0
        %1602 = vmatpush1.msra.mxu0 0.0
        %1603 = vmatprep.subr.mxu0 0.0
        %1604 = vmatpush1.msra.mxu0 0.0
        %1605 = vmatprep.subr.mxu0 0.0
        %1606 = vmatpush1.msra.mxu0 0.0
        %1607 = vmatprep.subr.mxu0 0.0
        %1608 = vmatpush1.msra.mxu0 0.0
        %1609 = vmatprep.subr.mxu0 0.0
        %1610 = vmatpush1.msra.mxu0 0.0
        %1611 = vmatprep.subr.mxu0 0.0
        %1612 = vmatpush1.msra.mxu0 0.0
        %1613 = vmatprep.subr.mxu0 0.0
        %1614 = vmatpush1.msra.mxu0 0.0
        %1615 = vmatprep.subr.mxu0 0.0
        %1616 = vmatpush1.msra.mxu0 0.0
        %1617 = vmatprep.mubr.f32.mxu0 0.0
        %1618 = vmatmul.mubr.f32.gmra.mrb[0].mxu0 %v1552
        %v1619 = vpop.f32.mrb[0].mxu0
        %v1620 = vadd.f32 %v348, %v1619
        %v1621 = vpop.f32.mrb[0].mxu0
        %1622 = vdwg.mxu0
        %1623 = vmatprep.subr.mxu0 0.0
        %1624 = vmatpush1.msra.mxu0 %v327
        %1625 = vmatprep.subr.mxu0 0.0
        %1626 = vmatpush1.msra.mxu0 %v328
        %1627 = vmatprep.subr.mxu0 0.0
        %1628 = vmatpush1.msra.mxu0 %v329
        %1629 = vmatprep.subr.mxu0 0.0
        %1630 = vmatpush1.msra.mxu0 %v330
        %1631 = vmatprep.subr.mxu0 0.0
        %1632 = vmatpush1.msra.mxu0 %v331
        %1633 = vmatprep.subr.mxu0 0.0
        %1634 = vmatpush1.msra.mxu0 %v332
        %1635 = vmatprep.subr.mxu0 0.0
        %1636 = vmatpush1.msra.mxu0 %v333
        %1637 = vmatprep.subr.mxu0 0.0
        %1638 = vmatpush1.msra.mxu0 %v334
        %1639 = vmatprep.subr.mxu0 0.0
        %1640 = vmatpush1.msra.mxu0 %v335
        %1641 = vmatprep.subr.mxu0 0.0
        %1642 = vmatpush1.msra.mxu0 %v336
        %1643 = vmatprep.subr.mxu0 0.0
        %1644 = vmatpush1.msra.mxu0 %v337
        %1645 = vmatprep.subr.mxu0 0.0
        %1646 = vmatpush1.msra.mxu0 %v338
        %1647 = vmatprep.subr.mxu0 0.0
        %1648 = vmatpush1.msra.mxu0 %v339
        %1649 = vmatprep.subr.mxu0 0.0
        %1650 = vmatpush1.msra.mxu0 %v340
        %1651 = vmatprep.subr.mxu0 0.0
        %1652 = vmatpush1.msra.mxu0 %v341
        %1653 = vmatprep.subr.mxu0 0.0
        %1654 = vmatpush1.msra.mxu0 %v342
        %1655 = vmatprep.subr.mxu0 0.0
        %1656 = vmatpush1.msra.mxu0 0.0
        %1657 = vmatprep.subr.mxu0 0.0
        %1658 = vmatpush1.msra.mxu0 0.0
        %1659 = vmatprep.subr.mxu0 0.0
        %1660 = vmatpush1.msra.mxu0 0.0
        %1661 = vmatprep.subr.mxu0 0.0
        %1662 = vmatpush1.msra.mxu0 0.0
        %1663 = vmatprep.subr.mxu0 0.0
        %1664 = vmatpush1.msra.mxu0 0.0
        %1665 = vmatprep.subr.mxu0 0.0
        %1666 = vmatpush1.msra.mxu0 0.0
        %1667 = vmatprep.subr.mxu0 0.0
        %1668 = vmatpush1.msra.mxu0 0.0
        %1669 = vmatprep.subr.mxu0 0.0
        %1670 = vmatpush1.msra.mxu0 0.0
        %1671 = vmatprep.subr.mxu0 0.0
        %1672 = vmatpush1.msra.mxu0 0.0
        %1673 = vmatprep.subr.mxu0 0.0
        %1674 = vmatpush1.msra.mxu0 0.0
        %1675 = vmatprep.subr.mxu0 0.0
        %1676 = vmatpush1.msra.mxu0 0.0
        %1677 = vmatprep.subr.mxu0 0.0
        %1678 = vmatpush1.msra.mxu0 0.0
        %1679 = vmatprep.subr.mxu0 0.0
        %1680 = vmatpush1.msra.mxu0 0.0
        %1681 = vmatprep.subr.mxu0 0.0
        %1682 = vmatpush1.msra.mxu0 0.0
        %1683 = vmatprep.subr.mxu0 0.0
        %1684 = vmatpush1.msra.mxu0 0.0
        %1685 = vmatprep.subr.mxu0 0.0
        %1686 = vmatpush1.msra.mxu0 0.0
        %1687 = vmatprep.mubr.f32.mxu0 0.0
        %1688 = vmatmul.mubr.f32.gmra.mrb[0].mxu0 %v1620
        %v1689 = vpop.f32.mrb[0].mxu0
        %v1690 = vadd.f32 %v355, %v1689
        %v1691 = vpop.f32.mrb[0].mxu0
        %1692 = vdwg.mxu0
        %v1693 = vmul.f32 %v1552, %v1690
        %1694 = vadd.xlane.f32.xlu0 %v1693
        %v1695 = vpop.xlane.xlu0 %1694
        %v1696 = vsub.f32 %v1690, %v1695
        %v1697 = vmul.f32 %v1552, %v1696
        %v1698 = vmul.f32 %v508, %v1697
        %v1699 = vadd.f32 %v1552, %v1698
        %1700 = vmatprep.subr.mxu0 0.0
        %1701 = vmatpush1.msra.mxu0 %v311
        %1702 = vmatprep.subr.mxu0 0.0
        %1703 = vmatpush1.msra.mxu0 %v312
        %1704 = vmatprep.subr.mxu0 0.0
        %1705 = vmatpush1.msra.mxu0 %v313
        %1706 = vmatprep.subr.mxu0 0.0
        %1707 = vmatpush1.msra.mxu0 %v314
        %1708 = vmatprep.subr.mxu0 0.0
        %1709 = vmatpush1.msra.mxu0 %v315
        %1710 = vmatprep.subr.mxu0 0.0
        %1711 = vmatpush1.msra.mxu0 %v316
        %1712 = vmatprep.subr.mxu0 0.0
        %1713 = vmatpush1.msra.mxu0 %v317
        %1714 = vmatprep.subr.mxu0 0.0
        %1715 = vmatpush1.msra.mxu0 %v318
        %1716 = vmatprep.subr.mxu0 0.0
        %1717 = vmatpush1.msra.mxu0 %v319
        %1718 = vmatprep.subr.mxu0 0.0
        %1719 = vmatpush1.msra.mxu0 %v320
        %1720 = vmatprep.subr.mxu0 0.0
        %1721 = vmatpush1.msra.mxu0 %v321
        %1722 = vmatprep.subr.mxu0 0.0
        %1723 = vmatpush1.msra.mxu0 %v322
        %1724 = vmatprep.subr.mxu0 0.0
        %1725 = vmatpush1.msra.mxu0 %v323
        %1726 = vmatprep.subr.mxu0 0.0
        %1727 = vmatpush1.msra.mxu0 %v324
        %1728 = vmatprep.subr.mxu0 0.0
        %1729 = vmatpush1.msra.mxu0 %v325
        %1730 = vmatprep.subr.mxu0 0.0
        %1731 = vmatpush1.msra.mxu0 %v326
        %1732 = vmatprep.subr.mxu0 0.0
        %1733 = vmatpush1.msra.mxu0 0.0
        %1734 = vmatprep.subr.mxu0 0.0
        %1735 = vmatpush1.msra.mxu0 0.0
        %1736 = vmatprep.subr.mxu0 0.0
        %1737 = vmatpush1.msra.mxu0 0.0
        %1738 = vmatprep.subr.mxu0 0.0
        %1739 = vmatpush1.msra.mxu0 0.0
        %1740 = vmatprep.subr.mxu0 0.0
        %1741 = vmatpush1.msra.mxu0 0.0
        %1742 = vmatprep.subr.mxu0 0.0
        %1743 = vmatpush1.msra.mxu0 0.0
        %1744 = vmatprep.subr.mxu0 0.0
        %1745 = vmatpush1.msra.mxu0 0.0
        %1746 = vmatprep.subr.mxu0 0.0
        %1747 = vmatpush1.msra.mxu0 0.0
        %1748 = vmatprep.subr.mxu0 0.0
        %1749 = vmatpush1.msra.mxu0 0.0
        %1750 = vmatprep.subr.mxu0 0.0
        %1751 = vmatpush1.msra.mxu0 0.0
        %1752 = vmatprep.subr.mxu0 0.0
        %1753 = vmatpush1.msra.mxu0 0.0
        %1754 = vmatprep.subr.mxu0 0.0
        %1755 = vmatpush1.msra.mxu0 0.0
        %1756 = vmatprep.subr.mxu0 0.0
        %1757 = vmatpush1.msra.mxu0 0.0
        %1758 = vmatprep.subr.mxu0 0.0
        %1759 = vmatpush1.msra.mxu0 0.0
        %1760 = vmatprep.subr.mxu0 0.0
        %1761 = vmatpush1.msra.mxu0 0.0
        %1762 = vmatprep.subr.mxu0 0.0
        %1763 = vmatpush1.msra.mxu0 0.0
        %1764 = vmatprep.mubr.f32.mxu0 0.0
        %1765 = vmatmul.mubr.f32.gmra.mrb[0].mxu0 %v1699
        %v1766 = vpop.f32.mrb[0].mxu0
        %v1767 = vadd.f32 %v348, %v1766
        %v1768 = vpop.f32.mrb[0].mxu0
        %1769 = vdwg.mxu0
        %1770 = vmatprep.subr.mxu0 0.0
        %1771 = vmatpush1.msra.mxu0 %v327
        %1772 = vmatprep.subr.mxu0 0.0
        %1773 = vmatpush1.msra.mxu0 %v328
        %1774 = vmatprep.subr.mxu0 0.0
        %1775 = vmatpush1.msra.mxu0 %v329
        %1776 = vmatprep.subr.mxu0 0.0
        %1777 = vmatpush1.msra.mxu0 %v330
        %1778 = vmatprep.subr.mxu0 0.0
        %1779 = vmatpush1.msra.mxu0 %v331
        %1780 = vmatprep.subr.mxu0 0.0
        %1781 = vmatpush1.msra.mxu0 %v332
        %1782 = vmatprep.subr.mxu0 0.0
        %1783 = vmatpush1.msra.mxu0 %v333
        %1784 = vmatprep.subr.mxu0 0.0
        %1785 = vmatpush1.msra.mxu0 %v334
        %1786 = vmatprep.subr.mxu0 0.0
        %1787 = vmatpush1.msra.mxu0 %v335
        %1788 = vmatprep.subr.mxu0 0.0
        %1789 = vmatpush1.msra.mxu0 %v336
        %1790 = vmatprep.subr.mxu0 0.0
        %1791 = vmatpush1.msra.mxu0 %v337
        %1792 = vmatprep.subr.mxu0 0.0
        %1793 = vmatpush1.msra.mxu0 %v338
        %1794 = vmatprep.subr.mxu0 0.0
        %1795 = vmatpush1.msra.mxu0 %v339
        %1796 = vmatprep.subr.mxu0 0.0
        %1797 = vmatpush1.msra.mxu0 %v340
        %1798 = vmatprep.subr.mxu0 0.0
        %1799 = vmatpush1.msra.mxu0 %v341
        %1800 = vmatprep.subr.mxu0 0.0
        %1801 = vmatpush1.msra.mxu0 %v342
        %1802 = vmatprep.subr.mxu0 0.0
        %1803 = vmatpush1.msra.mxu0 0.0
        %1804 = vmatprep.subr.mxu0 0.0
        %1805 = vmatpush1.msra.mxu0 0.0
        %1806 = vmatprep.subr.mxu0 0.0
        %1807 = vmatpush1.msra.mxu0 0.0
        %1808 = vmatprep.subr.mxu0 0.0
        %1809 = vmatpush1.msra.mxu0 0.0
        %1810 = vmatprep.subr.mxu0 0.0
        %1811 = vmatpush1.msra.mxu0 0.0
        %1812 = vmatprep.subr.mxu0 0.0
        %1813 = vmatpush1.msra.mxu0 0.0
        %1814 = vmatprep.subr.mxu0 0.0
        %1815 = vmatpush1.msra.mxu0 0.0
        %1816 = vmatprep.subr.mxu0 0.0
        %1817 = vmatpush1.msra.mxu0 0.0
        %1818 = vmatprep.subr.mxu0 0.0
        %1819 = vmatpush1.msra.mxu0 0.0
        %1820 = vmatprep.subr.mxu0 0.0
        %1821 = vmatpush1.msra.mxu0 0.0
        %1822 = vmatprep.subr.mxu0 0.0
        %1823 = vmatpush1.msra.mxu0 0.0
        %1824 = vmatprep.subr.mxu0 0.0
        %1825 = vmatpush1.msra.mxu0 0.0
        %1826 = vmatprep.subr.mxu0 0.0
        %1827 = vmatpush1.msra.mxu0 0.0
        %1828 = vmatprep.subr.mxu0 0.0
        %1829 = vmatpush1.msra.mxu0 0.0
        %1830 = vmatprep.subr.mxu0 0.0
        %1831 = vmatpush1.msra.mxu0 0.0
        %1832 = vmatprep.subr.mxu0 0.0
        %1833 = vmatpush1.msra.mxu0 0.0
        %1834 = vmatprep.mubr.f32.mxu0 0.0
        %1835 = vmatmul.mubr.f32.gmra.mrb[0].mxu0 %v1767
        %v1836 = vpop.f32.mrb[0].mxu0
        %v1837 = vadd.f32 %v355, %v1836
        %v1838 = vpop.f32.mrb[0].mxu0
        %1839 = vdwg.mxu0
        %v1840 = vmul.f32 %v1699, %v1837
        %1841 = vadd.xlane.f32.xlu0 %v1840
        %v1842 = vpop.xlane.xlu0 %1841
        %v1843 = vsub.f32 %v1837, %v1842
        %v1844 = vmul.f32 %v1699, %v1843
        %v1845 = vmul.f32 %v508, %v1844
        %v1846 = vadd.f32 %v1552, %v1845
        %1847 = vmatprep.subr.mxu0 0.0
        %1848 = vmatpush1.msra.mxu0 %v311
        %1849 = vmatprep.subr.mxu0 0.0
        %1850 = vmatpush1.msra.mxu0 %v312
        %1851 = vmatprep.subr.mxu0 0.0
        %1852 = vmatpush1.msra.mxu0 %v313
        %1853 = vmatprep.subr.mxu0 0.0
        %1854 = vmatpush1.msra.mxu0 %v314
        %1855 = vmatprep.subr.mxu0 0.0
        %1856 = vmatpush1.msra.mxu0 %v315
        %1857 = vmatprep.subr.mxu0 0.0
        %1858 = vmatpush1.msra.mxu0 %v316
        %1859 = vmatprep.subr.mxu0 0.0
        %1860 = vmatpush1.msra.mxu0 %v317
        %1861 = vmatprep.subr.mxu0 0.0
        %1862 = vmatpush1.msra.mxu0 %v318
        %1863 = vmatprep.subr.mxu0 0.0
        %1864 = vmatpush1.msra.mxu0 %v319
        %1865 = vmatprep.subr.mxu0 0.0
        %1866 = vmatpush1.msra.mxu0 %v320
        %1867 = vmatprep.subr.mxu0 0.0
        %1868 = vmatpush1.msra.mxu0 %v321
        %1869 = vmatprep.subr.mxu0 0.0
        %1870 = vmatpush1.msra.mxu0 %v322
        %1871 = vmatprep.subr.mxu0 0.0
        %1872 = vmatpush1.msra.mxu0 %v323
        %1873 = vmatprep.subr.mxu0 0.0
        %1874 = vmatpush1.msra.mxu0 %v324
        %1875 = vmatprep.subr.mxu0 0.0
        %1876 = vmatpush1.msra.mxu0 %v325
        %1877 = vmatprep.subr.mxu0 0.0
        %1878 = vmatpush1.msra.mxu0 %v326
        %1879 = vmatprep.subr.mxu0 0.0
        %1880 = vmatpush1.msra.mxu0 0.0
        %1881 = vmatprep.subr.mxu0 0.0
        %1882 = vmatpush1.msra.mxu0 0.0
        %1883 = vmatprep.subr.mxu0 0.0
        %1884 = vmatpush1.msra.mxu0 0.0
        %1885 = vmatprep.subr.mxu0 0.0
        %1886 = vmatpush1.msra.mxu0 0.0
        %1887 = vmatprep.subr.mxu0 0.0
        %1888 = vmatpush1.msra.mxu0 0.0
        %1889 = vmatprep.subr.mxu0 0.0
        %1890 = vmatpush1.msra.mxu0 0.0
        %1891 = vmatprep.subr.mxu0 0.0
        %1892 = vmatpush1.msra.mxu0 0.0
        %1893 = vmatprep.subr.mxu0 0.0
        %1894 = vmatpush1.msra.mxu0 0.0
        %1895 = vmatprep.subr.mxu0 0.0
        %1896 = vmatpush1.msra.mxu0 0.0
        %1897 = vmatprep.subr.mxu0 0.0
        %1898 = vmatpush1.msra.mxu0 0.0
        %1899 = vmatprep.subr.mxu0 0.0
        %1900 = vmatpush1.msra.mxu0 0.0
        %1901 = vmatprep.subr.mxu0 0.0
        %1902 = vmatpush1.msra.mxu0 0.0
        %1903 = vmatprep.subr.mxu0 0.0
        %1904 = vmatpush1.msra.mxu0 0.0
        %1905 = vmatprep.subr.mxu0 0.0
        %1906 = vmatpush1.msra.mxu0 0.0
        %1907 = vmatprep.subr.mxu0 0.0
        %1908 = vmatpush1.msra.mxu0 0.0
        %1909 = vmatprep.subr.mxu0 0.0
        %1910 = vmatpush1.msra.mxu0 0.0
        %1911 = vmatprep.mubr.f32.mxu0 0.0
        %1912 = vmatmul.mubr.f32.gmra.mrb[0].mxu0 %v1846
        %v1913 = vpop.f32.mrb[0].mxu0
        %v1914 = vadd.f32 %v348, %v1913
        %v1915 = vpop.f32.mrb[0].mxu0
        %1916 = vdwg.mxu0
        %1917 = vmatprep.subr.mxu0 0.0
        %1918 = vmatpush1.msra.mxu0 %v327
        %1919 = vmatprep.subr.mxu0 0.0
        %1920 = vmatpush1.msra.mxu0 %v328
        %1921 = vmatprep.subr.mxu0 0.0
        %1922 = vmatpush1.msra.mxu0 %v329
        %1923 = vmatprep.subr.mxu0 0.0
        %1924 = vmatpush1.msra.mxu0 %v330
        %1925 = vmatprep.subr.mxu0 0.0
        %1926 = vmatpush1.msra.mxu0 %v331
        %1927 = vmatprep.subr.mxu0 0.0
        %1928 = vmatpush1.msra.mxu0 %v332
        %1929 = vmatprep.subr.mxu0 0.0
        %1930 = vmatpush1.msra.mxu0 %v333
        %1931 = vmatprep.subr.mxu0 0.0
        %1932 = vmatpush1.msra.mxu0 %v334
        %1933 = vmatprep.subr.mxu0 0.0
        %1934 = vmatpush1.msra.mxu0 %v335
        %1935 = vmatprep.subr.mxu0 0.0
        %1936 = vmatpush1.msra.mxu0 %v336
        %1937 = vmatprep.subr.mxu0 0.0
        %1938 = vmatpush1.msra.mxu0 %v337
        %1939 = vmatprep.subr.mxu0 0.0
        %1940 = vmatpush1.msra.mxu0 %v338
        %1941 = vmatprep.subr.mxu0 0.0
        %1942 = vmatpush1.msra.mxu0 %v339
        %1943 = vmatprep.subr.mxu0 0.0
        %1944 = vmatpush1.msra.mxu0 %v340
        %1945 = vmatprep.subr.mxu0 0.0
        %1946 = vmatpush1.msra.mxu0 %v341
        %1947 = vmatprep.subr.mxu0 0.0
        %1948 = vmatpush1.msra.mxu0 %v342
        %1949 = vmatprep.subr.mxu0 0.0
        %1950 = vmatpush1.msra.mxu0 0.0
        %1951 = vmatprep.subr.mxu0 0.0
        %1952 = vmatpush1.msra.mxu0 0.0
        %1953 = vmatprep.subr.mxu0 0.0
        %1954 = vmatpush1.msra.mxu0 0.0
        %1955 = vmatprep.subr.mxu0 0.0
        %1956 = vmatpush1.msra.mxu0 0.0
        %1957 = vmatprep.subr.mxu0 0.0
        %1958 = vmatpush1.msra.mxu0 0.0
        %1959 = vmatprep.subr.mxu0 0.0
        %1960 = vmatpush1.msra.mxu0 0.0
        %1961 = vmatprep.subr.mxu0 0.0
        %1962 = vmatpush1.msra.mxu0 0.0
        %1963 = vmatprep.subr.mxu0 0.0
        %1964 = vmatpush1.msra.mxu0 0.0
        %1965 = vmatprep.subr.mxu0 0.0
        %1966 = vmatpush1.msra.mxu0 0.0
        %1967 = vmatprep.subr.mxu0 0.0
        %1968 = vmatpush1.msra.mxu0 0.0
        %1969 = vmatprep.subr.mxu0 0.0
        %1970 = vmatpush1.msra.mxu0 0.0
        %1971 = vmatprep.subr.mxu0 0.0
        %1972 = vmatpush1.msra.mxu0 0.0
        %1973 = vmatprep.subr.mxu0 0.0
        %1974 = vmatpush1.msra.mxu0 0.0
        %1975 = vmatprep.subr.mxu0 0.0
        %1976 = vmatpush1.msra.mxu0 0.0
        %1977 = vmatprep.subr.mxu0 0.0
        %1978 = vmatpush1.msra.mxu0 0.0
        %1979 = vmatprep.subr.mxu0 0.0
        %1980 = vmatpush1.msra.mxu0 0.0
        %1981 = vmatprep.mubr.f32.mxu0 0.0
        %1982 = vmatmul.mubr.f32.gmra.mrb[0].mxu0 %v1914
        %v1983 = vpop.f32.mrb[0].mxu0
        %v1984 = vadd.f32 %v355, %v1983
        %v1985 = vpop.f32.mrb[0].mxu0
        %1986 = vdwg.mxu0
        %v1987 = vmul.f32 %v1846, %v1984
        %1988 = vadd.xlane.f32.xlu0 %v1987
        %v1989 = vpop.xlane.xlu0 %1988
        %v1990 = vsub.f32 %v1984, %v1989
        %v1991 = vmul.f32 %v1846, %v1990
        %v1992 = vmul.f32 %v803, %v1991
        %v1993 = vadd.f32 %v1552, %v1992
        %1994 = vmatprep.subr.mxu0 0.0
        %1995 = vmatpush1.msra.mxu0 %v311
        %1996 = vmatprep.subr.mxu0 0.0
        %1997 = vmatpush1.msra.mxu0 %v312
        %1998 = vmatprep.subr.mxu0 0.0
        %1999 = vmatpush1.msra.mxu0 %v313
        %2000 = vmatprep.subr.mxu0 0.0
        %2001 = vmatpush1.msra.mxu0 %v314
        %2002 = vmatprep.subr.mxu0 0.0
        %2003 = vmatpush1.msra.mxu0 %v315
        %2004 = vmatprep.subr.mxu0 0.0
        %2005 = vmatpush1.msra.mxu0 %v316
        %2006 = vmatprep.subr.mxu0 0.0
        %2007 = vmatpush1.msra.mxu0 %v317
        %2008 = vmatprep.subr.mxu0 0.0
        %2009 = vmatpush1.msra.mxu0 %v318
        %2010 = vmatprep.subr.mxu0 0.0
        %2011 = vmatpush1.msra.mxu0 %v319
        %2012 = vmatprep.subr.mxu0 0.0
        %2013 = vmatpush1.msra.mxu0 %v320
        %2014 = vmatprep.subr.mxu0 0.0
        %2015 = vmatpush1.msra.mxu0 %v321
        %2016 = vmatprep.subr.mxu0 0.0
        %2017 = vmatpush1.msra.mxu0 %v322
        %2018 = vmatprep.subr.mxu0 0.0
        %2019 = vmatpush1.msra.mxu0 %v323
        %2020 = vmatprep.subr.mxu0 0.0
        %2021 = vmatpush1.msra.mxu0 %v324
        %2022 = vmatprep.subr.mxu0 0.0
        %2023 = vmatpush1.msra.mxu0 %v325
        %2024 = vmatprep.subr.mxu0 0.0
        %2025 = vmatpush1.msra.mxu0 %v326
        %2026 = vmatprep.subr.mxu0 0.0
        %2027 = vmatpush1.msra.mxu0 0.0
        %2028 = vmatprep.subr.mxu0 0.0
        %2029 = vmatpush1.msra.mxu0 0.0
        %2030 = vmatprep.subr.mxu0 0.0
        %2031 = vmatpush1.msra.mxu0 0.0
        %2032 = vmatprep.subr.mxu0 0.0
        %2033 = vmatpush1.msra.mxu0 0.0
        %2034 = vmatprep.subr.mxu0 0.0
        %2035 = vmatpush1.msra.mxu0 0.0
        %2036 = vmatprep.subr.mxu0 0.0
        %2037 = vmatpush1.msra.mxu0 0.0
        %2038 = vmatprep.subr.mxu0 0.0
        %2039 = vmatpush1.msra.mxu0 0.0
        %2040 = vmatprep.subr.mxu0 0.0
        %2041 = vmatpush1.msra.mxu0 0.0
        %2042 = vmatprep.subr.mxu0 0.0
        %2043 = vmatpush1.msra.mxu0 0.0
        %2044 = vmatprep.subr.mxu0 0.0
        %2045 = vmatpush1.msra.mxu0 0.0
        %2046 = vmatprep.subr.mxu0 0.0
        %2047 = vmatpush1.msra.mxu0 0.0
        %2048 = vmatprep.subr.mxu0 0.0
        %2049 = vmatpush1.msra.mxu0 0.0
        %2050 = vmatprep.subr.mxu0 0.0
        %2051 = vmatpush1.msra.mxu0 0.0
        %2052 = vmatprep.subr.mxu0 0.0
        %2053 = vmatpush1.msra.mxu0 0.0
        %2054 = vmatprep.subr.mxu0 0.0
        %2055 = vmatpush1.msra.mxu0 0.0
        %2056 = vmatprep.subr.mxu0 0.0
        %2057 = vmatpush1.msra.mxu0 0.0
        %2058 = vmatprep.mubr.f32.mxu0 0.0
        %2059 = vmatmul.mubr.f32.gmra.mrb[0].mxu0 %v1993
        %v2060 = vpop.f32.mrb[0].mxu0
        %v2061 = vadd.f32 %v348, %v2060
        %v2062 = vpop.f32.mrb[0].mxu0
        %2063 = vdwg.mxu0
        %2064 = vmatprep.subr.mxu0 0.0
        %2065 = vmatpush1.msra.mxu0 %v327
        %2066 = vmatprep.subr.mxu0 0.0
        %2067 = vmatpush1.msra.mxu0 %v328
        %2068 = vmatprep.subr.mxu0 0.0
        %2069 = vmatpush1.msra.mxu0 %v329
        %2070 = vmatprep.subr.mxu0 0.0
        %2071 = vmatpush1.msra.mxu0 %v330
        %2072 = vmatprep.subr.mxu0 0.0
        %2073 = vmatpush1.msra.mxu0 %v331
        %2074 = vmatprep.subr.mxu0 0.0
        %2075 = vmatpush1.msra.mxu0 %v332
        %2076 = vmatprep.subr.mxu0 0.0
        %2077 = vmatpush1.msra.mxu0 %v333
        %2078 = vmatprep.subr.mxu0 0.0
        %2079 = vmatpush1.msra.mxu0 %v334
        %2080 = vmatprep.subr.mxu0 0.0
        %2081 = vmatpush1.msra.mxu0 %v335
        %2082 = vmatprep.subr.mxu0 0.0
        %2083 = vmatpush1.msra.mxu0 %v336
        %2084 = vmatprep.subr.mxu0 0.0
        %2085 = vmatpush1.msra.mxu0 %v337
        %2086 = vmatprep.subr.mxu0 0.0
        %2087 = vmatpush1.msra.mxu0 %v338
        %2088 = vmatprep.subr.mxu0 0.0
        %2089 = vmatpush1.msra.mxu0 %v339
        %2090 = vmatprep.subr.mxu0 0.0
        %2091 = vmatpush1.msra.mxu0 %v340
        %2092 = vmatprep.subr.mxu0 0.0
        %2093 = vmatpush1.msra.mxu0 %v341
        %2094 = vmatprep.subr.mxu0 0.0
        %2095 = vmatpush1.msra.mxu0 %v342
        %2096 = vmatprep.subr.mxu0 0.0
        %2097 = vmatpush1.msra.mxu0 0.0
        %2098 = vmatprep.subr.mxu0 0.0
        %2099 = vmatpush1.msra.mxu0 0.0
        %2100 = vmatprep.subr.mxu0 0.0
        %2101 = vmatpush1.msra.mxu0 0.0
        %2102 = vmatprep.subr.mxu0 0.0
        %2103 = vmatpush1.msra.mxu0 0.0
        %2104 = vmatprep.subr.mxu0 0.0
        %2105 = vmatpush1.msra.mxu0 0.0
        %2106 = vmatprep.subr.mxu0 0.0
        %2107 = vmatpush1.msra.mxu0 0.0
        %2108 = vmatprep.subr.mxu0 0.0
        %2109 = vmatpush1.msra.mxu0 0.0
        %2110 = vmatprep.subr.mxu0 0.0
        %2111 = vmatpush1.msra.mxu0 0.0
        %2112 = vmatprep.subr.mxu0 0.0
        %2113 = vmatpush1.msra.mxu0 0.0
        %2114 = vmatprep.subr.mxu0 0.0
        %2115 = vmatpush1.msra.mxu0 0.0
        %2116 = vmatprep.subr.mxu0 0.0
        %2117 = vmatpush1.msra.mxu0 0.0
        %2118 = vmatprep.subr.mxu0 0.0
        %2119 = vmatpush1.msra.mxu0 0.0
        %2120 = vmatprep.subr.mxu0 0.0
        %2121 = vmatpush1.msra.mxu0 0.0
        %2122 = vmatprep.subr.mxu0 0.0
        %2123 = vmatpush1.msra.mxu0 0.0
        %2124 = vmatprep.subr.mxu0 0.0
        %2125 = vmatpush1.msra.mxu0 0.0
        %2126 = vmatprep.subr.mxu0 0.0
        %2127 = vmatpush1.msra.mxu0 0.0
        %2128 = vmatprep.mubr.f32.mxu0 0.0
        %2129 = vmatmul.mubr.f32.gmra.mrb[0].mxu0 %v2061
        %v2130 = vpop.f32.mrb[0].mxu0
        %v2131 = vadd.f32 %v355, %v2130
        %v2132 = vpop.f32.mrb[0].mxu0
        %2133 = vdwg.mxu0
        %v2134 = vmul.f32 %v1993, %v2131
        %2135 = vadd.xlane.f32.xlu0 %v2134
        %v2136 = vpop.xlane.xlu0 %2135
        %v2137 = vsub.f32 %v2131, %v2136
        %v2138 = vmul.f32 %v1993, %v2137
        %v2139 = vadd.f32 %v1844, %v1991
        %v2140 = vmul.f32 %v2139, 2.0
        %v2141 = vadd.f32 %v1697, %v2140
        %v2142 = vadd.f32 %v2141, %v2138
        %v2143 = vmul.f32 %v958, %v2142
        %v2144 = vadd.f32 %v1552, %v2143
        %2145 = vmatprep.subr.mxu0 0.0
        %2146 = vmatpush1.msra.mxu0 %v311
        %2147 = vmatprep.subr.mxu0 0.0
        %2148 = vmatpush1.msra.mxu0 %v312
        %2149 = vmatprep.subr.mxu0 0.0
        %2150 = vmatpush1.msra.mxu0 %v313
        %2151 = vmatprep.subr.mxu0 0.0
        %2152 = vmatpush1.msra.mxu0 %v314
        %2153 = vmatprep.subr.mxu0 0.0
        %2154 = vmatpush1.msra.mxu0 %v315
        %2155 = vmatprep.subr.mxu0 0.0
        %2156 = vmatpush1.msra.mxu0 %v316
        %2157 = vmatprep.subr.mxu0 0.0
        %2158 = vmatpush1.msra.mxu0 %v317
        %2159 = vmatprep.subr.mxu0 0.0
        %2160 = vmatpush1.msra.mxu0 %v318
        %2161 = vmatprep.subr.mxu0 0.0
        %2162 = vmatpush1.msra.mxu0 %v319
        %2163 = vmatprep.subr.mxu0 0.0
        %2164 = vmatpush1.msra.mxu0 %v320
        %2165 = vmatprep.subr.mxu0 0.0
        %2166 = vmatpush1.msra.mxu0 %v321
        %2167 = vmatprep.subr.mxu0 0.0
        %2168 = vmatpush1.msra.mxu0 %v322
        %2169 = vmatprep.subr.mxu0 0.0
        %2170 = vmatpush1.msra.mxu0 %v323
        %2171 = vmatprep.subr.mxu0 0.0
        %2172 = vmatpush1.msra.mxu0 %v324
        %2173 = vmatprep.subr.mxu0 0.0
        %2174 = vmatpush1.msra.mxu0 %v325
        %2175 = vmatprep.subr.mxu0 0.0
        %2176 = vmatpush1.msra.mxu0 %v326
        %2177 = vmatprep.subr.mxu0 0.0
        %2178 = vmatpush1.msra.mxu0 0.0
        %2179 = vmatprep.subr.mxu0 0.0
        %2180 = vmatpush1.msra.mxu0 0.0
        %2181 = vmatprep.subr.mxu0 0.0
        %2182 = vmatpush1.msra.mxu0 0.0
        %2183 = vmatprep.subr.mxu0 0.0
        %2184 = vmatpush1.msra.mxu0 0.0
        %2185 = vmatprep.subr.mxu0 0.0
        %2186 = vmatpush1.msra.mxu0 0.0
        %2187 = vmatprep.subr.mxu0 0.0
        %2188 = vmatpush1.msra.mxu0 0.0
        %2189 = vmatprep.subr.mxu0 0.0
        %2190 = vmatpush1.msra.mxu0 0.0
        %2191 = vmatprep.subr.mxu0 0.0
        %2192 = vmatpush1.msra.mxu0 0.0
        %2193 = vmatprep.subr.mxu0 0.0
        %2194 = vmatpush1.msra.mxu0 0.0
        %2195 = vmatprep.subr.mxu0 0.0
        %2196 = vmatpush1.msra.mxu0 0.0
        %2197 = vmatprep.subr.mxu0 0.0
        %2198 = vmatpush1.msra.mxu0 0.0
        %2199 = vmatprep.subr.mxu0 0.0
        %2200 = vmatpush1.msra.mxu0 0.0
        %2201 = vmatprep.subr.mxu0 0.0
        %2202 = vmatpush1.msra.mxu0 0.0
        %2203 = vmatprep.subr.mxu0 0.0
        %2204 = vmatpush1.msra.mxu0 0.0
        %2205 = vmatprep.subr.mxu0 0.0
        %2206 = vmatpush1.msra.mxu0 0.0
        %2207 = vmatprep.subr.mxu0 0.0
        %2208 = vmatpush1.msra.mxu0 0.0
        %2209 = vmatprep.mubr.f32.mxu0 0.0
        %2210 = vmatmul.mubr.f32.gmra.mrb[0].mxu0 %v2144
        %v2211 = vpop.f32.mrb[0].mxu0
        %v2212 = vadd.f32 %v348, %v2211
        %v2213 = vpop.f32.mrb[0].mxu0
        %2214 = vdwg.mxu0
        %2215 = vmatprep.subr.mxu0 0.0
        %2216 = vmatpush1.msra.mxu0 %v327
        %2217 = vmatprep.subr.mxu0 0.0
        %2218 = vmatpush1.msra.mxu0 %v328
        %2219 = vmatprep.subr.mxu0 0.0
        %2220 = vmatpush1.msra.mxu0 %v329
        %2221 = vmatprep.subr.mxu0 0.0
        %2222 = vmatpush1.msra.mxu0 %v330
        %2223 = vmatprep.subr.mxu0 0.0
        %2224 = vmatpush1.msra.mxu0 %v331
        %2225 = vmatprep.subr.mxu0 0.0
        %2226 = vmatpush1.msra.mxu0 %v332
        %2227 = vmatprep.subr.mxu0 0.0
        %2228 = vmatpush1.msra.mxu0 %v333
        %2229 = vmatprep.subr.mxu0 0.0
        %2230 = vmatpush1.msra.mxu0 %v334
        %2231 = vmatprep.subr.mxu0 0.0
        %2232 = vmatpush1.msra.mxu0 %v335
        %2233 = vmatprep.subr.mxu0 0.0
        %2234 = vmatpush1.msra.mxu0 %v336
        %2235 = vmatprep.subr.mxu0 0.0
        %2236 = vmatpush1.msra.mxu0 %v337
        %2237 = vmatprep.subr.mxu0 0.0
        %2238 = vmatpush1.msra.mxu0 %v338
        %2239 = vmatprep.subr.mxu0 0.0
        %2240 = vmatpush1.msra.mxu0 %v339
        %2241 = vmatprep.subr.mxu0 0.0
        %2242 = vmatpush1.msra.mxu0 %v340
        %2243 = vmatprep.subr.mxu0 0.0
        %2244 = vmatpush1.msra.mxu0 %v341
        %2245 = vmatprep.subr.mxu0 0.0
        %2246 = vmatpush1.msra.mxu0 %v342
        %2247 = vmatprep.subr.mxu0 0.0
        %2248 = vmatpush1.msra.mxu0 0.0
        %2249 = vmatprep.subr.mxu0 0.0
        %2250 = vmatpush1.msra.mxu0 0.0
        %2251 = vmatprep.subr.mxu0 0.0
        %2252 = vmatpush1.msra.mxu0 0.0
        %2253 = vmatprep.subr.mxu0 0.0
        %2254 = vmatpush1.msra.mxu0 0.0
        %2255 = vmatprep.subr.mxu0 0.0
        %2256 = vmatpush1.msra.mxu0 0.0
        %2257 = vmatprep.subr.mxu0 0.0
        %2258 = vmatpush1.msra.mxu0 0.0
        %2259 = vmatprep.subr.mxu0 0.0
        %2260 = vmatpush1.msra.mxu0 0.0
        %2261 = vmatprep.subr.mxu0 0.0
        %2262 = vmatpush1.msra.mxu0 0.0
        %2263 = vmatprep.subr.mxu0 0.0
        %2264 = vmatpush1.msra.mxu0 0.0
        %2265 = vmatprep.subr.mxu0 0.0
        %2266 = vmatpush1.msra.mxu0 0.0
        %2267 = vmatprep.subr.mxu0 0.0
        %2268 = vmatpush1.msra.mxu0 0.0
        %2269 = vmatprep.subr.mxu0 0.0
        %2270 = vmatpush1.msra.mxu0 0.0
        %2271 = vmatprep.subr.mxu0 0.0
        %2272 = vmatpush1.msra.mxu0 0.0
        %2273 = vmatprep.subr.mxu0 0.0
        %2274 = vmatpush1.msra.mxu0 0.0
        %2275 = vmatprep.subr.mxu0 0.0
        %2276 = vmatpush1.msra.mxu0 0.0
        %2277 = vmatprep.subr.mxu0 0.0
        %2278 = vmatpush1.msra.mxu0 0.0
        %2279 = vmatprep.mubr.f32.mxu0 0.0
        %2280 = vmatmul.mubr.f32.gmra.mrb[0].mxu0 %v2212
        %v2281 = vpop.f32.mrb[0].mxu0
        %v2282 = vadd.f32 %v355, %v2281
        %v2283 = vpop.f32.mrb[0].mxu0
        %2284 = vdwg.mxu0
        %v2285 = vmul.f32 %v2144, %v2282
        %2286 = vadd.xlane.f32.xlu0 %v2285
        %v2287 = vpop.xlane.xlu0 %2286
        %v2288 = vsub.f32 %v2282, %v2287
        %v2289 = vmul.f32 %v2144, %v2288
        %v2290 = vmul.f32 %v508, %v2289
        %v2291 = vadd.f32 %v2144, %v2290
        %2292 = vmatprep.subr.mxu0 0.0
        %2293 = vmatpush1.msra.mxu0 %v311
        %2294 = vmatprep.subr.mxu0 0.0
        %2295 = vmatpush1.msra.mxu0 %v312
        %2296 = vmatprep.subr.mxu0 0.0
        %2297 = vmatpush1.msra.mxu0 %v313
        %2298 = vmatprep.subr.mxu0 0.0
        %2299 = vmatpush1.msra.mxu0 %v314
        %2300 = vmatprep.subr.mxu0 0.0
        %2301 = vmatpush1.msra.mxu0 %v315
        %2302 = vmatprep.subr.mxu0 0.0
        %2303 = vmatpush1.msra.mxu0 %v316
        %2304 = vmatprep.subr.mxu0 0.0
        %2305 = vmatpush1.msra.mxu0 %v317
        %2306 = vmatprep.subr.mxu0 0.0
        %2307 = vmatpush1.msra.mxu0 %v318
        %2308 = vmatprep.subr.mxu0 0.0
        %2309 = vmatpush1.msra.mxu0 %v319
        %2310 = vmatprep.subr.mxu0 0.0
        %2311 = vmatpush1.msra.mxu0 %v320
        %2312 = vmatprep.subr.mxu0 0.0
        %2313 = vmatpush1.msra.mxu0 %v321
        %2314 = vmatprep.subr.mxu0 0.0
        %2315 = vmatpush1.msra.mxu0 %v322
        %2316 = vmatprep.subr.mxu0 0.0
        %2317 = vmatpush1.msra.mxu0 %v323
        %2318 = vmatprep.subr.mxu0 0.0
        %2319 = vmatpush1.msra.mxu0 %v324
        %2320 = vmatprep.subr.mxu0 0.0
        %2321 = vmatpush1.msra.mxu0 %v325
        %2322 = vmatprep.subr.mxu0 0.0
        %2323 = vmatpush1.msra.mxu0 %v326
        %2324 = vmatprep.subr.mxu0 0.0
        %2325 = vmatpush1.msra.mxu0 0.0
        %2326 = vmatprep.subr.mxu0 0.0
        %2327 = vmatpush1.msra.mxu0 0.0
        %2328 = vmatprep.subr.mxu0 0.0
        %2329 = vmatpush1.msra.mxu0 0.0
        %2330 = vmatprep.subr.mxu0 0.0
        %2331 = vmatpush1.msra.mxu0 0.0
        %2332 = vmatprep.subr.mxu0 0.0
        %2333 = vmatpush1.msra.mxu0 0.0
        %2334 = vmatprep.subr.mxu0 0.0
        %2335 = vmatpush1.msra.mxu0 0.0
        %2336 = vmatprep.subr.mxu0 0.0
        %2337 = vmatpush1.msra.mxu0 0.0
        %2338 = vmatprep.subr.mxu0 0.0
        %2339 = vmatpush1.msra.mxu0 0.0
        %2340 = vmatprep.subr.mxu0 0.0
        %2341 = vmatpush1.msra.mxu0 0.0
        %2342 = vmatprep.subr.mxu0 0.0
        %2343 = vmatpush1.msra.mxu0 0.0
        %2344 = vmatprep.subr.mxu0 0.0
        %2345 = vmatpush1.msra.mxu0 0.0
        %2346 = vmatprep.subr.mxu0 0.0
        %2347 = vmatpush1.msra.mxu0 0.0
        %2348 = vmatprep.subr.mxu0 0.0
        %2349 = vmatpush1.msra.mxu0 0.0
        %2350 = vmatprep.subr.mxu0 0.0
        %2351 = vmatpush1.msra.mxu0 0.0
        %2352 = vmatprep.subr.mxu0 0.0
        %2353 = vmatpush1.msra.mxu0 0.0
        %2354 = vmatprep.subr.mxu0 0.0
        %2355 = vmatpush1.msra.mxu0 0.0
        %2356 = vmatprep.mubr.f32.mxu0 0.0
        %2357 = vmatmul.mubr.f32.gmra.mrb[0].mxu0 %v2291
        %v2358 = vpop.f32.mrb[0].mxu0
        %v2359 = vadd.f32 %v348, %v2358
        %v2360 = vpop.f32.mrb[0].mxu0
        %2361 = vdwg.mxu0
        %2362 = vmatprep.subr.mxu0 0.0
        %2363 = vmatpush1.msra.mxu0 %v327
        %2364 = vmatprep.subr.mxu0 0.0
        %2365 = vmatpush1.msra.mxu0 %v328
        %2366 = vmatprep.subr.mxu0 0.0
        %2367 = vmatpush1.msra.mxu0 %v329
        %2368 = vmatprep.subr.mxu0 0.0
        %2369 = vmatpush1.msra.mxu0 %v330
        %2370 = vmatprep.subr.mxu0 0.0
        %2371 = vmatpush1.msra.mxu0 %v331
        %2372 = vmatprep.subr.mxu0 0.0
        %2373 = vmatpush1.msra.mxu0 %v332
        %2374 = vmatprep.subr.mxu0 0.0
        %2375 = vmatpush1.msra.mxu0 %v333
        %2376 = vmatprep.subr.mxu0 0.0
        %2377 = vmatpush1.msra.mxu0 %v334
        %2378 = vmatprep.subr.mxu0 0.0
        %2379 = vmatpush1.msra.mxu0 %v335
        %2380 = vmatprep.subr.mxu0 0.0
        %2381 = vmatpush1.msra.mxu0 %v336
        %2382 = vmatprep.subr.mxu0 0.0
        %2383 = vmatpush1.msra.mxu0 %v337
        %2384 = vmatprep.subr.mxu0 0.0
        %2385 = vmatpush1.msra.mxu0 %v338
        %2386 = vmatprep.subr.mxu0 0.0
        %2387 = vmatpush1.msra.mxu0 %v339
        %2388 = vmatprep.subr.mxu0 0.0
        %2389 = vmatpush1.msra.mxu0 %v340
        %2390 = vmatprep.subr.mxu0 0.0
        %2391 = vmatpush1.msra.mxu0 %v341
        %2392 = vmatprep.subr.mxu0 0.0
        %2393 = vmatpush1.msra.mxu0 %v342
        %2394 = vmatprep.subr.mxu0 0.0
        %2395 = vmatpush1.msra.mxu0 0.0
        %2396 = vmatprep.subr.mxu0 0.0
        %2397 = vmatpush1.msra.mxu0 0.0
        %2398 = vmatprep.subr.mxu0 0.0
        %2399 = vmatpush1.msra.mxu0 0.0
        %2400 = vmatprep.subr.mxu0 0.0
        %2401 = vmatpush1.msra.mxu0 0.0
        %2402 = vmatprep.subr.mxu0 0.0
        %2403 = vmatpush1.msra.mxu0 0.0
        %2404 = vmatprep.subr.mxu0 0.0
        %2405 = vmatpush1.msra.mxu0 0.0
        %2406 = vmatprep.subr.mxu0 0.0
        %2407 = vmatpush1.msra.mxu0 0.0
        %2408 = vmatprep.subr.mxu0 0.0
        %2409 = vmatpush1.msra.mxu0 0.0
        %2410 = vmatprep.subr.mxu0 0.0
        %2411 = vmatpush1.msra.mxu0 0.0
        %2412 = vmatprep.subr.mxu0 0.0
        %2413 = vmatpush1.msra.mxu0 0.0
        %2414 = vmatprep.subr.mxu0 0.0
        %2415 = vmatpush1.msra.mxu0 0.0
        %2416 = vmatprep.subr.mxu0 0.0
        %2417 = vmatpush1.msra.mxu0 0.0
        %2418 = vmatprep.subr.mxu0 0.0
        %2419 = vmatpush1.msra.mxu0 0.0
        %2420 = vmatprep.subr.mxu0 0.0
        %2421 = vmatpush1.msra.mxu0 0.0
        %2422 = vmatprep.subr.mxu0 0.0
        %2423 = vmatpush1.msra.mxu0 0.0
        %2424 = vmatprep.subr.mxu0 0.0
        %2425 = vmatpush1.msra.mxu0 0.0
        %2426 = vmatprep.mubr.f32.mxu0 0.0
        %2427 = vmatmul.mubr.f32.gmra.mrb[0].mxu0 %v2359
        %v2428 = vpop.f32.mrb[0].mxu0
        %v2429 = vadd.f32 %v355, %v2428
        %v2430 = vpop.f32.mrb[0].mxu0
        %2431 = vdwg.mxu0
        %v2432 = vmul.f32 %v2291, %v2429
        %2433 = vadd.xlane.f32.xlu0 %v2432
        %v2434 = vpop.xlane.xlu0 %2433
        %v2435 = vsub.f32 %v2429, %v2434
        %v2436 = vmul.f32 %v2291, %v2435
        %v2437 = vmul.f32 %v508, %v2436
        %v2438 = vadd.f32 %v2144, %v2437
        %2439 = vmatprep.subr.mxu0 0.0
        %2440 = vmatpush1.msra.mxu0 %v311
        %2441 = vmatprep.subr.mxu0 0.0
        %2442 = vmatpush1.msra.mxu0 %v312
        %2443 = vmatprep.subr.mxu0 0.0
        %2444 = vmatpush1.msra.mxu0 %v313
        %2445 = vmatprep.subr.mxu0 0.0
        %2446 = vmatpush1.msra.mxu0 %v314
        %2447 = vmatprep.subr.mxu0 0.0
        %2448 = vmatpush1.msra.mxu0 %v315
        %2449 = vmatprep.subr.mxu0 0.0
        %2450 = vmatpush1.msra.mxu0 %v316
        %2451 = vmatprep.subr.mxu0 0.0
        %2452 = vmatpush1.msra.mxu0 %v317
        %2453 = vmatprep.subr.mxu0 0.0
        %2454 = vmatpush1.msra.mxu0 %v318
        %2455 = vmatprep.subr.mxu0 0.0
        %2456 = vmatpush1.msra.mxu0 %v319
        %2457 = vmatprep.subr.mxu0 0.0
        %2458 = vmatpush1.msra.mxu0 %v320
        %2459 = vmatprep.subr.mxu0 0.0
        %2460 = vmatpush1.msra.mxu0 %v321
        %2461 = vmatprep.subr.mxu0 0.0
        %2462 = vmatpush1.msra.mxu0 %v322
        %2463 = vmatprep.subr.mxu0 0.0
        %2464 = vmatpush1.msra.mxu0 %v323
        %2465 = vmatprep.subr.mxu0 0.0
        %2466 = vmatpush1.msra.mxu0 %v324
        %2467 = vmatprep.subr.mxu0 0.0
        %2468 = vmatpush1.msra.mxu0 %v325
        %2469 = vmatprep.subr.mxu0 0.0
        %2470 = vmatpush1.msra.mxu0 %v326
        %2471 = vmatprep.subr.mxu0 0.0
        %2472 = vmatpush1.msra.mxu0 0.0
        %2473 = vmatprep.subr.mxu0 0.0
        %2474 = vmatpush1.msra.mxu0 0.0
        %2475 = vmatprep.subr.mxu0 0.0
        %2476 = vmatpush1.msra.mxu0 0.0
        %2477 = vmatprep.subr.mxu0 0.0
        %2478 = vmatpush1.msra.mxu0 0.0
        %2479 = vmatprep.subr.mxu0 0.0
        %2480 = vmatpush1.msra.mxu0 0.0
        %2481 = vmatprep.subr.mxu0 0.0
        %2482 = vmatpush1.msra.mxu0 0.0
        %2483 = vmatprep.subr.mxu0 0.0
        %2484 = vmatpush1.msra.mxu0 0.0
        %2485 = vmatprep.subr.mxu0 0.0
        %2486 = vmatpush1.msra.mxu0 0.0
        %2487 = vmatprep.subr.mxu0 0.0
        %2488 = vmatpush1.msra.mxu0 0.0
        %2489 = vmatprep.subr.mxu0 0.0
        %2490 = vmatpush1.msra.mxu0 0.0
        %2491 = vmatprep.subr.mxu0 0.0
        %2492 = vmatpush1.msra.mxu0 0.0
        %2493 = vmatprep.subr.mxu0 0.0
        %2494 = vmatpush1.msra.mxu0 0.0
        %2495 = vmatprep.subr.mxu0 0.0
        %2496 = vmatpush1.msra.mxu0 0.0
        %2497 = vmatprep.subr.mxu0 0.0
        %2498 = vmatpush1.msra.mxu0 0.0
        %2499 = vmatprep.subr.mxu0 0.0
        %2500 = vmatpush1.msra.mxu0 0.0
        %2501 = vmatprep.subr.mxu0 0.0
        %2502 = vmatpush1.msra.mxu0 0.0
        %2503 = vmatprep.mubr.f32.mxu0 0.0
        %2504 = vmatmul.mubr.f32.gmra.mrb[0].mxu0 %v2438
        %v2505 = vpop.f32.mrb[0].mxu0
        %v2506 = vadd.f32 %v348, %v2505
        %v2507 = vpop.f32.mrb[0].mxu0
        %2508 = vdwg.mxu0
        %2509 = vmatprep.subr.mxu0 0.0
        %2510 = vmatpush1.msra.mxu0 %v327
        %2511 = vmatprep.subr.mxu0 0.0
        %2512 = vmatpush1.msra.mxu0 %v328
        %2513 = vmatprep.subr.mxu0 0.0
        %2514 = vmatpush1.msra.mxu0 %v329
        %2515 = vmatprep.subr.mxu0 0.0
        %2516 = vmatpush1.msra.mxu0 %v330
        %2517 = vmatprep.subr.mxu0 0.0
        %2518 = vmatpush1.msra.mxu0 %v331
        %2519 = vmatprep.subr.mxu0 0.0
        %2520 = vmatpush1.msra.mxu0 %v332
        %2521 = vmatprep.subr.mxu0 0.0
        %2522 = vmatpush1.msra.mxu0 %v333
        %2523 = vmatprep.subr.mxu0 0.0
        %2524 = vmatpush1.msra.mxu0 %v334
        %2525 = vmatprep.subr.mxu0 0.0
        %2526 = vmatpush1.msra.mxu0 %v335
        %2527 = vmatprep.subr.mxu0 0.0
        %2528 = vmatpush1.msra.mxu0 %v336
        %2529 = vmatprep.subr.mxu0 0.0
        %2530 = vmatpush1.msra.mxu0 %v337
        %2531 = vmatprep.subr.mxu0 0.0
        %2532 = vmatpush1.msra.mxu0 %v338
        %2533 = vmatprep.subr.mxu0 0.0
        %2534 = vmatpush1.msra.mxu0 %v339
        %2535 = vmatprep.subr.mxu0 0.0
        %2536 = vmatpush1.msra.mxu0 %v340
        %2537 = vmatprep.subr.mxu0 0.0
        %2538 = vmatpush1.msra.mxu0 %v341
        %2539 = vmatprep.subr.mxu0 0.0
        %2540 = vmatpush1.msra.mxu0 %v342
        %2541 = vmatprep.subr.mxu0 0.0
        %2542 = vmatpush1.msra.mxu0 0.0
        %2543 = vmatprep.subr.mxu0 0.0
        %2544 = vmatpush1.msra.mxu0 0.0
        %2545 = vmatprep.subr.mxu0 0.0
        %2546 = vmatpush1.msra.mxu0 0.0
        %2547 = vmatprep.subr.mxu0 0.0
        %2548 = vmatpush1.msra.mxu0 0.0
        %2549 = vmatprep.subr.mxu0 0.0
        %2550 = vmatpush1.msra.mxu0 0.0
        %2551 = vmatprep.subr.mxu0 0.0
        %2552 = vmatpush1.msra.mxu0 0.0
        %2553 = vmatprep.subr.mxu0 0.0
        %2554 = vmatpush1.msra.mxu0 0.0
        %2555 = vmatprep.subr.mxu0 0.0
        %2556 = vmatpush1.msra.mxu0 0.0
        %2557 = vmatprep.subr.mxu0 0.0
        %2558 = vmatpush1.msra.mxu0 0.0
        %2559 = vmatprep.subr.mxu0 0.0
        %2560 = vmatpush1.msra.mxu0 0.0
        %2561 = vmatprep.subr.mxu0 0.0
        %2562 = vmatpush1.msra.mxu0 0.0
        %2563 = vmatprep.subr.mxu0 0.0
        %2564 = vmatpush1.msra.mxu0 0.0
        %2565 = vmatprep.subr.mxu0 0.0
        %2566 = vmatpush1.msra.mxu0 0.0
        %2567 = vmatprep.subr.mxu0 0.0
        %2568 = vmatpush1.msra.mxu0 0.0
        %2569 = vmatprep.subr.mxu0 0.0
        %2570 = vmatpush1.msra.mxu0 0.0
        %2571 = vmatprep.subr.mxu0 0.0
        %2572 = vmatpush1.msra.mxu0 0.0
        %2573 = vmatprep.mubr.f32.mxu0 0.0
        %2574 = vmatmul.mubr.f32.gmra.mrb[0].mxu0 %v2506
        %v2575 = vpop.f32.mrb[0].mxu0
        %v2576 = vadd.f32 %v355, %v2575
        %v2577 = vpop.f32.mrb[0].mxu0
        %2578 = vdwg.mxu0
        %v2579 = vmul.f32 %v2438, %v2576
        %2580 = vadd.xlane.f32.xlu0 %v2579
        %v2581 = vpop.xlane.xlu0 %2580
        %v2582 = vsub.f32 %v2576, %v2581
        %v2583 = vmul.f32 %v2438, %v2582
        %v2584 = vmul.f32 %v803, %v2583
        %v2585 = vadd.f32 %v2144, %v2584
        %2586 = vmatprep.subr.mxu0 0.0
        %2587 = vmatpush1.msra.mxu0 %v311
        %2588 = vmatprep.subr.mxu0 0.0
        %2589 = vmatpush1.msra.mxu0 %v312
        %2590 = vmatprep.subr.mxu0 0.0
        %2591 = vmatpush1.msra.mxu0 %v313
        %2592 = vmatprep.subr.mxu0 0.0
        %2593 = vmatpush1.msra.mxu0 %v314
        %2594 = vmatprep.subr.mxu0 0.0
        %2595 = vmatpush1.msra.mxu0 %v315
        %2596 = vmatprep.subr.mxu0 0.0
        %2597 = vmatpush1.msra.mxu0 %v316
        %2598 = vmatprep.subr.mxu0 0.0
        %2599 = vmatpush1.msra.mxu0 %v317
        %2600 = vmatprep.subr.mxu0 0.0
        %2601 = vmatpush1.msra.mxu0 %v318
        %2602 = vmatprep.subr.mxu0 0.0
        %2603 = vmatpush1.msra.mxu0 %v319
        %2604 = vmatprep.subr.mxu0 0.0
        %2605 = vmatpush1.msra.mxu0 %v320
        %2606 = vmatprep.subr.mxu0 0.0
        %2607 = vmatpush1.msra.mxu0 %v321
        %2608 = vmatprep.subr.mxu0 0.0
        %2609 = vmatpush1.msra.mxu0 %v322
        %2610 = vmatprep.subr.mxu0 0.0
        %2611 = vmatpush1.msra.mxu0 %v323
        %2612 = vmatprep.subr.mxu0 0.0
        %2613 = vmatpush1.msra.mxu0 %v324
        %2614 = vmatprep.subr.mxu0 0.0
        %2615 = vmatpush1.msra.mxu0 %v325
        %2616 = vmatprep.subr.mxu0 0.0
        %2617 = vmatpush1.msra.mxu0 %v326
        %2618 = vmatprep.subr.mxu0 0.0
        %2619 = vmatpush1.msra.mxu0 0.0
        %2620 = vmatprep.subr.mxu0 0.0
        %2621 = vmatpush1.msra.mxu0 0.0
        %2622 = vmatprep.subr.mxu0 0.0
        %2623 = vmatpush1.msra.mxu0 0.0
        %2624 = vmatprep.subr.mxu0 0.0
        %2625 = vmatpush1.msra.mxu0 0.0
        %2626 = vmatprep.subr.mxu0 0.0
        %2627 = vmatpush1.msra.mxu0 0.0
        %2628 = vmatprep.subr.mxu0 0.0
        %2629 = vmatpush1.msra.mxu0 0.0
        %2630 = vmatprep.subr.mxu0 0.0
        %2631 = vmatpush1.msra.mxu0 0.0
        %2632 = vmatprep.subr.mxu0 0.0
        %2633 = vmatpush1.msra.mxu0 0.0
        %2634 = vmatprep.subr.mxu0 0.0
        %2635 = vmatpush1.msra.mxu0 0.0
        %2636 = vmatprep.subr.mxu0 0.0
        %2637 = vmatpush1.msra.mxu0 0.0
        %2638 = vmatprep.subr.mxu0 0.0
        %2639 = vmatpush1.msra.mxu0 0.0
        %2640 = vmatprep.subr.mxu0 0.0
        %2641 = vmatpush1.msra.mxu0 0.0
        %2642 = vmatprep.subr.mxu0 0.0
        %2643 = vmatpush1.msra.mxu0 0.0
        %2644 = vmatprep.subr.mxu0 0.0
        %2645 = vmatpush1.msra.mxu0 0.0
        %2646 = vmatprep.subr.mxu0 0.0
        %2647 = vmatpush1.msra.mxu0 0.0
        %2648 = vmatprep.subr.mxu0 0.0
        %2649 = vmatpush1.msra.mxu0 0.0
        %2650 = vmatprep.mubr.f32.mxu0 0.0
        %2651 = vmatmul.mubr.f32.gmra.mrb[0].mxu0 %v2585
        %v2652 = vpop.f32.mrb[0].mxu0
        %v2653 = vadd.f32 %v348, %v2652
        %v2654 = vpop.f32.mrb[0].mxu0
        %2655 = vdwg.mxu0
        %2656 = vmatprep.subr.mxu0 0.0
        %2657 = vmatpush1.msra.mxu0 %v327
        %2658 = vmatprep.subr.mxu0 0.0
        %2659 = vmatpush1.msra.mxu0 %v328
        %2660 = vmatprep.subr.mxu0 0.0
        %2661 = vmatpush1.msra.mxu0 %v329
        %2662 = vmatprep.subr.mxu0 0.0
        %2663 = vmatpush1.msra.mxu0 %v330
        %2664 = vmatprep.subr.mxu0 0.0
        %2665 = vmatpush1.msra.mxu0 %v331
        %2666 = vmatprep.subr.mxu0 0.0
        %2667 = vmatpush1.msra.mxu0 %v332
        %2668 = vmatprep.subr.mxu0 0.0
        %2669 = vmatpush1.msra.mxu0 %v333
        %2670 = vmatprep.subr.mxu0 0.0
        %2671 = vmatpush1.msra.mxu0 %v334
        %2672 = vmatprep.subr.mxu0 0.0
        %2673 = vmatpush1.msra.mxu0 %v335
        %2674 = vmatprep.subr.mxu0 0.0
        %2675 = vmatpush1.msra.mxu0 %v336
        %2676 = vmatprep.subr.mxu0 0.0
        %2677 = vmatpush1.msra.mxu0 %v337
        %2678 = vmatprep.subr.mxu0 0.0
        %2679 = vmatpush1.msra.mxu0 %v338
        %2680 = vmatprep.subr.mxu0 0.0
        %2681 = vmatpush1.msra.mxu0 %v339
        %2682 = vmatprep.subr.mxu0 0.0
        %2683 = vmatpush1.msra.mxu0 %v340
        %2684 = vmatprep.subr.mxu0 0.0
        %2685 = vmatpush1.msra.mxu0 %v341
        %2686 = vmatprep.subr.mxu0 0.0
        %2687 = vmatpush1.msra.mxu0 %v342
        %2688 = vmatprep.subr.mxu0 0.0
        %2689 = vmatpush1.msra.mxu0 0.0
        %2690 = vmatprep.subr.mxu0 0.0
        %2691 = vmatpush1.msra.mxu0 0.0
        %2692 = vmatprep.subr.mxu0 0.0
        %2693 = vmatpush1.msra.mxu0 0.0
        %2694 = vmatprep.subr.mxu0 0.0
        %2695 = vmatpush1.msra.mxu0 0.0
        %2696 = vmatprep.subr.mxu0 0.0
        %2697 = vmatpush1.msra.mxu0 0.0
        %2698 = vmatprep.subr.mxu0 0.0
        %2699 = vmatpush1.msra.mxu0 0.0
        %2700 = vmatprep.subr.mxu0 0.0
        %2701 = vmatpush1.msra.mxu0 0.0
        %2702 = vmatprep.subr.mxu0 0.0
        %2703 = vmatpush1.msra.mxu0 0.0
        %2704 = vmatprep.subr.mxu0 0.0
        %2705 = vmatpush1.msra.mxu0 0.0
        %2706 = vmatprep.subr.mxu0 0.0
        %2707 = vmatpush1.msra.mxu0 0.0
        %2708 = vmatprep.subr.mxu0 0.0
        %2709 = vmatpush1.msra.mxu0 0.0
        %2710 = vmatprep.subr.mxu0 0.0
        %2711 = vmatpush1.msra.mxu0 0.0
        %2712 = vmatprep.subr.mxu0 0.0
        %2713 = vmatpush1.msra.mxu0 0.0
        %2714 = vmatprep.subr.mxu0 0.0
        %2715 = vmatpush1.msra.mxu0 0.0
        %2716 = vmatprep.subr.mxu0 0.0
        %2717 = vmatpush1.msra.mxu0 0.0
        %2718 = vmatprep.subr.mxu0 0.0
        %2719 = vmatpush1.msra.mxu0 0.0
        %2720 = vmatprep.mubr.f32.mxu0 0.0
        %2721 = vmatmul.mubr.f32.gmra.mrb[0].mxu0 %v2653
        %v2722 = vpop.f32.mrb[0].mxu0
        %v2723 = vadd.f32 %v355, %v2722
        %v2724 = vpop.f32.mrb[0].mxu0
        %2725 = vdwg.mxu0
        %v2726 = vmul.f32 %v2585, %v2723
        %2727 = vadd.xlane.f32.xlu0 %v2726
        %v2728 = vpop.xlane.xlu0 %2727
        %v2729 = vsub.f32 %v2723, %v2728
        %v2730 = vmul.f32 %v2585, %v2729
        %v2731 = vadd.f32 %v2436, %v2583
        %v2732 = vmul.f32 %v2731, 2.0
        %v2733 = vadd.f32 %v2289, %v2732
        %v2734 = vadd.f32 %v2733, %v2730
        %v2735 = vmul.f32 %v958, %v2734
        %v2736 = vadd.f32 %v2144, %v2735
        %2737 = vst [vmem:[#allocation2] sm:$0xff] %v2736
        %2738 = vst [vmem:[%s304] sm:$0xff] %v2736
        %s2739 = sand.u32 %s176, 1
        %s2740 = scalar_lea.sflag [#allocation5], %s2739
        %s2741 = sand.u32 %s176, 1
        %s2742 = smul.addr %s2741, 8
        %s2743 = scalar_lea.vmem [#allocation11], %s2742
        // Predicated region
        $region65: #{tpu_custom_call.1} parent=43 // pred_check
          %p2744 = pneg %p186
        $region66: #{tpu_custom_call.1} parent=43 // pred_check_branch
          %2746 = sbr.rel (%p2744) target = $region68
        $region67: #{tpu_custom_call.1} parent=43 // pred_region
          %s2748 = ssub.s32 128, 128
          %2749 = vsyncadd %s2740, %s2748
          %s2750 = sadd.s32 %s27, %s28
          %s2751 = smul.addr %s2750, 128
          %s2752 = scalar_lea.hbm %s6, %s2751
          %s2754 = sshll.u32 %s2743, 4
          %s2755 = int_to_ptr.vmem [resolvable:$true] %s2754
          %2757 = dma.vmem_to_hbm [thread:$0]  %s2755, 128, %s2752, %s2740
        $region68: #{tpu_custom_call.1} parent=43 // pred_fallthru
          _
      $region44: #{tpu_custom_call.1} parent=5 // pred_fallthru
        _
      %p2758 = scmp.le.s32.totalorder 2, %s18
      // Predicated region
      $region69: #{tpu_custom_call.1} parent=5 // pred_check
        %p2759 = pneg %p2758
      $region70: #{tpu_custom_call.1} parent=5 // pred_check_branch
        %2761 = sbr.rel (%p2759) target = $region72
      $region71: #{tpu_custom_call.1} parent=5 // pred_region
        %s2762 = ssub.s32 %s18, 2
        // Predicated region
        $region73: #{tpu_custom_call.1} parent=71 // pred_check
          %p2763 = pneg %p192
        $region74: #{tpu_custom_call.1} parent=71 // pred_check_branch
          %2765 = sbr.rel (%p2763) target = $region76
        $region75: #{tpu_custom_call.1} parent=71 // pred_region
          %s2766 = sand.u32 %s177, 1
          %s2767 = scalar_lea.sflag [#allocation5], %s2766
          %s2768 = sand.u32 %s177, 1
          %s2769 = smul.addr %s2768, 8
          %s2770 = scalar_lea.vmem [#allocation11], %s2769
          %2771 = dma.done %s2767, 128
        $region76: #{tpu_custom_call.1} parent=71 // pred_fallthru
          _
      $region72: #{tpu_custom_call.1} parent=5 // pred_fallthru
        _
    $region6: #{tpu_custom_call.1} parent=1 // loop_footer
      %s22 = sadd.s32 1, %s18
    $region7: #{tpu_custom_call.1} parent=1 // loop_footer_branch
      %17 = sbr.rel target = $region3
    $region8: #{tpu_custom_call.1} parent=1 // loop_exit
      _
    %2772 = vsyncpa [#allocation4], 1
    %s2773 = scalar_lea.sflag [#allocation4], 1
    %2774 = vsyncpa %s2773, 1
    %2775 = vsyncpa [#allocation9], 1
    %2776 = vsyncpa [#allocation5], 1
    %s2777 = scalar_lea.sflag [#allocation5], 1
    %2778 = vsyncpa %s2777, 1
    %2779 = vsyncpa [#allocation6], 1
    %s2780 = scalar_lea.sflag [#allocation6], 1
    %2781 = vsyncpa %s2780, 1

</llo_original>
